<compile_context>
chip_gen: v7x
topology: tpu7x:2x2x1
jax: 0.10.0
libtpu: 0.0.40
codegen_flags: <defaults>
</compile_context>

<pallas_src>
import functools

import jax
import jax.numpy as jnp
from jax.experimental import pallas as pl
from jax.experimental.pallas import tpu as pltpu

C = 32          # emb_channel (scalar channels)
F = 32          # fc_neurons[0] (edge-scalar / time embedding dim)
HALF = F // 2   # sinusoidal embedding half-dim


def _round_up(x, m):
    return (x + m - 1) // m * m


# -------------------------------------------------- fused GNN block kernel ---
def _equi_block_kernel(xsxd_ref, pos_ref, rot_ref, v_ref, a_ref,
                       xt_ref, u_ref, freqs_ref, tbias_ref,
                       w_sd_ref, w_es_ref, w_ec_ref, w_gate_ref, w_out_ref,
                       out_ref, acc_ref):
    f32, bf16 = jnp.float32, jnp.bfloat16
    k = pl.program_id(0)

    @pl.when(k == 0)
    def _():
        acc_ref[...] = jnp.zeros_like(acc_ref)

    # --- sinusoidal edge embedding, fused (EUP work hidden under the MXU) ----
    args = pos_ref[...] * freqs_ref[...]                       # [TE, HALF]
    sin_a = jnp.sin(args).astype(bf16)
    cos_a = jnp.cos(args).astype(bf16)

    # --- per-edge scalar message: one K=2C MXU pass + two tiny K=HALF passes,
    #     plus the hoisted (edge-independent) time-code bias ------------------
    m = (jnp.dot(xsxd_ref[...], w_sd_ref[...], preferred_element_type=f32)
         + jnp.dot(sin_a, w_es_ref[...], preferred_element_type=f32)
         + jnp.dot(cos_a, w_ec_ref[...], preferred_element_type=f32)
         + tbias_ref[...])
    m = jax.nn.silu(m)                                          # [TE, C] f32
    gate = jax.nn.sigmoid(
        jnp.dot(m.astype(bf16), w_gate_ref[...], preferred_element_type=f32))

    # --- rotation-gated vector (L=1) messages; rotation is pre-broadcast so
    #     this is pure VPU filler (no lane extract / broadcast) ---------------
    v = v_ref[...]                                              # [TE, 3C]
    r = rot_ref[...]                                            # [TE, 9C]
    gv = [gate * v[:, j * C:(j + 1) * C] for j in range(3)]     # gate * v_j
    rot_msgs = []
    for i in range(3):
        vr = (r[:, (3 * i + 0) * C:(3 * i + 1) * C] * gv[0]
              + r[:, (3 * i + 1) * C:(3 * i + 2) * C] * gv[1]
              + r[:, (3 * i + 2) * C:(3 * i + 3) * C] * gv[2])  # [TE, C]
        rot_msgs.append(vr)

    # --- single lane-dense aggregation: [Nd, TE] @ [TE, 4C = 128] ------------
    slab = jnp.concatenate([m] + rot_msgs, axis=-1).astype(bf16)
    acc_ref[...] += jnp.dot(a_ref[...], slab, preferred_element_type=f32)

    # --- finalize: output projection + residuals, one 128-lane store ---------
    @pl.when(k == pl.num_programs(0) - 1)
    def _():
        acc = acc_ref[...]
        out_s = jax.nn.silu(
            jnp.dot(acc[:, :C].astype(bf16), w_out_ref[...],
                    preferred_element_type=f32)) + xt_ref[...]
        out_v = acc[:, C:] + u_ref[...]
        out_ref[...] = jnp.concatenate([out_s, out_v], axis=-1)


def equi_block(params, x_source, x_target, x0_source, x0_target,
               edge_src, edge_dst, edge_length, max_val, t_code, rotation):
    e = int(edge_src.shape[0])
    n_dst, c = x_target.shape
    assert c == C
    bf16, f32 = jnp.bfloat16, jnp.float32

    # edge-tile size: single tile for small graphs, 256 (lane-aligned for the
    # aggregation matrix blocks) when gridding is actually needed.
    te = 256 if e > 256 else _round_up(e, 8)
    e_pad = _round_up(e, te)
    ndp = _round_up(n_dst, 8)

    # ---- cheap JAX glue: gathers, slab packing, padding, weight stacking ----
    xs_g = jnp.take(x_source, edge_src, axis=0)                          # [E,C]
    xd_g = jnp.take(x_target, edge_dst, axis=0)                          # [E,C]
    xsxd = jnp.concatenate([xs_g, xd_g], axis=-1).astype(bf16)           # [E,2C]
    v_flat = jnp.take(x0_source.reshape(-1, 3 * C), edge_src,
                      axis=0).astype(f32)                                # [E,3C]
    pos = (edge_length / max_val).reshape(e, 1).astype(f32)              # [E,1]
    rot_b = jnp.broadcast_to(
        rotation.reshape(e, 9, 1).astype(f32), (e, 9, C)).reshape(e, 9 * C)

    # one-hot aggregation matrix; padded edge columns are zero, so padded
    # edges contribute nothing (validity handled by construction).
    a = (edge_dst[None, :] ==
         jnp.arange(n_dst, dtype=edge_dst.dtype)[:, None]).astype(bf16)  # [Nd,E]

    pad_e = lambda arr: jnp.pad(arr, ((0, e_pad - e), (0, 0)))
    xsxd, pos, rot_b, v_flat = map(pad_e, (xsxd, pos, rot_b, v_flat))
    a = jnp.pad(a, ((0, ndp - n_dst), (0, e_pad - e)))
    xt = jnp.pad(x_target.astype(f32), ((0, ndp - n_dst), (0, 0)))
    u_flat = jnp.pad(x0_target.reshape(n_dst, 3 * C).astype(f32),
                     ((0, ndp - n_dst), (0, 0)))

    freqs = jnp.exp(-jnp.log(10000.0) *
                    jnp.arange(HALF, dtype=f32) / (HALF - 1)).reshape(1, HALF)
    t_bias = jnp.dot(t_code.astype(f32), params["w_t"].astype(f32))      # [1,C]

    w_sd = jnp.concatenate([params["w_src"], params["w_dst"]],
                           axis=0).astype(bf16)                          # [2C,C]
    w_es = params["w_edge"][:HALF].astype(bf16)
    w_ec = params["w_edge"][HALF:].astype(bf16)
    w_gate = params["w_gate"].astype(bf16)
    w_out = params["w_out"].astype(bf16)

    n_tiles = e_pad // te
    full = lambda k: (0, 0)
    edge_row = lambda k: (k, 0)

    out = pl.pallas_call(
        _equi_block_kernel,
        out_shape=jax.ShapeDtypeStruct((ndp, 4 * C), f32),
        grid_spec=pltpu.PrefetchScalarGridSpec(
            num_scalar_prefetch=0,
            grid=(n_tiles,),
            in_specs=[
                pl.BlockSpec((te, 2 * C), edge_row),        # [xs|xd]
                pl.BlockSpec((te, 1), edge_row),            # pos
                pl.BlockSpec((te, 9 * C), edge_row),        # rotation (bcast)
                pl.BlockSpec((te, 3 * C), edge_row),        # gathered x0_src
                pl.BlockSpec((ndp, te), lambda k: (0, k)),  # aggregation one-hot
                pl.BlockSpec((ndp, C), full),               # scalar residual
                pl.BlockSpec((ndp, 3 * C), full),           # vector residual
                pl.BlockSpec((1, HALF), full),              # sin-emb freqs
                pl.BlockSpec((1, C), full),                 # t_code @ w_t bias
                pl.BlockSpec((2 * C, C), full),             # w_src|w_dst
                pl.BlockSpec((HALF, C), full),              # w_edge (sin half)
                pl.BlockSpec((HALF, C), full),              # w_edge (cos half)
                pl.BlockSpec((C, C), full),                 # w_gate
                pl.BlockSpec((C, C), full),                 # w_out
            ],
            out_specs=pl.BlockSpec((ndp, 4 * C), full),     # lane-dense 128-wide
            scratch_shapes=[pltpu.VMEM((ndp, 4 * C), f32)],
        ),
        compiler_params=pltpu.CompilerParams(
            dimension_semantics=("arbitrary",)),
    )(xsxd, pos, rot_b, v_flat, a, xt, u_flat, freqs, t_bias,
      w_sd, w_es, w_ec, w_gate, w_out)

    y = out[:n_dst, :C]
    y0 = out[:n_dst, C:].reshape(n_dst, 3, C)
    return y, y0


# ------------------------------------------------------------- full module ---
def init_block_params(key, c, f):
    ks = jax.random.split(key, 6)
    s = 0.1
    return dict(
        w_src=jax.random.normal(ks[0], (c, c), jnp.float32) * s,
        w_dst=jax.random.normal(ks[1], (c, c), jnp.float32) * s,
        w_edge=jax.random.normal(ks[2], (f, c), jnp.float32) * s,
        w_t=jax.random.normal(ks[3], (f, c), jnp.float32) * s,
        w_gate=jax.random.normal(ks[4], (c, c), jnp.float32) * s,
        w_out=jax.random.normal(ks[5], (c, c), jnp.float32) * s,
    )


def transition_down_forward(params, bi_g, g_coarse, t_code, x, x_0,
                            max_len=1.0, max_len_bi=1.0):
    # propagate_bi_g: pre_v_f = x[v_idx], pre_v_f_0 = x_0[v_idx]  (cheap glue)
    pre_v_f = jnp.take(x, bi_g["v_idx"], axis=0)
    pre_v_f_0 = jnp.take(x_0, bi_g["v_idx"], axis=0)

    # down_gnn on the bipartite graph (sin embedding fused into the kernel)
    x_down, x_down_0 = equi_block(
        params["down_gnn"], x, pre_v_f, x_0, pre_v_f_0,
        bi_g["e"][0], bi_g["e"][1], bi_g["edge_length"], max_len_bi,
        t_code, bi_g["uv_rotation"])

    # gnn on the coarse graph
    y, y_0 = equi_block(
        params["gnn"], x_down, x_down, x_down_0, x_down_0,
        g_coarse["e"][0], g_coarse["e"][1], g_coarse["edge_length"], max_len,
        t_code, g_coarse["e_rotation"])
    return y, y_0


# ----------------------------------------------------------------------- main
if __name__ == "__main__":
    key = jax.random.PRNGKey(0)
    (k_x, k_x0, k_vidx, k_be, k_bel, k_br, k_ce, k_cel, k_cr,
     k_t, k_p1, k_p2) = jax.random.split(key, 12)

    N_FINE, N_COARSE = 32, 8
    E_BI, E_C = 64, 32

    # fine-graph node features
    x = jax.random.normal(k_x, (N_FINE, C), jnp.float32)
    x_0 = jax.random.normal(k_x0, (N_FINE, 3, C), jnp.float32)

    # bi-graph (fine -> coarse)
    bi_g = dict(
        v_idx=jax.random.randint(k_vidx, (N_COARSE,), 0, N_FINE, jnp.int32),
        e=jnp.stack([
            jax.random.randint(k_be, (E_BI,), 0, N_FINE, jnp.int32),
            jax.random.randint(jax.random.fold_in(k_be, 1), (E_BI,), 0,
                               N_COARSE, jnp.int32)]),
        edge_length=jax.random.uniform(k_bel, (E_BI,), jnp.float32, 0.0, 1.0),
        uv_rotation=jax.random.normal(k_br, (E_BI, 3, 3), jnp.float32),
    )

    # coarse graph
    g_coarse = dict(
        e=jnp.stack([
            jax.random.randint(k_ce, (E_C,), 0, N_COARSE, jnp.int32),
            jax.random.randint(jax.random.fold_in(k_ce, 1), (E_C,), 0,
                               N_COARSE, jnp.int32)]),
        edge_length=jax.random.uniform(k_cel, (E_C,), jnp.float32, 0.0, 1.0),
        e_rotation=jax.random.normal(k_cr, (E_C, 3, 3), jnp.float32),
    )

    t_code = jax.random.normal(k_t, (1, F), jnp.float32)

    params = dict(down_gnn=init_block_params(k_p1, C, F),
                  gnn=init_block_params(k_p2, C, F))

    fwd = jax.jit(functools.partial(transition_down_forward,
                                    max_len=1.0, max_len_bi=1.0))
    y, y_0 = fwd(params, bi_g, g_coarse, t_code, x, x_0)
    jax.block_until_ready((y, y_0))
    assert y.shape == (N_COARSE, C) and y_0.shape == (N_COARSE, 3, C)
    assert bool(jnp.all(jnp.isfinite(y))) and bool(jnp.all(jnp.isfinite(y_0)))
    print("KERNEL_OK")
</pallas_src>

<mosaic_0001>
module attributes {stable_mosaic.version = 11 : i64} {
  func.func @_equi_block_kernel(%arg0: i32, %arg1: memref<64x64xbf16, #tpu.memory_space<vmem>>, %arg2: memref<64x1xf32, #tpu.memory_space<vmem>>, %arg3: memref<64x288xf32, #tpu.memory_space<vmem>>, %arg4: memref<64x96xf32, #tpu.memory_space<vmem>>, %arg5: memref<8x64xbf16, #tpu.memory_space<vmem>>, %arg6: memref<8x32xf32, #tpu.memory_space<vmem>>, %arg7: memref<8x96xf32, #tpu.memory_space<vmem>>, %arg8: memref<1x16xf32, #tpu.memory_space<vmem>>, %arg9: memref<1x32xf32, #tpu.memory_space<vmem>>, %arg10: memref<64x32xbf16, #tpu.memory_space<vmem>>, %arg11: memref<16x32xbf16, #tpu.memory_space<vmem>>, %arg12: memref<16x32xbf16, #tpu.memory_space<vmem>>, %arg13: memref<32x32xbf16, #tpu.memory_space<vmem>>, %arg14: memref<32x32xbf16, #tpu.memory_space<vmem>>, %arg15: memref<8x128xf32, #tpu.memory_space<vmem>>, %arg16: memref<8x128xf32, #tpu.memory_space<vmem>>) attributes {dimension_semantics = [#tpu.dimension_semantics<arbitrary>], iteration_bounds = array<i64: 1>, scalar_prefetch = 0 : i64, scratch_operands = 1 : i64, tpu.core_type = #tpu.core_type<tc>, window_params = [{transform_indices = @transform_0, window_bounds = array<i64: 64, 64>}, {transform_indices = @transform_1, window_bounds = array<i64: 64, 1>}, {transform_indices = @transform_2, window_bounds = array<i64: 64, 288>}, {transform_indices = @transform_3, window_bounds = array<i64: 64, 96>}, {transform_indices = @transform_4, window_bounds = array<i64: 8, 64>}, {pipeline_mode = #tpu.pipeline_mode<synchronous>, transform_indices = @transform_5, window_bounds = array<i64: 8, 32>}, {pipeline_mode = #tpu.pipeline_mode<synchronous>, transform_indices = @transform_6, window_bounds = array<i64: 8, 96>}, {pipeline_mode = #tpu.pipeline_mode<synchronous>, transform_indices = @transform_7, window_bounds = array<i64: 1, 16>}, {pipeline_mode = #tpu.pipeline_mode<synchronous>, transform_indices = @transform_8, window_bounds = array<i64: 1, 32>}, {pipeline_mode = #tpu.pipeline_mode<synchronous>, transform_indices = @transform_9, window_bounds = array<i64: 64, 32>}, {pipeline_mode = #tpu.pipeline_mode<synchronous>, transform_indices = @transform_10, window_bounds = array<i64: 16, 32>}, {pipeline_mode = #tpu.pipeline_mode<synchronous>, transform_indices = @transform_11, window_bounds = array<i64: 16, 32>}, {pipeline_mode = #tpu.pipeline_mode<synchronous>, transform_indices = @transform_12, window_bounds = array<i64: 32, 32>}, {pipeline_mode = #tpu.pipeline_mode<synchronous>, transform_indices = @transform_13, window_bounds = array<i64: 32, 32>}, {pipeline_mode = #tpu.pipeline_mode<synchronous>, transform_indices = @transform_14, window_bounds = array<i64: 8, 128>}]} {
    %c0_i32 = arith.constant 0 : i32
    %0 = arith.cmpi eq, %arg0, %c0_i32 : i32
    %1 = arith.extui %0 : i1 to i32
    %c0_i32_0 = arith.constant 0 : i32
    %2 = arith.cmpi ne, %1, %c0_i32_0 : i32
    scf.if %2 {
      %cst_34 = arith.constant 0.000000e+00 : f32
      %80 = vector.broadcast %cst_34 : f32 to vector<8x128xf32>
      %c0_35 = arith.constant 0 : index
      %c0_36 = arith.constant 0 : index
      %81 = vector.load %arg16[%c0_35, %c0_36] : memref<8x128xf32, #tpu.memory_space<vmem>>, vector<8x128xf32>
      tpu.vector_store %arg16[%c0_35, %c0_36], %80 {strides = array<i32>} : memref<8x128xf32, #tpu.memory_space<vmem>>, vector<8x128xf32>,
    } else {
    }
    %c0 = arith.constant 0 : index
    %c0_1 = arith.constant 0 : index
    %3 = vector.load %arg2[%c0, %c0_1] : memref<64x1xf32, #tpu.memory_space<vmem>>, vector<64x1xf32>
    %c0_2 = arith.constant 0 : index
    %c0_3 = arith.constant 0 : index
    %4 = vector.load %arg8[%c0_2, %c0_3] : memref<1x16xf32, #tpu.memory_space<vmem>>, vector<1x16xf32>
    %5 = vector.broadcast %3 : vector<64x1xf32> to vector<64x16xf32>
    %6 = vector.broadcast %4 : vector<1x16xf32> to vector<64x16xf32>
    %7 = arith.mulf %5, %6 : vector<64x16xf32>
    %8 = math.sin %7 : vector<64x16xf32>
    %9 = arith.truncf %8 : vector<64x16xf32> to vector<64x16xbf16>
    %10 = math.cos %7 : vector<64x16xf32>
    %11 = arith.truncf %10 : vector<64x16xf32> to vector<64x16xbf16>
    %c0_4 = arith.constant 0 : index
    %c0_5 = arith.constant 0 : index
    %12 = vector.load %arg1[%c0_4, %c0_5] : memref<64x64xbf16, #tpu.memory_space<vmem>>, vector<64x64xbf16>
    %c0_6 = arith.constant 0 : index
    %c0_7 = arith.constant 0 : index
    %13 = vector.load %arg10[%c0_6, %c0_7] : memref<64x32xbf16, #tpu.memory_space<vmem>>, vector<64x32xbf16>
    %cst = arith.constant dense<0.000000e+00> : vector<64x32xf32>
    %14 = tpu.matmul %12, %13, %cst {dimension_numbers = #tpu.dot_dimension_numbers<[1], [0], [0], [1], [0, 0, 1, 1], [], []>} : vector<64x64xbf16>, vector<64x32xbf16>, vector<64x32xf32> -> vector<64x32xf32>
    %c0_8 = arith.constant 0 : index
    %c0_9 = arith.constant 0 : index
    %15 = vector.load %arg11[%c0_8, %c0_9] : memref<16x32xbf16, #tpu.memory_space<vmem>>, vector<16x32xbf16>
    %cst_10 = arith.constant dense<0.000000e+00> : vector<64x32xf32>
    %16 = tpu.matmul %9, %15, %cst_10 {dimension_numbers = #tpu.dot_dimension_numbers<[1], [0], [0], [1], [0, 0, 1, 1], [], []>} : vector<64x16xbf16>, vector<16x32xbf16>, vector<64x32xf32> -> vector<64x32xf32>
    %17 = arith.addf %14, %16 : vector<64x32xf32>
    %c0_11 = arith.constant 0 : index
    %c0_12 = arith.constant 0 : index
    %18 = vector.load %arg12[%c0_11, %c0_12] : memref<16x32xbf16, #tpu.memory_space<vmem>>, vector<16x32xbf16>
    %cst_13 = arith.constant dense<0.000000e+00> : vector<64x32xf32>
    %19 = tpu.matmul %11, %18, %cst_13 {dimension_numbers = #tpu.dot_dimension_numbers<[1], [0], [0], [1], [0, 0, 1, 1], [], []>} : vector<64x16xbf16>, vector<16x32xbf16>, vector<64x32xf32> -> vector<64x32xf32>
    %20 = arith.addf %17, %19 : vector<64x32xf32>
    %c0_14 = arith.constant 0 : index
    %c0_15 = arith.constant 0 : index
    %21 = vector.load %arg9[%c0_14, %c0_15] : memref<1x32xf32, #tpu.memory_space<vmem>>, vector<1x32xf32>
    %22 = vector.broadcast %21 : vector<1x32xf32> to vector<64x32xf32>
    %23 = arith.addf %20, %22 : vector<64x32xf32>
    %24 = arith.negf %23 : vector<64x32xf32>
    %25 = math.exp %24 : vector<64x32xf32>
    %cst_16 = arith.constant 1.000000e+00 : f32
    %26 = vector.broadcast %cst_16 : f32 to vector<64x32xf32>
    %27 = arith.addf %26, %25 : vector<64x32xf32>
    %28 = arith.divf %26, %27 : vector<64x32xf32>
    %29 = arith.mulf %23, %28 : vector<64x32xf32>
    %30 = arith.truncf %29 : vector<64x32xf32> to vector<64x32xbf16>
    %c0_17 = arith.constant 0 : index
    %c0_18 = arith.constant 0 : index
    %31 = vector.load %arg13[%c0_17, %c0_18] : memref<32x32xbf16, #tpu.memory_space<vmem>>, vector<32x32xbf16>
    %cst_19 = arith.constant dense<0.000000e+00> : vector<64x32xf32>
    %32 = tpu.matmul %30, %31, %cst_19 {dimension_numbers = #tpu.dot_dimension_numbers<[1], [0], [0], [1], [0, 0, 1, 1], [], []>} : vector<64x32xbf16>, vector<32x32xbf16>, vector<64x32xf32> -> vector<64x32xf32>
    %33 = arith.negf %32 : vector<64x32xf32>
    %34 = math.exp %33 : vector<64x32xf32>
    %cst_20 = arith.constant 1.000000e+00 : f32
    %35 = vector.broadcast %cst_20 : f32 to vector<64x32xf32>
    %36 = arith.addf %35, %34 : vector<64x32xf32>
    %37 = arith.divf %35, %36 : vector<64x32xf32>
    %c0_21 = arith.constant 0 : index
    %c0_22 = arith.constant 0 : index
    %38 = vector.load %arg4[%c0_21, %c0_22] : memref<64x96xf32, #tpu.memory_space<vmem>>, vector<64x96xf32>
    %c0_23 = arith.constant 0 : index
    %c0_24 = arith.constant 0 : index
    %39 = vector.load %arg3[%c0_23, %c0_24] : memref<64x288xf32, #tpu.memory_space<vmem>>, vector<64x288xf32>
    %40 = vector.extract_strided_slice %38 {offsets = [0, 0], sizes = [64, 32], strides = [1, 1]} : vector<64x96xf32> to vector<64x32xf32>
    %41 = arith.mulf %37, %40 : vector<64x32xf32>
    %42 = vector.extract_strided_slice %38 {offsets = [0, 32], sizes = [64, 32], strides = [1, 1]} : vector<64x96xf32> to vector<64x32xf32>
    %43 = arith.mulf %37, %42 : vector<64x32xf32>
    %44 = vector.extract_strided_slice %38 {offsets = [0, 64], sizes = [64, 32], strides = [1, 1]} : vector<64x96xf32> to vector<64x32xf32>
    %45 = arith.mulf %37, %44 : vector<64x32xf32>
    %46 = vector.extract_strided_slice %39 {offsets = [0, 0], sizes = [64, 32], strides = [1, 1]} : vector<64x288xf32> to vector<64x32xf32>
    %47 = arith.mulf %46, %41 : vector<64x32xf32>
    %48 = vector.extract_strided_slice %39 {offsets = [0, 32], sizes = [64, 32], strides = [1, 1]} : vector<64x288xf32> to vector<64x32xf32>
    %49 = arith.mulf %48, %43 : vector<64x32xf32>
    %50 = arith.addf %47, %49 : vector<64x32xf32>
    %51 = vector.extract_strided_slice %39 {offsets = [0, 64], sizes = [64, 32], strides = [1, 1]} : vector<64x288xf32> to vector<64x32xf32>
    %52 = arith.mulf %51, %45 : vector<64x32xf32>
    %53 = arith.addf %50, %52 : vector<64x32xf32>
    %54 = vector.extract_strided_slice %39 {offsets = [0, 96], sizes = [64, 32], strides = [1, 1]} : vector<64x288xf32> to vector<64x32xf32>
    %55 = arith.mulf %54, %41 : vector<64x32xf32>
    %56 = vector.extract_strided_slice %39 {offsets = [0, 128], sizes = [64, 32], strides = [1, 1]} : vector<64x288xf32> to vector<64x32xf32>
    %57 = arith.mulf %56, %43 : vector<64x32xf32>
    %58 = arith.addf %55, %57 : vector<64x32xf32>
    %59 = vector.extract_strided_slice %39 {offsets = [0, 160], sizes = [64, 32], strides = [1, 1]} : vector<64x288xf32> to vector<64x32xf32>
    %60 = arith.mulf %59, %45 : vector<64x32xf32>
    %61 = arith.addf %58, %60 : vector<64x32xf32>
    %62 = vector.extract_strided_slice %39 {offsets = [0, 192], sizes = [64, 32], strides = [1, 1]} : vector<64x288xf32> to vector<64x32xf32>
    %63 = arith.mulf %62, %41 : vector<64x32xf32>
    %64 = vector.extract_strided_slice %39 {offsets = [0, 224], sizes = [64, 32], strides = [1, 1]} : vector<64x288xf32> to vector<64x32xf32>
    %65 = arith.mulf %64, %43 : vector<64x32xf32>
    %66 = arith.addf %63, %65 : vector<64x32xf32>
    %67 = vector.extract_strided_slice %39 {offsets = [0, 256], sizes = [64, 32], strides = [1, 1]} : vector<64x288xf32> to vector<64x32xf32>
    %68 = arith.mulf %67, %45 : vector<64x32xf32>
    %69 = arith.addf %66, %68 : vector<64x32xf32>
    %70 = tpu.concatenate %29, %53, %61, %69 in 1 : vector<64x32xf32>, vector<64x32xf32>, vector<64x32xf32>, vector<64x32xf32> -> vector<64x128xf32>
    %71 = arith.truncf %70 : vector<64x128xf32> to vector<64x128xbf16>
    %c0_25 = arith.constant 0 : index
    %c0_26 = arith.constant 0 : index
    %72 = vector.load %arg16[%c0_25, %c0_26] : memref<8x128xf32, #tpu.memory_space<vmem>>, vector<8x128xf32>
    %c0_27 = arith.constant 0 : index
    %c0_28 = arith.constant 0 : index
    %73 = vector.load %arg5[%c0_27, %c0_28] : memref<8x64xbf16, #tpu.memory_space<vmem>>, vector<8x64xbf16>
    %cst_29 = arith.constant dense<0.000000e+00> : vector<8x128xf32>
    %74 = tpu.matmul %73, %71, %cst_29 {dimension_numbers = #tpu.dot_dimension_numbers<[1], [0], [0], [1], [0, 0, 1, 1], [], []>} : vector<8x64xbf16>, vector<64x128xbf16>, vector<8x128xf32> -> vector<8x128xf32>
    %75 = arith.addf %72, %74 : vector<8x128xf32>
    %c0_30 = arith.constant 0 : index
    %c0_31 = arith.constant 0 : index
    %76 = vector.load %arg16[%c0_30, %c0_31] : memref<8x128xf32, #tpu.memory_space<vmem>>, vector<8x128xf32>
    tpu.vector_store %arg16[%c0_30, %c0_31], %75 {strides = array<i32>} : memref<8x128xf32, #tpu.memory_space<vmem>>, vector<8x128xf32>,
    %c0_i32_32 = arith.constant 0 : i32
    %77 = arith.cmpi eq, %arg0, %c0_i32_32 : i32
    %78 = arith.extui %77 : i1 to i32
    %c0_i32_33 = arith.constant 0 : i32
    %79 = arith.cmpi ne, %78, %c0_i32_33 : i32
    scf.if %79 {
      %c0_34 = arith.constant 0 : index
      %c0_35 = arith.constant 0 : index
      %80 = vector.load %arg16[%c0_34, %c0_35] : memref<8x128xf32, #tpu.memory_space<vmem>>, vector<8x128xf32>
      %81 = vector.extract_strided_slice %80 {offsets = [0, 0], sizes = [8, 32], strides = [1, 1]} : vector<8x128xf32> to vector<8x32xf32>
      %82 = arith.truncf %81 : vector<8x32xf32> to vector<8x32xbf16>
      %c0_36 = arith.constant 0 : index
      %c0_37 = arith.constant 0 : index
      %83 = vector.load %arg14[%c0_36, %c0_37] : memref<32x32xbf16, #tpu.memory_space<vmem>>, vector<32x32xbf16>
      %cst_38 = arith.constant dense<0.000000e+00> : vector<8x32xf32>
      %84 = tpu.matmul %82, %83, %cst_38 {dimension_numbers = #tpu.dot_dimension_numbers<[1], [0], [0], [1], [0, 0, 1, 1], [], []>} : vector<8x32xbf16>, vector<32x32xbf16>, vector<8x32xf32> -> vector<8x32xf32>
      %85 = arith.negf %84 : vector<8x32xf32>
      %86 = math.exp %85 : vector<8x32xf32>
      %cst_39 = arith.constant 1.000000e+00 : f32
      %87 = vector.broadcast %cst_39 : f32 to vector<8x32xf32>
      %88 = arith.addf %87, %86 : vector<8x32xf32>
      %89 = arith.divf %87, %88 : vector<8x32xf32>
      %90 = arith.mulf %84, %89 : vector<8x32xf32>
      %c0_40 = arith.constant 0 : index
      %c0_41 = arith.constant 0 : index
      %91 = vector.load %arg6[%c0_40, %c0_41] : memref<8x32xf32, #tpu.memory_space<vmem>>, vector<8x32xf32>
      %92 = arith.addf %90, %91 : vector<8x32xf32>
      %93 = vector.extract_strided_slice %80 {offsets = [0, 32], sizes = [8, 96], strides = [1, 1]} : vector<8x128xf32> to vector<8x96xf32>
      %c0_42 = arith.constant 0 : index
      %c0_43 = arith.constant 0 : index
      %94 = vector.load %arg7[%c0_42, %c0_43] : memref<8x96xf32, #tpu.memory_space<vmem>>, vector<8x96xf32>
      %95 = arith.addf %93, %94 : vector<8x96xf32>
      %96 = tpu.concatenate %92, %95 in 1 : vector<8x32xf32>, vector<8x96xf32> -> vector<8x128xf32>
      %c0_44 = arith.constant 0 : index
      %c0_45 = arith.constant 0 : index
      %97 = vector.load %arg15[%c0_44, %c0_45] : memref<8x128xf32, #tpu.memory_space<vmem>>, vector<8x128xf32>
      tpu.vector_store %arg15[%c0_44, %c0_45], %96 {strides = array<i32>} : memref<8x128xf32, #tpu.memory_space<vmem>>, vector<8x128xf32>,
    } else {
    }
    return
  }
  func.func @transform_0(%arg0: i32) -> (i32, i32) {
    %c0_i32 = arith.constant 0 : i32
    %c0_i32_0 = arith.constant 0 : i32
    return %arg0, %c0_i32 : i32, i32
  }
  func.func @transform_1(%arg0: i32) -> (i32, i32) {
    %c0_i32 = arith.constant 0 : i32
    %c0_i32_0 = arith.constant 0 : i32
    return %arg0, %c0_i32 : i32, i32
  }
  func.func @transform_2(%arg0: i32) -> (i32, i32) {
    %c0_i32 = arith.constant 0 : i32
    %c0_i32_0 = arith.constant 0 : i32
    return %arg0, %c0_i32 : i32, i32
  }
  func.func @transform_3(%arg0: i32) -> (i32, i32) {
    %c0_i32 = arith.constant 0 : i32
    %c0_i32_0 = arith.constant 0 : i32
    return %arg0, %c0_i32 : i32, i32
  }
  func.func @transform_4(%arg0: i32) -> (i32, i32) {
    %c0_i32 = arith.constant 0 : i32
    %c0_i32_0 = arith.constant 0 : i32
    return %c0_i32, %arg0 : i32, i32
  }
  func.func @transform_5(%arg0: i32) -> (i32, i32) {
    %c0_i32 = arith.constant 0 : i32
    %c0_i32_0 = arith.constant 0 : i32
    %c0_i32_1 = arith.constant 0 : i32
    return %c0_i32, %c0_i32_0 : i32, i32
  }
  func.func @transform_6(%arg0: i32) -> (i32, i32) {
    %c0_i32 = arith.constant 0 : i32
    %c0_i32_0 = arith.constant 0 : i32
    %c0_i32_1 = arith.constant 0 : i32
    return %c0_i32, %c0_i32_0 : i32, i32
  }
  func.func @transform_7(%arg0: i32) -> (i32, i32) {
    %c0_i32 = arith.constant 0 : i32
    %c0_i32_0 = arith.constant 0 : i32
    %c0_i32_1 = arith.constant 0 : i32
    return %c0_i32, %c0_i32_0 : i32, i32
  }
  func.func @transform_8(%arg0: i32) -> (i32, i32) {
    %c0_i32 = arith.constant 0 : i32
    %c0_i32_0 = arith.constant 0 : i32
    %c0_i32_1 = arith.constant 0 : i32
    return %c0_i32, %c0_i32_0 : i32, i32
  }
  func.func @transform_9(%arg0: i32) -> (i32, i32) {
    %c0_i32 = arith.constant 0 : i32
    %c0_i32_0 = arith.constant 0 : i32
    %c0_i32_1 = arith.constant 0 : i32
    return %c0_i32, %c0_i32_0 : i32, i32
  }
  func.func @transform_10(%arg0: i32) -> (i32, i32) {
    %c0_i32 = arith.constant 0 : i32
    %c0_i32_0 = arith.constant 0 : i32
    %c0_i32_1 = arith.constant 0 : i32
    return %c0_i32, %c0_i32_0 : i32, i32
  }
  func.func @transform_11(%arg0: i32) -> (i32, i32) {
    %c0_i32 = arith.constant 0 : i32
    %c0_i32_0 = arith.constant 0 : i32
    %c0_i32_1 = arith.constant 0 : i32
    return %c0_i32, %c0_i32_0 : i32, i32
  }
  func.func @transform_12(%arg0: i32) -> (i32, i32) {
    %c0_i32 = arith.constant 0 : i32
    %c0_i32_0 = arith.constant 0 : i32
    %c0_i32_1 = arith.constant 0 : i32
    return %c0_i32, %c0_i32_0 : i32, i32
  }
  func.func @transform_13(%arg0: i32) -> (i32, i32) {
    %c0_i32 = arith.constant 0 : i32
    %c0_i32_0 = arith.constant 0 : i32
    %c0_i32_1 = arith.constant 0 : i32
    return %c0_i32, %c0_i32_0 : i32, i32
  }
  func.func @transform_14(%arg0: i32) -> (i32, i32) {
    %c0_i32 = arith.constant 0 : i32
    %c0_i32_0 = arith.constant 0 : i32
    %c0_i32_1 = arith.constant 0 : i32
    return %c0_i32, %c0_i32_0 : i32, i32
  }
}

module attributes {stable_mosaic.version = 11 : i64} {
  func.func @_equi_block_kernel(%arg0: i32, %arg1: memref<32x64xbf16, #tpu.memory_space<vmem>>, %arg2: memref<32x1xf32, #tpu.memory_space<vmem>>, %arg3: memref<32x288xf32, #tpu.memory_space<vmem>>, %arg4: memref<32x96xf32, #tpu.memory_space<vmem>>, %arg5: memref<8x32xbf16, #tpu.memory_space<vmem>>, %arg6: memref<8x32xf32, #tpu.memory_space<vmem>>, %arg7: memref<8x96xf32, #tpu.memory_space<vmem>>, %arg8: memref<1x16xf32, #tpu.memory_space<vmem>>, %arg9: memref<1x32xf32, #tpu.memory_space<vmem>>, %arg10: memref<64x32xbf16, #tpu.memory_space<vmem>>, %arg11: memref<16x32xbf16, #tpu.memory_space<vmem>>, %arg12: memref<16x32xbf16, #tpu.memory_space<vmem>>, %arg13: memref<32x32xbf16, #tpu.memory_space<vmem>>, %arg14: memref<32x32xbf16, #tpu.memory_space<vmem>>, %arg15: memref<8x128xf32, #tpu.memory_space<vmem>>, %arg16: memref<8x128xf32, #tpu.memory_space<vmem>>) attributes {dimension_semantics = [#tpu.dimension_semantics<arbitrary>], iteration_bounds = array<i64: 1>, scalar_prefetch = 0 : i64, scratch_operands = 1 : i64, tpu.core_type = #tpu.core_type<tc>, window_params = [{transform_indices = @transform_0, window_bounds = array<i64: 32, 64>}, {transform_indices = @transform_1, window_bounds = array<i64: 32, 1>}, {transform_indices = @transform_2, window_bounds = array<i64: 32, 288>}, {transform_indices = @transform_3, window_bounds = array<i64: 32, 96>}, {transform_indices = @transform_4, window_bounds = array<i64: 8, 32>}, {pipeline_mode = #tpu.pipeline_mode<synchronous>, transform_indices = @transform_5, window_bounds = array<i64: 8, 32>}, {pipeline_mode = #tpu.pipeline_mode<synchronous>, transform_indices = @transform_6, window_bounds = array<i64: 8, 96>}, {pipeline_mode = #tpu.pipeline_mode<synchronous>, transform_indices = @transform_7, window_bounds = array<i64: 1, 16>}, {pipeline_mode = #tpu.pipeline_mode<synchronous>, transform_indices = @transform_8, window_bounds = array<i64: 1, 32>}, {pipeline_mode = #tpu.pipeline_mode<synchronous>, transform_indices = @transform_9, window_bounds = array<i64: 64, 32>}, {pipeline_mode = #tpu.pipeline_mode<synchronous>, transform_indices = @transform_10, window_bounds = array<i64: 16, 32>}, {pipeline_mode = #tpu.pipeline_mode<synchronous>, transform_indices = @transform_11, window_bounds = array<i64: 16, 32>}, {pipeline_mode = #tpu.pipeline_mode<synchronous>, transform_indices = @transform_12, window_bounds = array<i64: 32, 32>}, {pipeline_mode = #tpu.pipeline_mode<synchronous>, transform_indices = @transform_13, window_bounds = array<i64: 32, 32>}, {pipeline_mode = #tpu.pipeline_mode<synchronous>, transform_indices = @transform_14, window_bounds = array<i64: 8, 128>}]} {
    %c0_i32 = arith.constant 0 : i32
    %0 = arith.cmpi eq, %arg0, %c0_i32 : i32
    %1 = arith.extui %0 : i1 to i32
    %c0_i32_0 = arith.constant 0 : i32
    %2 = arith.cmpi ne, %1, %c0_i32_0 : i32
    scf.if %2 {
      %cst_34 = arith.constant 0.000000e+00 : f32
      %80 = vector.broadcast %cst_34 : f32 to vector<8x128xf32>
      %c0_35 = arith.constant 0 : index
      %c0_36 = arith.constant 0 : index
      %81 = vector.load %arg16[%c0_35, %c0_36] : memref<8x128xf32, #tpu.memory_space<vmem>>, vector<8x128xf32>
      tpu.vector_store %arg16[%c0_35, %c0_36], %80 {strides = array<i32>} : memref<8x128xf32, #tpu.memory_space<vmem>>, vector<8x128xf32>,
    } else {
    }
    %c0 = arith.constant 0 : index
    %c0_1 = arith.constant 0 : index
    %3 = vector.load %arg2[%c0, %c0_1] : memref<32x1xf32, #tpu.memory_space<vmem>>, vector<32x1xf32>
    %c0_2 = arith.constant 0 : index
    %c0_3 = arith.constant 0 : index
    %4 = vector.load %arg8[%c0_2, %c0_3] : memref<1x16xf32, #tpu.memory_space<vmem>>, vector<1x16xf32>
    %5 = vector.broadcast %3 : vector<32x1xf32> to vector<32x16xf32>
    %6 = vector.broadcast %4 : vector<1x16xf32> to vector<32x16xf32>
    %7 = arith.mulf %5, %6 : vector<32x16xf32>
    %8 = math.sin %7 : vector<32x16xf32>
    %9 = arith.truncf %8 : vector<32x16xf32> to vector<32x16xbf16>
    %10 = math.cos %7 : vector<32x16xf32>
    %11 = arith.truncf %10 : vector<32x16xf32> to vector<32x16xbf16>
    %c0_4 = arith.constant 0 : index
    %c0_5 = arith.constant 0 : index
    %12 = vector.load %arg1[%c0_4, %c0_5] : memref<32x64xbf16, #tpu.memory_space<vmem>>, vector<32x64xbf16>
    %c0_6 = arith.constant 0 : index
    %c0_7 = arith.constant 0 : index
    %13 = vector.load %arg10[%c0_6, %c0_7] : memref<64x32xbf16, #tpu.memory_space<vmem>>, vector<64x32xbf16>
    %cst = arith.constant dense<0.000000e+00> : vector<32x32xf32>
    %14 = tpu.matmul %12, %13, %cst {dimension_numbers = #tpu.dot_dimension_numbers<[1], [0], [0], [1], [0, 0, 1, 1], [], []>} : vector<32x64xbf16>, vector<64x32xbf16>, vector<32x32xf32> -> vector<32x32xf32>
    %c0_8 = arith.constant 0 : index
    %c0_9 = arith.constant 0 : index
    %15 = vector.load %arg11[%c0_8, %c0_9] : memref<16x32xbf16, #tpu.memory_space<vmem>>, vector<16x32xbf16>
    %cst_10 = arith.constant dense<0.000000e+00> : vector<32x32xf32>
    %16 = tpu.matmul %9, %15, %cst_10 {dimension_numbers = #tpu.dot_dimension_numbers<[1], [0], [0], [1], [0, 0, 1, 1], [], []>} : vector<32x16xbf16>, vector<16x32xbf16>, vector<32x32xf32> -> vector<32x32xf32>
    %17 = arith.addf %14, %16 : vector<32x32xf32>
    %c0_11 = arith.constant 0 : index
    %c0_12 = arith.constant 0 : index
    %18 = vector.load %arg12[%c0_11, %c0_12] : memref<16x32xbf16, #tpu.memory_space<vmem>>, vector<16x32xbf16>
    %cst_13 = arith.constant dense<0.000000e+00> : vector<32x32xf32>
    %19 = tpu.matmul %11, %18, %cst_13 {dimension_numbers = #tpu.dot_dimension_numbers<[1], [0], [0], [1], [0, 0, 1, 1], [], []>} : vector<32x16xbf16>, vector<16x32xbf16>, vector<32x32xf32> -> vector<32x32xf32>
    %20 = arith.addf %17, %19 : vector<32x32xf32>
    %c0_14 = arith.constant 0 : index
    %c0_15 = arith.constant 0 : index
    %21 = vector.load %arg9[%c0_14, %c0_15] : memref<1x32xf32, #tpu.memory_space<vmem>>, vector<1x32xf32>
    %22 = vector.broadcast %21 : vector<1x32xf32> to vector<32x32xf32>
    %23 = arith.addf %20, %22 : vector<32x32xf32>
    %24 = arith.negf %23 : vector<32x32xf32>
    %25 = math.exp %24 : vector<32x32xf32>
    %cst_16 = arith.constant 1.000000e+00 : f32
    %26 = vector.broadcast %cst_16 : f32 to vector<32x32xf32>
    %27 = arith.addf %26, %25 : vector<32x32xf32>
    %28 = arith.divf %26, %27 : vector<32x32xf32>
    %29 = arith.mulf %23, %28 : vector<32x32xf32>
    %30 = arith.truncf %29 : vector<32x32xf32> to vector<32x32xbf16>
    %c0_17 = arith.constant 0 : index
    %c0_18 = arith.constant 0 : index
    %31 = vector.load %arg13[%c0_17, %c0_18] : memref<32x32xbf16, #tpu.memory_space<vmem>>, vector<32x32xbf16>
    %cst_19 = arith.constant dense<0.000000e+00> : vector<32x32xf32>
    %32 = tpu.matmul %30, %31, %cst_19 {dimension_numbers = #tpu.dot_dimension_numbers<[1], [0], [0], [1], [0, 0, 1, 1], [], []>} : vector<32x32xbf16>, vector<32x32xbf16>, vector<32x32xf32> -> vector<32x32xf32>
    %33 = arith.negf %32 : vector<32x32xf32>
    %34 = math.exp %33 : vector<32x32xf32>
    %cst_20 = arith.constant 1.000000e+00 : f32
    %35 = vector.broadcast %cst_20 : f32 to vector<32x32xf32>
    %36 = arith.addf %35, %34 : vector<32x32xf32>
    %37 = arith.divf %35, %36 : vector<32x32xf32>
    %c0_21 = arith.constant 0 : index
    %c0_22 = arith.constant 0 : index
    %38 = vector.load %arg4[%c0_21, %c0_22] : memref<32x96xf32, #tpu.memory_space<vmem>>, vector<32x96xf32>
    %c0_23 = arith.constant 0 : index
    %c0_24 = arith.constant 0 : index
    %39 = vector.load %arg3[%c0_23, %c0_24] : memref<32x288xf32, #tpu.memory_space<vmem>>, vector<32x288xf32>
    %40 = vector.extract_strided_slice %38 {offsets = [0, 0], sizes = [32, 32], strides = [1, 1]} : vector<32x96xf32> to vector<32x32xf32>
    %41 = arith.mulf %37, %40 : vector<32x32xf32>
    %42 = vector.extract_strided_slice %38 {offsets = [0, 32], sizes = [32, 32], strides = [1, 1]} : vector<32x96xf32> to vector<32x32xf32>
    %43 = arith.mulf %37, %42 : vector<32x32xf32>
    %44 = vector.extract_strided_slice %38 {offsets = [0, 64], sizes = [32, 32], strides = [1, 1]} : vector<32x96xf32> to vector<32x32xf32>
    %45 = arith.mulf %37, %44 : vector<32x32xf32>
    %46 = vector.extract_strided_slice %39 {offsets = [0, 0], sizes = [32, 32], strides = [1, 1]} : vector<32x288xf32> to vector<32x32xf32>
    %47 = arith.mulf %46, %41 : vector<32x32xf32>
    %48 = vector.extract_strided_slice %39 {offsets = [0, 32], sizes = [32, 32], strides = [1, 1]} : vector<32x288xf32> to vector<32x32xf32>
    %49 = arith.mulf %48, %43 : vector<32x32xf32>
    %50 = arith.addf %47, %49 : vector<32x32xf32>
    %51 = vector.extract_strided_slice %39 {offsets = [0, 64], sizes = [32, 32], strides = [1, 1]} : vector<32x288xf32> to vector<32x32xf32>
    %52 = arith.mulf %51, %45 : vector<32x32xf32>
    %53 = arith.addf %50, %52 : vector<32x32xf32>
    %54 = vector.extract_strided_slice %39 {offsets = [0, 96], sizes = [32, 32], strides = [1, 1]} : vector<32x288xf32> to vector<32x32xf32>
    %55 = arith.mulf %54, %41 : vector<32x32xf32>
    %56 = vector.extract_strided_slice %39 {offsets = [0, 128], sizes = [32, 32], strides = [1, 1]} : vector<32x288xf32> to vector<32x32xf32>
    %57 = arith.mulf %56, %43 : vector<32x32xf32>
    %58 = arith.addf %55, %57 : vector<32x32xf32>
    %59 = vector.extract_strided_slice %39 {offsets = [0, 160], sizes = [32, 32], strides = [1, 1]} : vector<32x288xf32> to vector<32x32xf32>
    %60 = arith.mulf %59, %45 : vector<32x32xf32>
    %61 = arith.addf %58, %60 : vector<32x32xf32>
    %62 = vector.extract_strided_slice %39 {offsets = [0, 192], sizes = [32, 32], strides = [1, 1]} : vector<32x288xf32> to vector<32x32xf32>
    %63 = arith.mulf %62, %41 : vector<32x32xf32>
    %64 = vector.extract_strided_slice %39 {offsets = [0, 224], sizes = [32, 32], strides = [1, 1]} : vector<32x288xf32> to vector<32x32xf32>
    %65 = arith.mulf %64, %43 : vector<32x32xf32>
    %66 = arith.addf %63, %65 : vector<32x32xf32>
    %67 = vector.extract_strided_slice %39 {offsets = [0, 256], sizes = [32, 32], strides = [1, 1]} : vector<32x288xf32> to vector<32x32xf32>
    %68 = arith.mulf %67, %45 : vector<32x32xf32>
    %69 = arith.addf %66, %68 : vector<32x32xf32>
    %70 = tpu.concatenate %29, %53, %61, %69 in 1 : vector<32x32xf32>, vector<32x32xf32>, vector<32x32xf32>, vector<32x32xf32> -> vector<32x128xf32>
    %71 = arith.truncf %70 : vector<32x128xf32> to vector<32x128xbf16>
    %c0_25 = arith.constant 0 : index
    %c0_26 = arith.constant 0 : index
    %72 = vector.load %arg16[%c0_25, %c0_26] : memref<8x128xf32, #tpu.memory_space<vmem>>, vector<8x128xf32>
    %c0_27 = arith.constant 0 : index
    %c0_28 = arith.constant 0 : index
    %73 = vector.load %arg5[%c0_27, %c0_28] : memref<8x32xbf16, #tpu.memory_space<vmem>>, vector<8x32xbf16>
    %cst_29 = arith.constant dense<0.000000e+00> : vector<8x128xf32>
    %74 = tpu.matmul %73, %71, %cst_29 {dimension_numbers = #tpu.dot_dimension_numbers<[1], [0], [0], [1], [0, 0, 1, 1], [], []>} : vector<8x32xbf16>, vector<32x128xbf16>, vector<8x128xf32> -> vector<8x128xf32>
    %75 = arith.addf %72, %74 : vector<8x128xf32>
    %c0_30 = arith.constant 0 : index
    %c0_31 = arith.constant 0 : index
    %76 = vector.load %arg16[%c0_30, %c0_31] : memref<8x128xf32, #tpu.memory_space<vmem>>, vector<8x128xf32>
    tpu.vector_store %arg16[%c0_30, %c0_31], %75 {strides = array<i32>} : memref<8x128xf32, #tpu.memory_space<vmem>>, vector<8x128xf32>,
    %c0_i32_32 = arith.constant 0 : i32
    %77 = arith.cmpi eq, %arg0, %c0_i32_32 : i32
    %78 = arith.extui %77 : i1 to i32
    %c0_i32_33 = arith.constant 0 : i32
    %79 = arith.cmpi ne, %78, %c0_i32_33 : i32
    scf.if %79 {
      %c0_34 = arith.constant 0 : index
      %c0_35 = arith.constant 0 : index
      %80 = vector.load %arg16[%c0_34, %c0_35] : memref<8x128xf32, #tpu.memory_space<vmem>>, vector<8x128xf32>
      %81 = vector.extract_strided_slice %80 {offsets = [0, 0], sizes = [8, 32], strides = [1, 1]} : vector<8x128xf32> to vector<8x32xf32>
      %82 = arith.truncf %81 : vector<8x32xf32> to vector<8x32xbf16>
      %c0_36 = arith.constant 0 : index
      %c0_37 = arith.constant 0 : index
      %83 = vector.load %arg14[%c0_36, %c0_37] : memref<32x32xbf16, #tpu.memory_space<vmem>>, vector<32x32xbf16>
      %cst_38 = arith.constant dense<0.000000e+00> : vector<8x32xf32>
      %84 = tpu.matmul %82, %83, %cst_38 {dimension_numbers = #tpu.dot_dimension_numbers<[1], [0], [0], [1], [0, 0, 1, 1], [], []>} : vector<8x32xbf16>, vector<32x32xbf16>, vector<8x32xf32> -> vector<8x32xf32>
      %85 = arith.negf %84 : vector<8x32xf32>
      %86 = math.exp %85 : vector<8x32xf32>
      %cst_39 = arith.constant 1.000000e+00 : f32
      %87 = vector.broadcast %cst_39 : f32 to vector<8x32xf32>
      %88 = arith.addf %87, %86 : vector<8x32xf32>
      %89 = arith.divf %87, %88 : vector<8x32xf32>
      %90 = arith.mulf %84, %89 : vector<8x32xf32>
      %c0_40 = arith.constant 0 : index
      %c0_41 = arith.constant 0 : index
      %91 = vector.load %arg6[%c0_40, %c0_41] : memref<8x32xf32, #tpu.memory_space<vmem>>, vector<8x32xf32>
      %92 = arith.addf %90, %91 : vector<8x32xf32>
      %93 = vector.extract_strided_slice %80 {offsets = [0, 32], sizes = [8, 96], strides = [1, 1]} : vector<8x128xf32> to vector<8x96xf32>
      %c0_42 = arith.constant 0 : index
      %c0_43 = arith.constant 0 : index
      %94 = vector.load %arg7[%c0_42, %c0_43] : memref<8x96xf32, #tpu.memory_space<vmem>>, vector<8x96xf32>
      %95 = arith.addf %93, %94 : vector<8x96xf32>
      %96 = tpu.concatenate %92, %95 in 1 : vector<8x32xf32>, vector<8x96xf32> -> vector<8x128xf32>
      %c0_44 = arith.constant 0 : index
      %c0_45 = arith.constant 0 : index
      %97 = vector.load %arg15[%c0_44, %c0_45] : memref<8x128xf32, #tpu.memory_space<vmem>>, vector<8x128xf32>
      tpu.vector_store %arg15[%c0_44, %c0_45], %96 {strides = array<i32>} : memref<8x128xf32, #tpu.memory_space<vmem>>, vector<8x128xf32>,
    } else {
    }
    return
  }
  func.func @transform_0(%arg0: i32) -> (i32, i32) {
    %c0_i32 = arith.constant 0 : i32
    %c0_i32_0 = arith.constant 0 : i32
    return %arg0, %c0_i32 : i32, i32
  }
  func.func @transform_1(%arg0: i32) -> (i32, i32) {
    %c0_i32 = arith.constant 0 : i32
    %c0_i32_0 = arith.constant 0 : i32
    return %arg0, %c0_i32 : i32, i32
  }
  func.func @transform_2(%arg0: i32) -> (i32, i32) {
    %c0_i32 = arith.constant 0 : i32
    %c0_i32_0 = arith.constant 0 : i32
    return %arg0, %c0_i32 : i32, i32
  }
  func.func @transform_3(%arg0: i32) -> (i32, i32) {
    %c0_i32 = arith.constant 0 : i32
    %c0_i32_0 = arith.constant 0 : i32
    return %arg0, %c0_i32 : i32, i32
  }
  func.func @transform_4(%arg0: i32) -> (i32, i32) {
    %c0_i32 = arith.constant 0 : i32
    %c0_i32_0 = arith.constant 0 : i32
    return %c0_i32, %arg0 : i32, i32
  }
  func.func @transform_5(%arg0: i32) -> (i32, i32) {
    %c0_i32 = arith.constant 0 : i32
    %c0_i32_0 = arith.constant 0 : i32
    %c0_i32_1 = arith.constant 0 : i32
    return %c0_i32, %c0_i32_0 : i32, i32
  }
  func.func @transform_6(%arg0: i32) -> (i32, i32) {
    %c0_i32 = arith.constant 0 : i32
    %c0_i32_0 = arith.constant 0 : i32
    %c0_i32_1 = arith.constant 0 : i32
    return %c0_i32, %c0_i32_0 : i32, i32
  }
  func.func @transform_7(%arg0: i32) -> (i32, i32) {
    %c0_i32 = arith.constant 0 : i32
    %c0_i32_0 = arith.constant 0 : i32
    %c0_i32_1 = arith.constant 0 : i32
    return %c0_i32, %c0_i32_0 : i32, i32
  }
  func.func @transform_8(%arg0: i32) -> (i32, i32) {
    %c0_i32 = arith.constant 0 : i32
    %c0_i32_0 = arith.constant 0 : i32
    %c0_i32_1 = arith.constant 0 : i32
    return %c0_i32, %c0_i32_0 : i32, i32
  }
  func.func @transform_9(%arg0: i32) -> (i32, i32) {
    %c0_i32 = arith.constant 0 : i32
    %c0_i32_0 = arith.constant 0 : i32
    %c0_i32_1 = arith.constant 0 : i32
    return %c0_i32, %c0_i32_0 : i32, i32
  }
  func.func @transform_10(%arg0: i32) -> (i32, i32) {
    %c0_i32 = arith.constant 0 : i32
    %c0_i32_0 = arith.constant 0 : i32
    %c0_i32_1 = arith.constant 0 : i32
    return %c0_i32, %c0_i32_0 : i32, i32
  }
  func.func @transform_11(%arg0: i32) -> (i32, i32) {
    %c0_i32 = arith.constant 0 : i32
    %c0_i32_0 = arith.constant 0 : i32
    %c0_i32_1 = arith.constant 0 : i32
    return %c0_i32, %c0_i32_0 : i32, i32
  }
  func.func @transform_12(%arg0: i32) -> (i32, i32) {
    %c0_i32 = arith.constant 0 : i32
    %c0_i32_0 = arith.constant 0 : i32
    %c0_i32_1 = arith.constant 0 : i32
    return %c0_i32, %c0_i32_0 : i32, i32
  }
  func.func @transform_13(%arg0: i32) -> (i32, i32) {
    %c0_i32 = arith.constant 0 : i32
    %c0_i32_0 = arith.constant 0 : i32
    %c0_i32_1 = arith.constant 0 : i32
    return %c0_i32, %c0_i32_0 : i32, i32
  }
  func.func @transform_14(%arg0: i32) -> (i32, i32) {
    %c0_i32 = arith.constant 0 : i32
    %c0_i32_0 = arith.constant 0 : i32
    %c0_i32_1 = arith.constant 0 : i32
    return %c0_i32, %c0_i32_0 : i32, i32
  }
}

</mosaic_0001>

<llo_original>
// kernel: transition_down_forward.3
$region0: #{transition_down_forward.3}
  #allocation0 [shape = 'u32[]', space=smem, size = 0x4, offset = 0x4, fixed_abs, tag = 'smem constant byte address 0x4 - core index']
  #allocation1 [shape = 'u32[144,128]{1,0:T(1,128)}', space=vmem, size = 0x12000, scoped, tag = 'internal scratch']
  #allocation2 [shape = 'f32[8,128]{1,0:T(8,128)}', space=vmem, size = 0x1000, scoped, tag = 'scratch operand']
  %s0 = inlined_call_operand.vmem [shape: bf16[32,64], index: 0, kind: input, shape index: {}]
  %s1 = inlined_call_operand.vmem [shape: f32[32,1], index: 1, kind: input, shape index: {}]
  %s2 = inlined_call_operand.vmem [shape: f32[32,288], index: 2, kind: input, shape index: {}]
  %s3 = inlined_call_operand.vmem [shape: f32[32,96], index: 3, kind: input, shape index: {}]
  %s4 = inlined_call_operand.vmem [shape: bf16[8,32], index: 4, kind: input, shape index: {}]
  %s5 = inlined_call_operand.vmem [shape: f32[8,32], index: 5, kind: input, shape index: {}]
  %s6 = inlined_call_operand.vmem [shape: f32[8,96], index: 6, kind: input, shape index: {}]
  %s7 = inlined_call_operand.vmem [shape: f32[1,16], index: 7, kind: input, shape index: {}]
  %s8 = inlined_call_operand.vmem [shape: f32[1,32], index: 8, kind: input, shape index: {}]
  %s9 = inlined_call_operand.vmem [shape: bf16[64,32], index: 9, kind: input, shape index: {}]
  %s10 = inlined_call_operand.vmem [shape: bf16[16,32], index: 10, kind: input, shape index: {}]
  %s11 = inlined_call_operand.vmem [shape: bf16[16,32], index: 11, kind: input, shape index: {}]
  %s12 = inlined_call_operand.vmem [shape: bf16[32,32], index: 12, kind: input, shape index: {}]
  %s13 = inlined_call_operand.vmem [shape: bf16[32,32], index: 13, kind: input, shape index: {}]
  %s14 = inlined_call_operand.vmem [shape: f32[8,128], index: 14, kind: output, shape index: {}]
  %s15 = sld [smem:[#allocation0]]
  $region74: #{transition_down_forward.3} parent=0
    _
  %s17 = ssub.s32 1, %s15
  %s18 = scalar_select 0, %s17, %s15
  // Predicated region
  $region2: #{transition_down_forward.3} parent=0 // pred_check
    _
  $region3: #{transition_down_forward.3} parent=0 // pred_check_branch
    %20 = sbr.rel (0) target = $region5
  $region4: #{transition_down_forward.3} parent=0 // pred_region
    _
  $region5: #{transition_down_forward.3} parent=0 // pred_fallthru
    _
  // Predicated region
  $region6: #{transition_down_forward.3} parent=0 // pred_check
    _
  $region7: #{transition_down_forward.3} parent=0 // pred_check_branch
    %22 = sbr.rel (0) target = $region9
  $region8: #{transition_down_forward.3} parent=0 // pred_region
    _
  $region9: #{transition_down_forward.3} parent=0 // pred_fallthru
    _
  // Predicated region
  $region10: #{transition_down_forward.3} parent=0 // pred_check
    _
  $region11: #{transition_down_forward.3} parent=0 // pred_check_branch
    %24 = sbr.rel (0) target = $region13
  $region12: #{transition_down_forward.3} parent=0 // pred_region
    _
  $region13: #{transition_down_forward.3} parent=0 // pred_fallthru
    _
  // Predicated region
  $region14: #{transition_down_forward.3} parent=0 // pred_check
    _
  $region15: #{transition_down_forward.3} parent=0 // pred_check_branch
    %26 = sbr.rel (0) target = $region17
  $region16: #{transition_down_forward.3} parent=0 // pred_region
    _
  $region17: #{transition_down_forward.3} parent=0 // pred_fallthru
    _
  // Predicated region
  $region18: #{transition_down_forward.3} parent=0 // pred_check
    _
  $region19: #{transition_down_forward.3} parent=0 // pred_check_branch
    %28 = sbr.rel (0) target = $region21
  $region20: #{transition_down_forward.3} parent=0 // pred_region
    _
  $region21: #{transition_down_forward.3} parent=0 // pred_fallthru
    _
  // Predicated region
  $region22: #{transition_down_forward.3} parent=0 // pred_check
    _
  $region23: #{transition_down_forward.3} parent=0 // pred_check_branch
    %30 = sbr.rel (0) target = $region25
  $region24: #{transition_down_forward.3} parent=0 // pred_region
    _
  $region25: #{transition_down_forward.3} parent=0 // pred_fallthru
    _
  // Predicated region
  $region26: #{transition_down_forward.3} parent=0 // pred_check
    _
  $region27: #{transition_down_forward.3} parent=0 // pred_check_branch
    %32 = sbr.rel (0) target = $region29
  $region28: #{transition_down_forward.3} parent=0 // pred_region
    _
  $region29: #{transition_down_forward.3} parent=0 // pred_fallthru
    _
  // Predicated region
  $region30: #{transition_down_forward.3} parent=0 // pred_check
    _
  $region31: #{transition_down_forward.3} parent=0 // pred_check_branch
    %34 = sbr.rel (0) target = $region33
  $region32: #{transition_down_forward.3} parent=0 // pred_region
    _
  $region33: #{transition_down_forward.3} parent=0 // pred_fallthru
    _
  // Predicated region
  $region34: #{transition_down_forward.3} parent=0 // pred_check
    _
  $region35: #{transition_down_forward.3} parent=0 // pred_check_branch
    %36 = sbr.rel (0) target = $region37
  $region36: #{transition_down_forward.3} parent=0 // pred_region
    _
  $region37: #{transition_down_forward.3} parent=0 // pred_fallthru
    _
  // Predicated region
  $region38: #{transition_down_forward.3} parent=0 // pred_check
    _
  $region39: #{transition_down_forward.3} parent=0 // pred_check_branch
    %38 = sbr.rel (0) target = $region41
  $region40: #{transition_down_forward.3} parent=0 // pred_region
    _
  $region41: #{transition_down_forward.3} parent=0 // pred_fallthru
    _
  // Predicated region
  $region42: #{transition_down_forward.3} parent=0 // pred_check
    _
  $region43: #{transition_down_forward.3} parent=0 // pred_check_branch
    %40 = sbr.rel (0) target = $region45
  $region44: #{transition_down_forward.3} parent=0 // pred_region
    _
  $region45: #{transition_down_forward.3} parent=0 // pred_fallthru
    _
  // Predicated region
  $region46: #{transition_down_forward.3} parent=0 // pred_check
    _
  $region47: #{transition_down_forward.3} parent=0 // pred_check_branch
    %42 = sbr.rel (0) target = $region49
  $region48: #{transition_down_forward.3} parent=0 // pred_region
    _
  $region49: #{transition_down_forward.3} parent=0 // pred_fallthru
    _
  // Predicated region
  $region50: #{transition_down_forward.3} parent=0 // pred_check
    _
  $region51: #{transition_down_forward.3} parent=0 // pred_check_branch
    %44 = sbr.rel (0) target = $region53
  $region52: #{transition_down_forward.3} parent=0 // pred_region
    _
  $region53: #{transition_down_forward.3} parent=0 // pred_fallthru
    _
  // Predicated region
  $region54: #{transition_down_forward.3} parent=0 // pred_check
    _
  $region55: #{transition_down_forward.3} parent=0 // pred_check_branch
    %46 = sbr.rel (0) target = $region57
  $region56: #{transition_down_forward.3} parent=0 // pred_region
    _
  $region57: #{transition_down_forward.3} parent=0 // pred_fallthru
    _
  %p48 = scmp.eq.s32.totalorder 0, 0
  // Predicated region
  $region58: #{transition_down_forward.3} parent=0 // pred_check
    %p49 = pneg %p48
  $region59: #{transition_down_forward.3} parent=0 // pred_check_branch
    %51 = sbr.rel (%p49) target = $region61
  $region60: #{transition_down_forward.3} parent=0 // pred_region
    %52 = vst [vmem:[#allocation2] sm:$0xff] 0.0
  $region61: #{transition_down_forward.3} parent=0 // pred_fallthru
    _
  %v53 = vld [vmem:[%s1] sm:$0xff]
  %v54 = vld [vmem:[%s1 + $0x8] sm:$0xff]
  %v55 = vld [vmem:[%s1 + $0x10] sm:$0xff]
  %v56 = vld [vmem:[%s1 + $0x18] sm:$0xff]
  %v57 = vld [vmem:[%s7] sm:$0x1]
  %59 = vset.pattern.permute.xlu0 0
  %60 = vperm.xlu0 %59, %v53
  %v61 = vpop.permute.xlu0 %60
  %64 = vset.pattern.permute.xlu0 0
  %65 = vperm.xlu0 %64, %v54
  %v66 = vpop.permute.xlu0 %65
  %69 = vset.pattern.permute.xlu0 0
  %70 = vperm.xlu0 %69, %v55
  %v71 = vpop.permute.xlu0 %70
  %74 = vset.pattern.permute.xlu0 0
  %75 = vperm.xlu0 %74, %v56
  %v76 = vpop.permute.xlu0 %75
  %v79 = vlaneseq
  %v80 = vshrl.u32 %v79, 7
  %v81 = vsub.s32 0, %v80
  %v82 = vrot.slane %v57, %v81
  %v84 = vmul.f32 %v61, %v82
  %v85 = vmul.f32 %v66, %v82
  %v86 = vmul.f32 %v71, %v82
  %v87 = vmul.f32 %v76, %v82
  %v88 = vand.u32 2147483647, %v84
  %vm89 = vcmp.le.f32.partialorder %v88, 0.7853982
  %vm90 = vcmp.lt.s32.totalorder %v84, 0
  %v91 = vand.u32 %v84, 2139095040
  %v92 = vshrl.u32 %v91, 23
  %v93 = vsub.s32 %v92, 127
  %v94 = vand.u32 2147483647, %v84
  %v95 = vand.u32 %v94, 8388607
  %v96 = vor.u32 %v95, 8388608
  %v97 = vsub.s32 0, %v96
  %v98 = vadd.s32 %v93, 1
  %vm99 = vcmp.gt.s32.totalorder %v98, 0
  %v100 = vsel %vm99, %v98, 0
  %v101 = vshrl.u32 %v100, 5
  %v102 = vand.u32 %v100, 31
  %v103 = vsub.s32 32, %v102
  %v104 = vshrl.u32 683565275, %v103
  %v105 = vshll.u32 683565275, %v102
  %v106 = vshrl.u32 2475754826, %v103
  %v107 = vor.u32 %v105, %v106
  %v108 = vshll.u32 2475754826, %v102
  %v109 = vshrl.u32 2131351028, %v103
  %v110 = vor.u32 %v108, %v109
  %v111 = vshll.u32 2131351028, %v102
  %v112 = vshrl.u32 2102212464, %v103
  %v113 = vor.u32 %v111, %v112
  %v114 = vshll.u32 2102212464, %v102
  %v115 = vshrl.u32 920167782, %v103
  %v116 = vor.u32 %v114, %v115
  %v117 = vshll.u32 920167782, %v102
  %v118 = vshrl.u32 1326507024, %v103
  %v119 = vor.u32 %v117, %v118
  %vm120 = vcmp.lt.s32.totalorder %v101, 1
  %vm121 = vcmp.lt.s32.totalorder %v101, 2
  %vm122 = vcmp.lt.s32.totalorder %v101, 3
  %vm123 = vcmp.lt.s32.totalorder %v101, 4
  %v124 = vsel %vm120, %v104, %v107
  %v125 = vsel %vm123, %v113, 2102212464
  %v126 = vsel %vm122, %v110, %v125
  %v127 = vsel %vm121, %v124, %v126
  %v128 = vsel %vm120, %v107, %v110
  %v129 = vsel %vm123, %v116, 920167782
  %v130 = vsel %vm122, %v113, %v129
  %v131 = vsel %vm121, %v128, %v130
  %v132 = vsel %vm120, %v110, %v113
  %v133 = vsel %vm123, %v119, 1326507024
  %v134 = vsel %vm122, %v116, %v133
  %v135 = vsel %vm121, %v132, %v134
  %v136 = vshll.u32 %v96, 8
  %v137 = vmul.u32.u64.compose %v136, %v135
  %v138 = vextract.low.u32 %v137
  %v139 = vextract.high.u32 %v137
  %v140 = vmul.u32.u64.compose %v136, %v131
  %v141 = vextract.low.u32 %v140
  %v142 = vextract.high.u32 %v140
  %v143 = vmul.u32 %v136, %v127
  %v144 = vadd.s32 %v139, %v141
  %vm145 = vc.u32 %v139, %v141
  %v146 = vadd.s32 %v142, 1
  %v147 = vsel %vm145, %v146, %v142
  %v148 = vadd.s32 %v143, %v147
  %v149 = vadd.s32 %v148, 536870912
  %v150 = vshrl.u32 %v149, 30
  %v151 = vshll.u32 %v150, 30
  %v152 = vsub.s32 %v148, %v151
  %vm153 = vcmp.lt.s32.totalorder %v152, 0
  %v154 = vsub.s32 0, %v152
  %v155 = vsel %vm153, %v154, %v152
  %v156 = vclz %v155
  %v157 = vsub.s32 %v156, 2
  %vm158 = vcmp.gt.s32.totalorder 0, %v157
  %v159 = vsel %vm158, 0, %v157
  %v160 = vsub.s32 32, %v159
  %v161 = vshll.u32 %v152, %v159
  %v162 = vshrl.u32 %v144, %v160
  %v163 = vor.u32 %v161, %v162
  %v164 = vsub.s32 4294967266, %v159
  %v165 = vadd.s32 %v164, 127
  %v166 = vshll.u32 %v165, 23
  %v167 = vor.u32 4788187, %v166
  %v168 = vand.u32 2147483647, %v167
  %v170 = vcvt.s32.f32 %v163
  %v171 = vmul.f32 %v170, %v168
  %v172 = vxor.u32 %v171, 2147483648
  %v173 = vsel %vm90, %v172, %v171
  %v174 = vsub.s32 4, %v150
  %v175 = vsel %vm90, %v174, %v150
  %v176 = vsel %vm89, %v84, %v173
  %v177 = vsel %vm89, 0, %v175
  %v178 = vcosq.f32.pop %v176
  %v179 = vsinq.f32.pop %v176
  %vm180 = vweird.f32 %v84
  %v181 = vadd.s32 %v177, 3
  %v182 = vand.u32 %v181, 3
  %vm183 = vcmp.lt.s32.totalorder %v182, 2
  %vm184 = vcmp.eq.s32.totalorder %v182, 0
  %v185 = vxor.u32 %v179, 2147483648
  %v186 = vsel %vm184, %v178, %v185
  %vm187 = vcmp.eq.s32.totalorder %v182, 2
  %v188 = vxor.u32 %v178, 2147483648
  %v189 = vsel %vm187, %v188, %v179
  %v190 = vsel %vm183, %v186, %v189
  %v191 = vsel %vm180, nan, %v190
  %v192 = vand.u32 2147483647, %v85
  %vm193 = vcmp.le.f32.partialorder %v192, 0.7853982
  %vm194 = vcmp.lt.s32.totalorder %v85, 0
  %v195 = vand.u32 %v85, 2139095040
  %v196 = vshrl.u32 %v195, 23
  %v197 = vsub.s32 %v196, 127
  %v198 = vand.u32 2147483647, %v85
  %v199 = vand.u32 %v198, 8388607
  %v200 = vor.u32 %v199, 8388608
  %v201 = vsub.s32 0, %v200
  %v202 = vadd.s32 %v197, 1
  %vm203 = vcmp.gt.s32.totalorder %v202, 0
  %v204 = vsel %vm203, %v202, 0
  %v205 = vshrl.u32 %v204, 5
  %v206 = vand.u32 %v204, 31
  %v207 = vsub.s32 32, %v206
  %v208 = vshrl.u32 683565275, %v207
  %v209 = vshll.u32 683565275, %v206
  %v210 = vshrl.u32 2475754826, %v207
  %v211 = vor.u32 %v209, %v210
  %v212 = vshll.u32 2475754826, %v206
  %v213 = vshrl.u32 2131351028, %v207
  %v214 = vor.u32 %v212, %v213
  %v215 = vshll.u32 2131351028, %v206
  %v216 = vshrl.u32 2102212464, %v207
  %v217 = vor.u32 %v215, %v216
  %v218 = vshll.u32 2102212464, %v206
  %v219 = vshrl.u32 920167782, %v207
  %v220 = vor.u32 %v218, %v219
  %v221 = vshll.u32 920167782, %v206
  %v222 = vshrl.u32 1326507024, %v207
  %v223 = vor.u32 %v221, %v222
  %vm224 = vcmp.lt.s32.totalorder %v205, 1
  %vm225 = vcmp.lt.s32.totalorder %v205, 2
  %vm226 = vcmp.lt.s32.totalorder %v205, 3
  %vm227 = vcmp.lt.s32.totalorder %v205, 4
  %v228 = vsel %vm224, %v208, %v211
  %v229 = vsel %vm227, %v217, 2102212464
  %v230 = vsel %vm226, %v214, %v229
  %v231 = vsel %vm225, %v228, %v230
  %v232 = vsel %vm224, %v211, %v214
  %v233 = vsel %vm227, %v220, 920167782
  %v234 = vsel %vm226, %v217, %v233
  %v235 = vsel %vm225, %v232, %v234
  %v236 = vsel %vm224, %v214, %v217
  %v237 = vsel %vm227, %v223, 1326507024
  %v238 = vsel %vm226, %v220, %v237
  %v239 = vsel %vm225, %v236, %v238
  %v240 = vshll.u32 %v200, 8
  %v241 = vmul.u32.u64.compose %v240, %v239
  %v242 = vextract.low.u32 %v241
  %v243 = vextract.high.u32 %v241
  %v244 = vmul.u32.u64.compose %v240, %v235
  %v245 = vextract.low.u32 %v244
  %v246 = vextract.high.u32 %v244
  %v247 = vmul.u32 %v240, %v231
  %v248 = vadd.s32 %v243, %v245
  %vm249 = vc.u32 %v243, %v245
  %v250 = vadd.s32 %v246, 1
  %v251 = vsel %vm249, %v250, %v246
  %v252 = vadd.s32 %v247, %v251
  %v253 = vadd.s32 %v252, 536870912
  %v254 = vshrl.u32 %v253, 30
  %v255 = vshll.u32 %v254, 30
  %v256 = vsub.s32 %v252, %v255
  %vm257 = vcmp.lt.s32.totalorder %v256, 0
  %v258 = vsub.s32 0, %v256
  %v259 = vsel %vm257, %v258, %v256
  %v260 = vclz %v259
  %v261 = vsub.s32 %v260, 2
  %vm262 = vcmp.gt.s32.totalorder 0, %v261
  %v263 = vsel %vm262, 0, %v261
  %v264 = vsub.s32 32, %v263
  %v265 = vshll.u32 %v256, %v263
  %v266 = vshrl.u32 %v248, %v264
  %v267 = vor.u32 %v265, %v266
  %v268 = vsub.s32 4294967266, %v263
  %v269 = vadd.s32 %v268, 127
  %v270 = vshll.u32 %v269, 23
  %v271 = vor.u32 4788187, %v270
  %v272 = vand.u32 2147483647, %v271
  %v274 = vcvt.s32.f32 %v267
  %v275 = vmul.f32 %v274, %v272
  %v276 = vxor.u32 %v275, 2147483648
  %v277 = vsel %vm194, %v276, %v275
  %v278 = vsub.s32 4, %v254
  %v279 = vsel %vm194, %v278, %v254
  %v280 = vsel %vm193, %v85, %v277
  %v281 = vsel %vm193, 0, %v279
  %v282 = vcosq.f32.pop %v280
  %v283 = vsinq.f32.pop %v280
  %vm284 = vweird.f32 %v85
  %v285 = vadd.s32 %v281, 3
  %v286 = vand.u32 %v285, 3
  %vm287 = vcmp.lt.s32.totalorder %v286, 2
  %vm288 = vcmp.eq.s32.totalorder %v286, 0
  %v289 = vxor.u32 %v283, 2147483648
  %v290 = vsel %vm288, %v282, %v289
  %vm291 = vcmp.eq.s32.totalorder %v286, 2
  %v292 = vxor.u32 %v282, 2147483648
  %v293 = vsel %vm291, %v292, %v283
  %v294 = vsel %vm287, %v290, %v293
  %v295 = vsel %vm284, nan, %v294
  %v296 = vand.u32 2147483647, %v86
  %vm297 = vcmp.le.f32.partialorder %v296, 0.7853982
  %vm298 = vcmp.lt.s32.totalorder %v86, 0
  %v299 = vand.u32 %v86, 2139095040
  %v300 = vshrl.u32 %v299, 23
  %v301 = vsub.s32 %v300, 127
  %v302 = vand.u32 2147483647, %v86
  %v303 = vand.u32 %v302, 8388607
  %v304 = vor.u32 %v303, 8388608
  %v305 = vsub.s32 0, %v304
  %v306 = vadd.s32 %v301, 1
  %vm307 = vcmp.gt.s32.totalorder %v306, 0
  %v308 = vsel %vm307, %v306, 0
  %v309 = vshrl.u32 %v308, 5
  %v310 = vand.u32 %v308, 31
  %v311 = vsub.s32 32, %v310
  %v312 = vshrl.u32 683565275, %v311
  %v313 = vshll.u32 683565275, %v310
  %v314 = vshrl.u32 2475754826, %v311
  %v315 = vor.u32 %v313, %v314
  %v316 = vshll.u32 2475754826, %v310
  %v317 = vshrl.u32 2131351028, %v311
  %v318 = vor.u32 %v316, %v317
  %v319 = vshll.u32 2131351028, %v310
  %v320 = vshrl.u32 2102212464, %v311
  %v321 = vor.u32 %v319, %v320
  %v322 = vshll.u32 2102212464, %v310
  %v323 = vshrl.u32 920167782, %v311
  %v324 = vor.u32 %v322, %v323
  %v325 = vshll.u32 920167782, %v310
  %v326 = vshrl.u32 1326507024, %v311
  %v327 = vor.u32 %v325, %v326
  %vm328 = vcmp.lt.s32.totalorder %v309, 1
  %vm329 = vcmp.lt.s32.totalorder %v309, 2
  %vm330 = vcmp.lt.s32.totalorder %v309, 3
  %vm331 = vcmp.lt.s32.totalorder %v309, 4
  %v332 = vsel %vm328, %v312, %v315
  %v333 = vsel %vm331, %v321, 2102212464
  %v334 = vsel %vm330, %v318, %v333
  %v335 = vsel %vm329, %v332, %v334
  %v336 = vsel %vm328, %v315, %v318
  %v337 = vsel %vm331, %v324, 920167782
  %v338 = vsel %vm330, %v321, %v337
  %v339 = vsel %vm329, %v336, %v338
  %v340 = vsel %vm328, %v318, %v321
  %v341 = vsel %vm331, %v327, 1326507024
  %v342 = vsel %vm330, %v324, %v341
  %v343 = vsel %vm329, %v340, %v342
  %v344 = vshll.u32 %v304, 8
  %v345 = vmul.u32.u64.compose %v344, %v343
  %v346 = vextract.low.u32 %v345
  %v347 = vextract.high.u32 %v345
  %v348 = vmul.u32.u64.compose %v344, %v339
  %v349 = vextract.low.u32 %v348
  %v350 = vextract.high.u32 %v348
  %v351 = vmul.u32 %v344, %v335
  %v352 = vadd.s32 %v347, %v349
  %vm353 = vc.u32 %v347, %v349
  %v354 = vadd.s32 %v350, 1
  %v355 = vsel %vm353, %v354, %v350
  %v356 = vadd.s32 %v351, %v355
  %v357 = vadd.s32 %v356, 536870912
  %v358 = vshrl.u32 %v357, 30
  %v359 = vshll.u32 %v358, 30
  %v360 = vsub.s32 %v356, %v359
  %vm361 = vcmp.lt.s32.totalorder %v360, 0
  %v362 = vsub.s32 0, %v360
  %v363 = vsel %vm361, %v362, %v360
  %v364 = vclz %v363
  %v365 = vsub.s32 %v364, 2
  %vm366 = vcmp.gt.s32.totalorder 0, %v365
  %v367 = vsel %vm366, 0, %v365
  %v368 = vsub.s32 32, %v367
  %v369 = vshll.u32 %v360, %v367
  %v370 = vshrl.u32 %v352, %v368
  %v371 = vor.u32 %v369, %v370
  %v372 = vsub.s32 4294967266, %v367
  %v373 = vadd.s32 %v372, 127
  %v374 = vshll.u32 %v373, 23
  %v375 = vor.u32 4788187, %v374
  %v376 = vand.u32 2147483647, %v375
  %v378 = vcvt.s32.f32 %v371
  %v379 = vmul.f32 %v378, %v376
  %v380 = vxor.u32 %v379, 2147483648
  %v381 = vsel %vm298, %v380, %v379
  %v382 = vsub.s32 4, %v358
  %v383 = vsel %vm298, %v382, %v358
  %v384 = vsel %vm297, %v86, %v381
  %v385 = vsel %vm297, 0, %v383
  %v386 = vcosq.f32.pop %v384
  %v387 = vsinq.f32.pop %v384
  %vm388 = vweird.f32 %v86
  %v389 = vadd.s32 %v385, 3
  %v390 = vand.u32 %v389, 3
  %vm391 = vcmp.lt.s32.totalorder %v390, 2
  %vm392 = vcmp.eq.s32.totalorder %v390, 0
  %v393 = vxor.u32 %v387, 2147483648
  %v394 = vsel %vm392, %v386, %v393
  %vm395 = vcmp.eq.s32.totalorder %v390, 2
  %v396 = vxor.u32 %v386, 2147483648
  %v397 = vsel %vm395, %v396, %v387
  %v398 = vsel %vm391, %v394, %v397
  %v399 = vsel %vm388, nan, %v398
  %v400 = vand.u32 2147483647, %v87
  %vm401 = vcmp.le.f32.partialorder %v400, 0.7853982
  %vm402 = vcmp.lt.s32.totalorder %v87, 0
  %v403 = vand.u32 %v87, 2139095040
  %v404 = vshrl.u32 %v403, 23
  %v405 = vsub.s32 %v404, 127
  %v406 = vand.u32 2147483647, %v87
  %v407 = vand.u32 %v406, 8388607
  %v408 = vor.u32 %v407, 8388608
  %v409 = vsub.s32 0, %v408
  %v410 = vadd.s32 %v405, 1
  %vm411 = vcmp.gt.s32.totalorder %v410, 0
  %v412 = vsel %vm411, %v410, 0
  %v413 = vshrl.u32 %v412, 5
  %v414 = vand.u32 %v412, 31
  %v415 = vsub.s32 32, %v414
  %v416 = vshrl.u32 683565275, %v415
  %v417 = vshll.u32 683565275, %v414
  %v418 = vshrl.u32 2475754826, %v415
  %v419 = vor.u32 %v417, %v418
  %v420 = vshll.u32 2475754826, %v414
  %v421 = vshrl.u32 2131351028, %v415
  %v422 = vor.u32 %v420, %v421
  %v423 = vshll.u32 2131351028, %v414
  %v424 = vshrl.u32 2102212464, %v415
  %v425 = vor.u32 %v423, %v424
  %v426 = vshll.u32 2102212464, %v414
  %v427 = vshrl.u32 920167782, %v415
  %v428 = vor.u32 %v426, %v427
  %v429 = vshll.u32 920167782, %v414
  %v430 = vshrl.u32 1326507024, %v415
  %v431 = vor.u32 %v429, %v430
  %vm432 = vcmp.lt.s32.totalorder %v413, 1
  %vm433 = vcmp.lt.s32.totalorder %v413, 2
  %vm434 = vcmp.lt.s32.totalorder %v413, 3
  %vm435 = vcmp.lt.s32.totalorder %v413, 4
  %v436 = vsel %vm432, %v416, %v419
  %v437 = vsel %vm435, %v425, 2102212464
  %v438 = vsel %vm434, %v422, %v437
  %v439 = vsel %vm433, %v436, %v438
  %v440 = vsel %vm432, %v419, %v422
  %v441 = vsel %vm435, %v428, 920167782
  %v442 = vsel %vm434, %v425, %v441
  %v443 = vsel %vm433, %v440, %v442
  %v444 = vsel %vm432, %v422, %v425
  %v445 = vsel %vm435, %v431, 1326507024
  %v446 = vsel %vm434, %v428, %v445
  %v447 = vsel %vm433, %v444, %v446
  %v448 = vshll.u32 %v408, 8
  %v449 = vmul.u32.u64.compose %v448, %v447
  %v450 = vextract.low.u32 %v449
  %v451 = vextract.high.u32 %v449
  %v452 = vmul.u32.u64.compose %v448, %v443
  %v453 = vextract.low.u32 %v452
  %v454 = vextract.high.u32 %v452
  %v455 = vmul.u32 %v448, %v439
  %v456 = vadd.s32 %v451, %v453
  %vm457 = vc.u32 %v451, %v453
  %v458 = vadd.s32 %v454, 1
  %v459 = vsel %vm457, %v458, %v454
  %v460 = vadd.s32 %v455, %v459
  %v461 = vadd.s32 %v460, 536870912
  %v462 = vshrl.u32 %v461, 30
  %v463 = vshll.u32 %v462, 30
  %v464 = vsub.s32 %v460, %v463
  %vm465 = vcmp.lt.s32.totalorder %v464, 0
  %v466 = vsub.s32 0, %v464
  %v467 = vsel %vm465, %v466, %v464
  %v468 = vclz %v467
  %v469 = vsub.s32 %v468, 2
  %vm470 = vcmp.gt.s32.totalorder 0, %v469
  %v471 = vsel %vm470, 0, %v469
  %v472 = vsub.s32 32, %v471
  %v473 = vshll.u32 %v464, %v471
  %v474 = vshrl.u32 %v456, %v472
  %v475 = vor.u32 %v473, %v474
  %v476 = vsub.s32 4294967266, %v471
  %v477 = vadd.s32 %v476, 127
  %v478 = vshll.u32 %v477, 23
  %v479 = vor.u32 4788187, %v478
  %v480 = vand.u32 2147483647, %v479
  %v482 = vcvt.s32.f32 %v475
  %v483 = vmul.f32 %v482, %v480
  %v484 = vxor.u32 %v483, 2147483648
  %v485 = vsel %vm402, %v484, %v483
  %v486 = vsub.s32 4, %v462
  %v487 = vsel %vm402, %v486, %v462
  %v488 = vsel %vm401, %v87, %v485
  %v489 = vsel %vm401, 0, %v487
  %v490 = vcosq.f32.pop %v488
  %v491 = vsinq.f32.pop %v488
  %vm492 = vweird.f32 %v87
  %v493 = vadd.s32 %v489, 3
  %v494 = vand.u32 %v493, 3
  %vm495 = vcmp.lt.s32.totalorder %v494, 2
  %vm496 = vcmp.eq.s32.totalorder %v494, 0
  %v497 = vxor.u32 %v491, 2147483648
  %v498 = vsel %vm496, %v490, %v497
  %vm499 = vcmp.eq.s32.totalorder %v494, 2
  %v500 = vxor.u32 %v490, 2147483648
  %v501 = vsel %vm499, %v500, %v491
  %v502 = vsel %vm495, %v498, %v501
  %v503 = vsel %vm492, nan, %v502
  %v504 = vpack.c.bf16 %v295, %v191
  %v505 = vpack.c.bf16 %v503, %v399
  %v506 = vand.u32 2147483647, %v84
  %vm507 = vcmp.le.f32.partialorder %v506, 0.7853982
  %vm508 = vcmp.lt.s32.totalorder %v84, 0
  %v509 = vand.u32 %v84, 2139095040
  %v510 = vshrl.u32 %v509, 23
  %v511 = vsub.s32 %v510, 127
  %v512 = vand.u32 2147483647, %v84
  %v513 = vand.u32 %v512, 8388607
  %v514 = vor.u32 %v513, 8388608
  %v515 = vsub.s32 0, %v514
  %v516 = vadd.s32 %v511, 1
  %vm517 = vcmp.gt.s32.totalorder %v516, 0
  %v518 = vsel %vm517, %v516, 0
  %v519 = vshrl.u32 %v518, 5
  %v520 = vand.u32 %v518, 31
  %v521 = vsub.s32 32, %v520
  %v522 = vshrl.u32 683565275, %v521
  %v523 = vshll.u32 683565275, %v520
  %v524 = vshrl.u32 2475754826, %v521
  %v525 = vor.u32 %v523, %v524
  %v526 = vshll.u32 2475754826, %v520
  %v527 = vshrl.u32 2131351028, %v521
  %v528 = vor.u32 %v526, %v527
  %v529 = vshll.u32 2131351028, %v520
  %v530 = vshrl.u32 2102212464, %v521
  %v531 = vor.u32 %v529, %v530
  %v532 = vshll.u32 2102212464, %v520
  %v533 = vshrl.u32 920167782, %v521
  %v534 = vor.u32 %v532, %v533
  %v535 = vshll.u32 920167782, %v520
  %v536 = vshrl.u32 1326507024, %v521
  %v537 = vor.u32 %v535, %v536
  %vm538 = vcmp.lt.s32.totalorder %v519, 1
  %vm539 = vcmp.lt.s32.totalorder %v519, 2
  %vm540 = vcmp.lt.s32.totalorder %v519, 3
  %vm541 = vcmp.lt.s32.totalorder %v519, 4
  %v542 = vsel %vm538, %v522, %v525
  %v543 = vsel %vm541, %v531, 2102212464
  %v544 = vsel %vm540, %v528, %v543
  %v545 = vsel %vm539, %v542, %v544
  %v546 = vsel %vm538, %v525, %v528
  %v547 = vsel %vm541, %v534, 920167782
  %v548 = vsel %vm540, %v531, %v547
  %v549 = vsel %vm539, %v546, %v548
  %v550 = vsel %vm538, %v528, %v531
  %v551 = vsel %vm541, %v537, 1326507024
  %v552 = vsel %vm540, %v534, %v551
  %v553 = vsel %vm539, %v550, %v552
  %v554 = vshll.u32 %v514, 8
  %v555 = vmul.u32.u64.compose %v554, %v553
  %v556 = vextract.low.u32 %v555
  %v557 = vextract.high.u32 %v555
  %v558 = vmul.u32.u64.compose %v554, %v549
  %v559 = vextract.low.u32 %v558
  %v560 = vextract.high.u32 %v558
  %v561 = vmul.u32 %v554, %v545
  %v562 = vadd.s32 %v557, %v559
  %vm563 = vc.u32 %v557, %v559
  %v564 = vadd.s32 %v560, 1
  %v565 = vsel %vm563, %v564, %v560
  %v566 = vadd.s32 %v561, %v565
  %v567 = vadd.s32 %v566, 536870912
  %v568 = vshrl.u32 %v567, 30
  %v569 = vshll.u32 %v568, 30
  %v570 = vsub.s32 %v566, %v569
  %vm571 = vcmp.lt.s32.totalorder %v570, 0
  %v572 = vsub.s32 0, %v570
  %v573 = vsel %vm571, %v572, %v570
  %v574 = vclz %v573
  %v575 = vsub.s32 %v574, 2
  %vm576 = vcmp.gt.s32.totalorder 0, %v575
  %v577 = vsel %vm576, 0, %v575
  %v578 = vsub.s32 32, %v577
  %v579 = vshll.u32 %v570, %v577
  %v580 = vshrl.u32 %v562, %v578
  %v581 = vor.u32 %v579, %v580
  %v582 = vsub.s32 4294967266, %v577
  %v583 = vadd.s32 %v582, 127
  %v584 = vshll.u32 %v583, 23
  %v585 = vor.u32 4788187, %v584
  %v586 = vand.u32 2147483647, %v585
  %v588 = vcvt.s32.f32 %v581
  %v589 = vmul.f32 %v588, %v586
  %v590 = vxor.u32 %v589, 2147483648
  %v591 = vsel %vm508, %v590, %v589
  %v592 = vsub.s32 4, %v568
  %v593 = vsel %vm508, %v592, %v568
  %v594 = vsel %vm507, %v84, %v591
  %v595 = vsel %vm507, 0, %v593
  %v596 = vcosq.f32.pop %v594
  %v597 = vsinq.f32.pop %v594
  %vm598 = vweird.f32 %v84
  %v599 = vand.u32 %v595, 3
  %vm600 = vcmp.lt.s32.totalorder %v599, 2
  %vm601 = vcmp.eq.s32.totalorder %v599, 0
  %v602 = vxor.u32 %v597, 2147483648
  %v603 = vsel %vm601, %v596, %v602
  %vm604 = vcmp.eq.s32.totalorder %v599, 2
  %v605 = vxor.u32 %v596, 2147483648
  %v606 = vsel %vm604, %v605, %v597
  %v607 = vsel %vm600, %v603, %v606
  %v608 = vsel %vm598, nan, %v607
  %v609 = vand.u32 2147483647, %v85
  %vm610 = vcmp.le.f32.partialorder %v609, 0.7853982
  %vm611 = vcmp.lt.s32.totalorder %v85, 0
  %v612 = vand.u32 %v85, 2139095040
  %v613 = vshrl.u32 %v612, 23
  %v614 = vsub.s32 %v613, 127
  %v615 = vand.u32 2147483647, %v85
  %v616 = vand.u32 %v615, 8388607
  %v617 = vor.u32 %v616, 8388608
  %v618 = vsub.s32 0, %v617
  %v619 = vadd.s32 %v614, 1
  %vm620 = vcmp.gt.s32.totalorder %v619, 0
  %v621 = vsel %vm620, %v619, 0
  %v622 = vshrl.u32 %v621, 5
  %v623 = vand.u32 %v621, 31
  %v624 = vsub.s32 32, %v623
  %v625 = vshrl.u32 683565275, %v624
  %v626 = vshll.u32 683565275, %v623
  %v627 = vshrl.u32 2475754826, %v624
  %v628 = vor.u32 %v626, %v627
  %v629 = vshll.u32 2475754826, %v623
  %v630 = vshrl.u32 2131351028, %v624
  %v631 = vor.u32 %v629, %v630
  %v632 = vshll.u32 2131351028, %v623
  %v633 = vshrl.u32 2102212464, %v624
  %v634 = vor.u32 %v632, %v633
  %v635 = vshll.u32 2102212464, %v623
  %v636 = vshrl.u32 920167782, %v624
  %v637 = vor.u32 %v635, %v636
  %v638 = vshll.u32 920167782, %v623
  %v639 = vshrl.u32 1326507024, %v624
  %v640 = vor.u32 %v638, %v639
  %vm641 = vcmp.lt.s32.totalorder %v622, 1
  %vm642 = vcmp.lt.s32.totalorder %v622, 2
  %vm643 = vcmp.lt.s32.totalorder %v622, 3
  %vm644 = vcmp.lt.s32.totalorder %v622, 4
  %v645 = vsel %vm641, %v625, %v628
  %v646 = vsel %vm644, %v634, 2102212464
  %v647 = vsel %vm643, %v631, %v646
  %v648 = vsel %vm642, %v645, %v647
  %v649 = vsel %vm641, %v628, %v631
  %v650 = vsel %vm644, %v637, 920167782
  %v651 = vsel %vm643, %v634, %v650
  %v652 = vsel %vm642, %v649, %v651
  %v653 = vsel %vm641, %v631, %v634
  %v654 = vsel %vm644, %v640, 1326507024
  %v655 = vsel %vm643, %v637, %v654
  %v656 = vsel %vm642, %v653, %v655
  %v657 = vshll.u32 %v617, 8
  %v658 = vmul.u32.u64.compose %v657, %v656
  %v659 = vextract.low.u32 %v658
  %v660 = vextract.high.u32 %v658
  %v661 = vmul.u32.u64.compose %v657, %v652
  %v662 = vextract.low.u32 %v661
  %v663 = vextract.high.u32 %v661
  %v664 = vmul.u32 %v657, %v648
  %v665 = vadd.s32 %v660, %v662
  %vm666 = vc.u32 %v660, %v662
  %v667 = vadd.s32 %v663, 1
  %v668 = vsel %vm666, %v667, %v663
  %v669 = vadd.s32 %v664, %v668
  %v670 = vadd.s32 %v669, 536870912
  %v671 = vshrl.u32 %v670, 30
  %v672 = vshll.u32 %v671, 30
  %v673 = vsub.s32 %v669, %v672
  %vm674 = vcmp.lt.s32.totalorder %v673, 0
  %v675 = vsub.s32 0, %v673
  %v676 = vsel %vm674, %v675, %v673
  %v677 = vclz %v676
  %v678 = vsub.s32 %v677, 2
  %vm679 = vcmp.gt.s32.totalorder 0, %v678
  %v680 = vsel %vm679, 0, %v678
  %v681 = vsub.s32 32, %v680
  %v682 = vshll.u32 %v673, %v680
  %v683 = vshrl.u32 %v665, %v681
  %v684 = vor.u32 %v682, %v683
  %v685 = vsub.s32 4294967266, %v680
  %v686 = vadd.s32 %v685, 127
  %v687 = vshll.u32 %v686, 23
  %v688 = vor.u32 4788187, %v687
  %v689 = vand.u32 2147483647, %v688
  %v691 = vcvt.s32.f32 %v684
  %v692 = vmul.f32 %v691, %v689
  %v693 = vxor.u32 %v692, 2147483648
  %v694 = vsel %vm611, %v693, %v692
  %v695 = vsub.s32 4, %v671
  %v696 = vsel %vm611, %v695, %v671
  %v697 = vsel %vm610, %v85, %v694
  %v698 = vsel %vm610, 0, %v696
  %v699 = vcosq.f32.pop %v697
  %v700 = vsinq.f32.pop %v697
  %vm701 = vweird.f32 %v85
  %v702 = vand.u32 %v698, 3
  %vm703 = vcmp.lt.s32.totalorder %v702, 2
  %vm704 = vcmp.eq.s32.totalorder %v702, 0
  %v705 = vxor.u32 %v700, 2147483648
  %v706 = vsel %vm704, %v699, %v705
  %vm707 = vcmp.eq.s32.totalorder %v702, 2
  %v708 = vxor.u32 %v699, 2147483648
  %v709 = vsel %vm707, %v708, %v700
  %v710 = vsel %vm703, %v706, %v709
  %v711 = vsel %vm701, nan, %v710
  %v712 = vand.u32 2147483647, %v86
  %vm713 = vcmp.le.f32.partialorder %v712, 0.7853982
  %vm714 = vcmp.lt.s32.totalorder %v86, 0
  %v715 = vand.u32 %v86, 2139095040
  %v716 = vshrl.u32 %v715, 23
  %v717 = vsub.s32 %v716, 127
  %v718 = vand.u32 2147483647, %v86
  %v719 = vand.u32 %v718, 8388607
  %v720 = vor.u32 %v719, 8388608
  %v721 = vsub.s32 0, %v720
  %v722 = vadd.s32 %v717, 1
  %vm723 = vcmp.gt.s32.totalorder %v722, 0
  %v724 = vsel %vm723, %v722, 0
  %v725 = vshrl.u32 %v724, 5
  %v726 = vand.u32 %v724, 31
  %v727 = vsub.s32 32, %v726
  %v728 = vshrl.u32 683565275, %v727
  %v729 = vshll.u32 683565275, %v726
  %v730 = vshrl.u32 2475754826, %v727
  %v731 = vor.u32 %v729, %v730
  %v732 = vshll.u32 2475754826, %v726
  %v733 = vshrl.u32 2131351028, %v727
  %v734 = vor.u32 %v732, %v733
  %v735 = vshll.u32 2131351028, %v726
  %v736 = vshrl.u32 2102212464, %v727
  %v737 = vor.u32 %v735, %v736
  %v738 = vshll.u32 2102212464, %v726
  %v739 = vshrl.u32 920167782, %v727
  %v740 = vor.u32 %v738, %v739
  %v741 = vshll.u32 920167782, %v726
  %v742 = vshrl.u32 1326507024, %v727
  %v743 = vor.u32 %v741, %v742
  %vm744 = vcmp.lt.s32.totalorder %v725, 1
  %vm745 = vcmp.lt.s32.totalorder %v725, 2
  %vm746 = vcmp.lt.s32.totalorder %v725, 3
  %vm747 = vcmp.lt.s32.totalorder %v725, 4
  %v748 = vsel %vm744, %v728, %v731
  %v749 = vsel %vm747, %v737, 2102212464
  %v750 = vsel %vm746, %v734, %v749
  %v751 = vsel %vm745, %v748, %v750
  %v752 = vsel %vm744, %v731, %v734
  %v753 = vsel %vm747, %v740, 920167782
  %v754 = vsel %vm746, %v737, %v753
  %v755 = vsel %vm745, %v752, %v754
  %v756 = vsel %vm744, %v734, %v737
  %v757 = vsel %vm747, %v743, 1326507024
  %v758 = vsel %vm746, %v740, %v757
  %v759 = vsel %vm745, %v756, %v758
  %v760 = vshll.u32 %v720, 8
  %v761 = vmul.u32.u64.compose %v760, %v759
  %v762 = vextract.low.u32 %v761
  %v763 = vextract.high.u32 %v761
  %v764 = vmul.u32.u64.compose %v760, %v755
  %v765 = vextract.low.u32 %v764
  %v766 = vextract.high.u32 %v764
  %v767 = vmul.u32 %v760, %v751
  %v768 = vadd.s32 %v763, %v765
  %vm769 = vc.u32 %v763, %v765
  %v770 = vadd.s32 %v766, 1
  %v771 = vsel %vm769, %v770, %v766
  %v772 = vadd.s32 %v767, %v771
  %v773 = vadd.s32 %v772, 536870912
  %v774 = vshrl.u32 %v773, 30
  %v775 = vshll.u32 %v774, 30
  %v776 = vsub.s32 %v772, %v775
  %vm777 = vcmp.lt.s32.totalorder %v776, 0
  %v778 = vsub.s32 0, %v776
  %v779 = vsel %vm777, %v778, %v776
  %v780 = vclz %v779
  %v781 = vsub.s32 %v780, 2
  %vm782 = vcmp.gt.s32.totalorder 0, %v781
  %v783 = vsel %vm782, 0, %v781
  %v784 = vsub.s32 32, %v783
  %v785 = vshll.u32 %v776, %v783
  %v786 = vshrl.u32 %v768, %v784
  %v787 = vor.u32 %v785, %v786
  %v788 = vsub.s32 4294967266, %v783
  %v789 = vadd.s32 %v788, 127
  %v790 = vshll.u32 %v789, 23
  %v791 = vor.u32 4788187, %v790
  %v792 = vand.u32 2147483647, %v791
  %v794 = vcvt.s32.f32 %v787
  %v795 = vmul.f32 %v794, %v792
  %v796 = vxor.u32 %v795, 2147483648
  %v797 = vsel %vm714, %v796, %v795
  %v798 = vsub.s32 4, %v774
  %v799 = vsel %vm714, %v798, %v774
  %v800 = vsel %vm713, %v86, %v797
  %v801 = vsel %vm713, 0, %v799
  %v802 = vcosq.f32.pop %v800
  %v803 = vsinq.f32.pop %v800
  %vm804 = vweird.f32 %v86
  %v805 = vand.u32 %v801, 3
  %vm806 = vcmp.lt.s32.totalorder %v805, 2
  %vm807 = vcmp.eq.s32.totalorder %v805, 0
  %v808 = vxor.u32 %v803, 2147483648
  %v809 = vsel %vm807, %v802, %v808
  %vm810 = vcmp.eq.s32.totalorder %v805, 2
  %v811 = vxor.u32 %v802, 2147483648
  %v812 = vsel %vm810, %v811, %v803
  %v813 = vsel %vm806, %v809, %v812
  %v814 = vsel %vm804, nan, %v813
  %v815 = vand.u32 2147483647, %v87
  %vm816 = vcmp.le.f32.partialorder %v815, 0.7853982
  %vm817 = vcmp.lt.s32.totalorder %v87, 0
  %v818 = vand.u32 %v87, 2139095040
  %v819 = vshrl.u32 %v818, 23
  %v820 = vsub.s32 %v819, 127
  %v821 = vand.u32 2147483647, %v87
  %v822 = vand.u32 %v821, 8388607
  %v823 = vor.u32 %v822, 8388608
  %v824 = vsub.s32 0, %v823
  %v825 = vadd.s32 %v820, 1
  %vm826 = vcmp.gt.s32.totalorder %v825, 0
  %v827 = vsel %vm826, %v825, 0
  %v828 = vshrl.u32 %v827, 5
  %v829 = vand.u32 %v827, 31
  %v830 = vsub.s32 32, %v829
  %v831 = vshrl.u32 683565275, %v830
  %v832 = vshll.u32 683565275, %v829
  %v833 = vshrl.u32 2475754826, %v830
  %v834 = vor.u32 %v832, %v833
  %v835 = vshll.u32 2475754826, %v829
  %v836 = vshrl.u32 2131351028, %v830
  %v837 = vor.u32 %v835, %v836
  %v838 = vshll.u32 2131351028, %v829
  %v839 = vshrl.u32 2102212464, %v830
  %v840 = vor.u32 %v838, %v839
  %v841 = vshll.u32 2102212464, %v829
  %v842 = vshrl.u32 920167782, %v830
  %v843 = vor.u32 %v841, %v842
  %v844 = vshll.u32 920167782, %v829
  %v845 = vshrl.u32 1326507024, %v830
  %v846 = vor.u32 %v844, %v845
  %vm847 = vcmp.lt.s32.totalorder %v828, 1
  %vm848 = vcmp.lt.s32.totalorder %v828, 2
  %vm849 = vcmp.lt.s32.totalorder %v828, 3
  %vm850 = vcmp.lt.s32.totalorder %v828, 4
  %v851 = vsel %vm847, %v831, %v834
  %v852 = vsel %vm850, %v840, 2102212464
  %v853 = vsel %vm849, %v837, %v852
  %v854 = vsel %vm848, %v851, %v853
  %v855 = vsel %vm847, %v834, %v837
  %v856 = vsel %vm850, %v843, 920167782
  %v857 = vsel %vm849, %v840, %v856
  %v858 = vsel %vm848, %v855, %v857
  %v859 = vsel %vm847, %v837, %v840
  %v860 = vsel %vm850, %v846, 1326507024
  %v861 = vsel %vm849, %v843, %v860
  %v862 = vsel %vm848, %v859, %v861
  %v863 = vshll.u32 %v823, 8
  %v864 = vmul.u32.u64.compose %v863, %v862
  %v865 = vextract.low.u32 %v864
  %v866 = vextract.high.u32 %v864
  %v867 = vmul.u32.u64.compose %v863, %v858
  %v868 = vextract.low.u32 %v867
  %v869 = vextract.high.u32 %v867
  %v870 = vmul.u32 %v863, %v854
  %v871 = vadd.s32 %v866, %v868
  %vm872 = vc.u32 %v866, %v868
  %v873 = vadd.s32 %v869, 1
  %v874 = vsel %vm872, %v873, %v869
  %v875 = vadd.s32 %v870, %v874
  %v876 = vadd.s32 %v875, 536870912
  %v877 = vshrl.u32 %v876, 30
  %v878 = vshll.u32 %v877, 30
  %v879 = vsub.s32 %v875, %v878
  %vm880 = vcmp.lt.s32.totalorder %v879, 0
  %v881 = vsub.s32 0, %v879
  %v882 = vsel %vm880, %v881, %v879
  %v883 = vclz %v882
  %v884 = vsub.s32 %v883, 2
  %vm885 = vcmp.gt.s32.totalorder 0, %v884
  %v886 = vsel %vm885, 0, %v884
  %v887 = vsub.s32 32, %v886
  %v888 = vshll.u32 %v879, %v886
  %v889 = vshrl.u32 %v871, %v887
  %v890 = vor.u32 %v888, %v889
  %v891 = vsub.s32 4294967266, %v886
  %v892 = vadd.s32 %v891, 127
  %v893 = vshll.u32 %v892, 23
  %v894 = vor.u32 4788187, %v893
  %v895 = vand.u32 2147483647, %v894
  %v897 = vcvt.s32.f32 %v890
  %v898 = vmul.f32 %v897, %v895
  %v899 = vxor.u32 %v898, 2147483648
  %v900 = vsel %vm817, %v899, %v898
  %v901 = vsub.s32 4, %v877
  %v902 = vsel %vm817, %v901, %v877
  %v903 = vsel %vm816, %v87, %v900
  %v904 = vsel %vm816, 0, %v902
  %v905 = vcosq.f32.pop %v903
  %v906 = vsinq.f32.pop %v903
  %vm907 = vweird.f32 %v87
  %v908 = vand.u32 %v904, 3
  %vm909 = vcmp.lt.s32.totalorder %v908, 2
  %vm910 = vcmp.eq.s32.totalorder %v908, 0
  %v911 = vxor.u32 %v906, 2147483648
  %v912 = vsel %vm910, %v905, %v911
  %vm913 = vcmp.eq.s32.totalorder %v908, 2
  %v914 = vxor.u32 %v905, 2147483648
  %v915 = vsel %vm913, %v914, %v906
  %v916 = vsel %vm909, %v912, %v915
  %v917 = vsel %vm907, nan, %v916
  %v918 = vpack.c.bf16 %v711, %v608
  %v919 = vpack.c.bf16 %v917, %v814
  %v920 = vld [vmem:[%s0] sm:$0xf]
  %v921 = vld [vmem:[%s0 + $0x4] sm:$0xf]
  %v922 = vld [vmem:[%s0 + $0x8] sm:$0xf]
  %v923 = vld [vmem:[%s0 + $0xc] sm:$0xf]
  %v924 = vld [vmem:[%s9] sm:$0xf]
  %v925 = vld [vmem:[%s9 + $0x4] sm:$0xf]
  %v926 = vld [vmem:[%s9 + $0x8] sm:$0xf]
  %v927 = vld [vmem:[%s9 + $0xc] sm:$0xf]
  %v928 = vld [vmem:[%s9 + $0x10] sm:$0xf]
  %v929 = vld [vmem:[%s9 + $0x14] sm:$0xf]
  %v930 = vld [vmem:[%s9 + $0x18] sm:$0xf]
  %v931 = vld [vmem:[%s9 + $0x1c] sm:$0xf]
  %v932 = vld [vmem:[%s10] sm:$0xf]
  %v933 = vld [vmem:[%s10 + $0x4] sm:$0xf]
  %v936 = vunpack.c.l.b16 %v932
  %v937 = vunpack.c.l.b16 %v933
  %v938 = vpack.c.b16 %v937, %v936
  %vm940 = vcmask 130048
  %v942 = vsel %vm940, %v504, 0
  %v945 = vsel %vm940, %v505, 0
  %947 = vmatprep.subr.bf16.mxu0 0
  %948 = vmatpush1.bf16.msra.mxu0 %v938
  %949 = vmatprep.subr.bf16.mxu0 0
  %950 = vmatpush1.bf16.msra.mxu0 0
  %951 = vmatprep.subr.bf16.mxu0 0
  %952 = vmatpush1.bf16.msra.mxu0 0
  %953 = vmatprep.subr.bf16.mxu0 0
  %954 = vmatpush1.bf16.msra.mxu0 0
  %955 = vmatprep.subr.bf16.mxu0 0
  %956 = vmatpush1.bf16.msra.mxu0 0
  %957 = vmatprep.subr.bf16.mxu0 0
  %958 = vmatpush1.bf16.msra.mxu0 0
  %959 = vmatprep.subr.bf16.mxu0 0
  %960 = vmatpush1.bf16.msra.mxu0 0
  %961 = vmatprep.subr.bf16.mxu0 0
  %962 = vmatpush1.bf16.msra.mxu0 0
  %963 = vmatprep.subr.bf16.mxu0 0
  %964 = vmatpush1.bf16.msra.mxu0 0
  %965 = vmatprep.subr.bf16.mxu0 0
  %966 = vmatpush1.bf16.msra.mxu0 0
  %967 = vmatprep.subr.bf16.mxu0 0
  %968 = vmatpush1.bf16.msra.mxu0 0
  %969 = vmatprep.subr.bf16.mxu0 0
  %970 = vmatpush1.bf16.msra.mxu0 0
  %971 = vmatprep.subr.bf16.mxu0 0
  %972 = vmatpush1.bf16.msra.mxu0 0
  %973 = vmatprep.subr.bf16.mxu0 0
  %974 = vmatpush1.bf16.msra.mxu0 0
  %975 = vmatprep.subr.bf16.mxu0 0
  %976 = vmatpush1.bf16.msra.mxu0 0
  %977 = vmatprep.subr.bf16.mxu0 0
  %978 = vmatpush1.bf16.msra.mxu0 0
  %979 = vmatprep.mubr.bf16.mxu0 0
  %980 = vmatmul.mubr.bf16.gmra.mrb[0].mxu0 %v942
  %v981 = vpop.f32.mrb[0].mxu0
  %v982 = vadd.f32 0.0, %v981
  %v983 = vpop.f32.mrb[0].mxu0
  %v984 = vpop.f32.mrb[0].mxu0
  %v985 = vadd.f32 0.0, %v984
  %v986 = vpop.f32.mrb[0].mxu0
  %987 = vmatprep.mubr.bf16.mxu0 0
  %988 = vmatmul.mubr.bf16.gmra.mrb[0].mxu0 %v945
  %v989 = vpop.f32.mrb[0].mxu0
  %v990 = vadd.f32 0.0, %v989
  %v991 = vpop.f32.mrb[0].mxu0
  %v992 = vpop.f32.mrb[0].mxu0
  %v993 = vadd.f32 0.0, %v992
  %v994 = vpop.f32.mrb[0].mxu0
  %995 = vdwg.mxu0
  %v1000 = vunpack.c.l.b16 %v920
  %v1001 = vunpack.c.l.b16 %v921
  %v1002 = vunpack.c.l.b16 %v922
  %v1003 = vunpack.c.l.b16 %v923
  %v1004 = vpack.c.b16 %v1001, %v1000
  %v1005 = vpack.c.b16 %v1003, %v1002
  %v1014 = vunpack.c.l.b16 %v924
  %v1015 = vunpack.c.l.b16 %v925
  %v1016 = vunpack.c.l.b16 %v926
  %v1017 = vunpack.c.l.b16 %v927
  %v1018 = vunpack.c.l.b16 %v928
  %v1019 = vunpack.c.l.b16 %v929
  %v1020 = vunpack.c.l.b16 %v930
  %v1021 = vunpack.c.l.b16 %v931
  %v1022 = vpack.c.b16 %v1015, %v1014
  %v1023 = vpack.c.b16 %v1017, %v1016
  %v1024 = vpack.c.b16 %v1019, %v1018
  %v1025 = vpack.c.b16 %v1021, %v1020
  %vm1030 = vcmask 523264
  %v1032 = vsel %vm1030, %v1004, 0
  %v1035 = vsel %vm1030, %v1005, 0
  %1037 = vmatprep.subr.bf16.mxu0 0
  %1038 = vmatpush1.bf16.msra.mxu0 %v1022
  %1039 = vmatprep.subr.bf16.mxu0 0
  %1040 = vmatpush1.bf16.msra.mxu0 %v1023
  %1041 = vmatprep.subr.bf16.mxu0 0
  %1042 = vmatpush1.bf16.msra.mxu0 %v1024
  %1043 = vmatprep.subr.bf16.mxu0 0
  %1044 = vmatpush1.bf16.msra.mxu0 %v1025
  %1045 = vmatprep.subr.bf16.mxu0 0
  %1046 = vmatpush1.bf16.msra.mxu0 0
  %1047 = vmatprep.subr.bf16.mxu0 0
  %1048 = vmatpush1.bf16.msra.mxu0 0
  %1049 = vmatprep.subr.bf16.mxu0 0
  %1050 = vmatpush1.bf16.msra.mxu0 0
  %1051 = vmatprep.subr.bf16.mxu0 0
  %1052 = vmatpush1.bf16.msra.mxu0 0
  %1053 = vmatprep.subr.bf16.mxu0 0
  %1054 = vmatpush1.bf16.msra.mxu0 0
  %1055 = vmatprep.subr.bf16.mxu0 0
  %1056 = vmatpush1.bf16.msra.mxu0 0
  %1057 = vmatprep.subr.bf16.mxu0 0
  %1058 = vmatpush1.bf16.msra.mxu0 0
  %1059 = vmatprep.subr.bf16.mxu0 0
  %1060 = vmatpush1.bf16.msra.mxu0 0
  %1061 = vmatprep.subr.bf16.mxu0 0
  %1062 = vmatpush1.bf16.msra.mxu0 0
  %1063 = vmatprep.subr.bf16.mxu0 0
  %1064 = vmatpush1.bf16.msra.mxu0 0
  %1065 = vmatprep.subr.bf16.mxu0 0
  %1066 = vmatpush1.bf16.msra.mxu0 0
  %1067 = vmatprep.subr.bf16.mxu0 0
  %1068 = vmatpush1.bf16.msra.mxu0 0
  %1069 = vmatprep.mubr.bf16.mxu0 0
  %1070 = vmatmul.mubr.bf16.gmra.mrb[0].mxu0 %v1032
  %v1071 = vpop.f32.mrb[0].mxu0
  %v1072 = vadd.f32 %v982, %v1071
  %v1073 = vpop.f32.mrb[0].mxu0
  %v1074 = vpop.f32.mrb[0].mxu0
  %v1075 = vadd.f32 %v985, %v1074
  %v1076 = vpop.f32.mrb[0].mxu0
  %1077 = vmatprep.mubr.bf16.mxu0 0
  %1078 = vmatmul.mubr.bf16.gmra.mrb[0].mxu0 %v1035
  %v1079 = vpop.f32.mrb[0].mxu0
  %v1080 = vadd.f32 %v990, %v1079
  %v1081 = vpop.f32.mrb[0].mxu0
  %v1082 = vpop.f32.mrb[0].mxu0
  %v1083 = vadd.f32 %v993, %v1082
  %v1084 = vpop.f32.mrb[0].mxu0
  %1085 = vdwg.mxu0
  %v1086 = vld [vmem:[%s11] sm:$0xf]
  %v1087 = vld [vmem:[%s11 + $0x4] sm:$0xf]
  %v1090 = vunpack.c.l.b16 %v1086
  %v1091 = vunpack.c.l.b16 %v1087
  %v1092 = vpack.c.b16 %v1091, %v1090
  %v1095 = vsel %vm940, %v918, 0
  %v1098 = vsel %vm940, %v919, 0
  %1100 = vmatprep.subr.bf16.mxu0 0
  %1101 = vmatpush1.bf16.msra.mxu0 %v1092
  %1102 = vmatprep.subr.bf16.mxu0 0
  %1103 = vmatpush1.bf16.msra.mxu0 0
  %1104 = vmatprep.subr.bf16.mxu0 0
  %1105 = vmatpush1.bf16.msra.mxu0 0
  %1106 = vmatprep.subr.bf16.mxu0 0
  %1107 = vmatpush1.bf16.msra.mxu0 0
  %1108 = vmatprep.subr.bf16.mxu0 0
  %1109 = vmatpush1.bf16.msra.mxu0 0
  %1110 = vmatprep.subr.bf16.mxu0 0
  %1111 = vmatpush1.bf16.msra.mxu0 0
  %1112 = vmatprep.subr.bf16.mxu0 0
  %1113 = vmatpush1.bf16.msra.mxu0 0
  %1114 = vmatprep.subr.bf16.mxu0 0
  %1115 = vmatpush1.bf16.msra.mxu0 0
  %1116 = vmatprep.subr.bf16.mxu0 0
  %1117 = vmatpush1.bf16.msra.mxu0 0
  %1118 = vmatprep.subr.bf16.mxu0 0
  %1119 = vmatpush1.bf16.msra.mxu0 0
  %1120 = vmatprep.subr.bf16.mxu0 0
  %1121 = vmatpush1.bf16.msra.mxu0 0
  %1122 = vmatprep.subr.bf16.mxu0 0
  %1123 = vmatpush1.bf16.msra.mxu0 0
  %1124 = vmatprep.subr.bf16.mxu0 0
  %1125 = vmatpush1.bf16.msra.mxu0 0
  %1126 = vmatprep.subr.bf16.mxu0 0
  %1127 = vmatpush1.bf16.msra.mxu0 0
  %1128 = vmatprep.subr.bf16.mxu0 0
  %1129 = vmatpush1.bf16.msra.mxu0 0
  %1130 = vmatprep.subr.bf16.mxu0 0
  %1131 = vmatpush1.bf16.msra.mxu0 0
  %1132 = vmatprep.mubr.bf16.mxu0 0
  %1133 = vmatmul.mubr.bf16.gmra.mrb[0].mxu0 %v1095
  %v1134 = vpop.f32.mrb[0].mxu0
  %v1135 = vadd.f32 0.0, %v1134
  %v1136 = vpop.f32.mrb[0].mxu0
  %v1137 = vpop.f32.mrb[0].mxu0
  %v1138 = vadd.f32 0.0, %v1137
  %v1139 = vpop.f32.mrb[0].mxu0
  %1140 = vmatprep.mubr.bf16.mxu0 0
  %1141 = vmatmul.mubr.bf16.gmra.mrb[0].mxu0 %v1098
  %v1142 = vpop.f32.mrb[0].mxu0
  %v1143 = vadd.f32 0.0, %v1142
  %v1144 = vpop.f32.mrb[0].mxu0
  %v1145 = vpop.f32.mrb[0].mxu0
  %v1146 = vadd.f32 0.0, %v1145
  %v1147 = vpop.f32.mrb[0].mxu0
  %1148 = vdwg.mxu0
  %v1149 = vadd.f32 %v1072, %v1135
  %v1150 = vadd.f32 %v1075, %v1138
  %v1151 = vadd.f32 %v1080, %v1143
  %v1152 = vadd.f32 %v1083, %v1146
  %v1153 = vld [vmem:[%s8] sm:$0x1]
  %v1155 = vlaneseq
  %v1156 = vshrl.u32 %v1155, 7
  %v1157 = vsub.s32 0, %v1156
  %v1158 = vrot.slane %v1153, %v1157
  %v1160 = vadd.f32 %v1149, %v1158
  %v1161 = vadd.f32 %v1150, %v1158
  %v1162 = vadd.f32 %v1151, %v1158
  %v1163 = vadd.f32 %v1152, %v1158
  %v1164 = vxor.u32 %v1160, 2147483648
  %v1165 = vxor.u32 %v1161, 2147483648
  %v1166 = vxor.u32 %v1162, 2147483648
  %v1167 = vxor.u32 %v1163, 2147483648
  %v1168 = vmul.f32 %v1164, 1.442695
  %v1169 = vpow.pop %v1168
  %v1170 = vmul.f32 %v1165, 1.442695
  %v1171 = vpow.pop %v1170
  %v1172 = vmul.f32 %v1166, 1.442695
  %v1173 = vpow.pop %v1172
  %v1174 = vmul.f32 %v1167, 1.442695
  %v1175 = vpow.pop %v1174
  %v1176 = vadd.f32 %v1169, 1.0
  %v1177 = vadd.f32 %v1171, 1.0
  %v1178 = vadd.f32 %v1173, 1.0
  %v1179 = vadd.f32 %v1175, 1.0
  %v1180 = vrcp.pop %v1176
  %v1181 = vmul.f32 1.0, %v1180
  %v1182 = vrcp.pop %v1177
  %v1183 = vmul.f32 1.0, %v1182
  %v1184 = vrcp.pop %v1178
  %v1185 = vmul.f32 1.0, %v1184
  %v1186 = vrcp.pop %v1179
  %v1187 = vmul.f32 1.0, %v1186
  %v1188 = vmul.f32 %v1160, %v1181
  %v1189 = vmul.f32 %v1161, %v1183
  %v1190 = vmul.f32 %v1162, %v1185
  %v1191 = vmul.f32 %v1163, %v1187
  %v1192 = vpack.c.bf16 %v1189, %v1188
  %v1193 = vpack.c.bf16 %v1191, %v1190
  %v1194 = vld [vmem:[%s12] sm:$0xf]
  %v1195 = vld [vmem:[%s12 + $0x4] sm:$0xf]
  %v1196 = vld [vmem:[%s12 + $0x8] sm:$0xf]
  %v1197 = vld [vmem:[%s12 + $0xc] sm:$0xf]
  %v1202 = vunpack.c.l.b16 %v1194
  %v1203 = vunpack.c.l.b16 %v1195
  %v1204 = vunpack.c.l.b16 %v1196
  %v1205 = vunpack.c.l.b16 %v1197
  %v1206 = vpack.c.b16 %v1203, %v1202
  %v1207 = vpack.c.b16 %v1205, %v1204
  %vm1210 = vcmask 261120
  %v1212 = vsel %vm1210, %v1192, 0
  %v1215 = vsel %vm1210, %v1193, 0
  %1217 = vmatprep.subr.bf16.mxu0 0
  %1218 = vmatpush1.bf16.msra.mxu0 %v1206
  %1219 = vmatprep.subr.bf16.mxu0 0
  %1220 = vmatpush1.bf16.msra.mxu0 %v1207
  %1221 = vmatprep.subr.bf16.mxu0 0
  %1222 = vmatpush1.bf16.msra.mxu0 0
  %1223 = vmatprep.subr.bf16.mxu0 0
  %1224 = vmatpush1.bf16.msra.mxu0 0
  %1225 = vmatprep.subr.bf16.mxu0 0
  %1226 = vmatpush1.bf16.msra.mxu0 0
  %1227 = vmatprep.subr.bf16.mxu0 0
  %1228 = vmatpush1.bf16.msra.mxu0 0
  %1229 = vmatprep.subr.bf16.mxu0 0
  %1230 = vmatpush1.bf16.msra.mxu0 0
  %1231 = vmatprep.subr.bf16.mxu0 0
  %1232 = vmatpush1.bf16.msra.mxu0 0
  %1233 = vmatprep.subr.bf16.mxu0 0
  %1234 = vmatpush1.bf16.msra.mxu0 0
  %1235 = vmatprep.subr.bf16.mxu0 0
  %1236 = vmatpush1.bf16.msra.mxu0 0
  %1237 = vmatprep.subr.bf16.mxu0 0
  %1238 = vmatpush1.bf16.msra.mxu0 0
  %1239 = vmatprep.subr.bf16.mxu0 0
  %1240 = vmatpush1.bf16.msra.mxu0 0
  %1241 = vmatprep.subr.bf16.mxu0 0
  %1242 = vmatpush1.bf16.msra.mxu0 0
  %1243 = vmatprep.subr.bf16.mxu0 0
  %1244 = vmatpush1.bf16.msra.mxu0 0
  %1245 = vmatprep.subr.bf16.mxu0 0
  %1246 = vmatpush1.bf16.msra.mxu0 0
  %1247 = vmatprep.subr.bf16.mxu0 0
  %1248 = vmatpush1.bf16.msra.mxu0 0
  %1249 = vmatprep.mubr.bf16.mxu0 0
  %1250 = vmatmul.mubr.bf16.gmra.mrb[0].mxu0 %v1212
  %v1251 = vpop.f32.mrb[0].mxu0
  %v1252 = vadd.f32 0.0, %v1251
  %v1253 = vpop.f32.mrb[0].mxu0
  %v1254 = vpop.f32.mrb[0].mxu0
  %v1255 = vadd.f32 0.0, %v1254
  %v1256 = vpop.f32.mrb[0].mxu0
  %1257 = vmatprep.mubr.bf16.mxu0 0
  %1258 = vmatmul.mubr.bf16.gmra.mrb[0].mxu0 %v1215
  %v1259 = vpop.f32.mrb[0].mxu0
  %v1260 = vadd.f32 0.0, %v1259
  %v1261 = vpop.f32.mrb[0].mxu0
  %v1262 = vpop.f32.mrb[0].mxu0
  %v1263 = vadd.f32 0.0, %v1262
  %v1264 = vpop.f32.mrb[0].mxu0
  %1265 = vdwg.mxu0
  %v1266 = vxor.u32 %v1252, 2147483648
  %v1267 = vxor.u32 %v1255, 2147483648
  %v1268 = vxor.u32 %v1260, 2147483648
  %v1269 = vxor.u32 %v1263, 2147483648
  %v1270 = vmul.f32 %v1266, 1.442695
  %v1271 = vpow.pop %v1270
  %v1272 = vmul.f32 %v1267, 1.442695
  %v1273 = vpow.pop %v1272
  %v1274 = vmul.f32 %v1268, 1.442695
  %v1275 = vpow.pop %v1274
  %v1276 = vmul.f32 %v1269, 1.442695
  %v1277 = vpow.pop %v1276
  %v1278 = vadd.f32 %v1271, 1.0
  %v1279 = vadd.f32 %v1273, 1.0
  %v1280 = vadd.f32 %v1275, 1.0
  %v1281 = vadd.f32 %v1277, 1.0
  %v1282 = vrcp.pop %v1278
  %v1283 = vmul.f32 1.0, %v1282
  %v1284 = vrcp.pop %v1279
  %v1285 = vmul.f32 1.0, %v1284
  %v1286 = vrcp.pop %v1280
  %v1287 = vmul.f32 1.0, %v1286
  %v1288 = vrcp.pop %v1281
  %v1289 = vmul.f32 1.0, %v1288
  %v1290 = vld [vmem:[%s3] sm:$0xff]
  %v1291 = vld [vmem:[%s3 + $0x8] sm:$0xff]
  %v1292 = vld [vmem:[%s3 + $0x10] sm:$0xff]
  %v1293 = vld [vmem:[%s3 + $0x18] sm:$0xff]
  %v1294 = vld [vmem:[%s2] sm:$0xff]
  %v1295 = vld [vmem:[%s2 + $0x8] sm:$0xff]
  %v1296 = vld [vmem:[%s2 + $0x10] sm:$0xff]
  %v1297 = vld [vmem:[%s2 + $0x18] sm:$0xff]
  %v1298 = vld [vmem:[%s2 + $0x20] sm:$0xff]
  %v1299 = vld [vmem:[%s2 + $0x28] sm:$0xff]
  %v1300 = vld [vmem:[%s2 + $0x30] sm:$0xff]
  %v1301 = vld [vmem:[%s2 + $0x38] sm:$0xff]
  %v1302 = vld [vmem:[%s2 + $0x40] sm:$0xff]
  %v1303 = vld [vmem:[%s2 + $0x48] sm:$0xff]
  %v1304 = vld [vmem:[%s2 + $0x50] sm:$0xff]
  %v1305 = vld [vmem:[%s2 + $0x58] sm:$0xff]
  %v1306 = vmul.f32 %v1283, %v1290
  %v1307 = vmul.f32 %v1285, %v1291
  %v1308 = vmul.f32 %v1287, %v1292
  %v1309 = vmul.f32 %v1289, %v1293
  %1314 = vrot.lane.b32.xlu0 %v1290, 96
  %v1315 = vpop.permute.xlu0 %1314
  %1316 = vrot.lane.b32.xlu0 %v1291, 96
  %v1317 = vpop.permute.xlu0 %1316
  %1318 = vrot.lane.b32.xlu0 %v1292, 96
  %v1319 = vpop.permute.xlu0 %1318
  %1320 = vrot.lane.b32.xlu0 %v1293, 96
  %v1321 = vpop.permute.xlu0 %1320
  %v1326 = vmul.f32 %v1283, %v1315
  %v1327 = vmul.f32 %v1285, %v1317
  %v1328 = vmul.f32 %v1287, %v1319
  %v1329 = vmul.f32 %v1289, %v1321
  %1330 = vrot.lane.b32.xlu0 %v1290, 64
  %v1331 = vpop.permute.xlu0 %1330
  %1332 = vrot.lane.b32.xlu0 %v1291, 64
  %v1333 = vpop.permute.xlu0 %1332
  %1334 = vrot.lane.b32.xlu0 %v1292, 64
  %v1335 = vpop.permute.xlu0 %1334
  %1336 = vrot.lane.b32.xlu0 %v1293, 64
  %v1337 = vpop.permute.xlu0 %1336
  %v1342 = vmul.f32 %v1283, %v1331
  %v1343 = vmul.f32 %v1285, %v1333
  %v1344 = vmul.f32 %v1287, %v1335
  %v1345 = vmul.f32 %v1289, %v1337
  %v1346 = vmul.f32 %v1294, %v1306
  %v1347 = vmul.f32 %v1297, %v1307
  %v1348 = vmul.f32 %v1300, %v1308
  %v1349 = vmul.f32 %v1303, %v1309
  %1354 = vrot.lane.b32.xlu0 %v1326, 32
  %v1355 = vpop.permute.xlu0 %1354
  %1356 = vrot.lane.b32.xlu0 %v1327, 32
  %v1357 = vpop.permute.xlu0 %1356
  %1358 = vrot.lane.b32.xlu0 %v1328, 32
  %v1359 = vpop.permute.xlu0 %1358
  %1360 = vrot.lane.b32.xlu0 %v1329, 32
  %v1361 = vpop.permute.xlu0 %1360
  %v1366 = vmul.f32 %v1294, %v1355
  %v1367 = vmul.f32 %v1297, %v1357
  %v1368 = vmul.f32 %v1300, %v1359
  %v1369 = vmul.f32 %v1303, %v1361
  %1374 = vrot.lane.b32.xlu0 %v1366, 96
  %v1375 = vpop.permute.xlu0 %1374
  %1376 = vrot.lane.b32.xlu0 %v1367, 96
  %v1377 = vpop.permute.xlu0 %1376
  %1378 = vrot.lane.b32.xlu0 %v1368, 96
  %v1379 = vpop.permute.xlu0 %1378
  %1380 = vrot.lane.b32.xlu0 %v1369, 96
  %v1381 = vpop.permute.xlu0 %1380
  %v1386 = vadd.f32 %v1346, %v1375
  %v1387 = vadd.f32 %v1347, %v1377
  %v1388 = vadd.f32 %v1348, %v1379
  %v1389 = vadd.f32 %v1349, %v1381
  %1394 = vrot.lane.b32.xlu0 %v1342, 64
  %v1395 = vpop.permute.xlu0 %1394
  %1396 = vrot.lane.b32.xlu0 %v1343, 64
  %v1397 = vpop.permute.xlu0 %1396
  %1398 = vrot.lane.b32.xlu0 %v1344, 64
  %v1399 = vpop.permute.xlu0 %1398
  %1400 = vrot.lane.b32.xlu0 %v1345, 64
  %v1401 = vpop.permute.xlu0 %1400
  %v1406 = vmul.f32 %v1294, %v1395
  %v1407 = vmul.f32 %v1297, %v1397
  %v1408 = vmul.f32 %v1300, %v1399
  %v1409 = vmul.f32 %v1303, %v1401
  %1414 = vrot.lane.b32.xlu0 %v1406, 64
  %v1415 = vpop.permute.xlu0 %1414
  %1416 = vrot.lane.b32.xlu0 %v1407, 64
  %v1417 = vpop.permute.xlu0 %1416
  %1418 = vrot.lane.b32.xlu0 %v1408, 64
  %v1419 = vpop.permute.xlu0 %1418
  %1420 = vrot.lane.b32.xlu0 %v1409, 64
  %v1421 = vpop.permute.xlu0 %1420
  %v1426 = vadd.f32 %v1386, %v1415
  %v1427 = vadd.f32 %v1387, %v1417
  %v1428 = vadd.f32 %v1388, %v1419
  %v1429 = vadd.f32 %v1389, %v1421
  %1434 = vrot.lane.b32.xlu0 %v1306, 96
  %v1435 = vpop.permute.xlu0 %1434
  %1436 = vrot.lane.b32.xlu0 %v1307, 96
  %v1437 = vpop.permute.xlu0 %1436
  %1438 = vrot.lane.b32.xlu0 %v1308, 96
  %v1439 = vpop.permute.xlu0 %1438
  %1440 = vrot.lane.b32.xlu0 %v1309, 96
  %v1441 = vpop.permute.xlu0 %1440
  %v1446 = vmul.f32 %v1294, %v1435
  %v1447 = vmul.f32 %v1297, %v1437
  %v1448 = vmul.f32 %v1300, %v1439
  %v1449 = vmul.f32 %v1303, %v1441
  %v1450 = vmul.f32 %v1295, %v1326
  %v1451 = vmul.f32 %v1298, %v1327
  %v1452 = vmul.f32 %v1301, %v1328
  %v1453 = vmul.f32 %v1304, %v1329
  %1458 = vrot.lane.b32.xlu0 %v1450, 96
  %v1459 = vpop.permute.xlu0 %1458
  %1460 = vrot.lane.b32.xlu0 %v1451, 96
  %v1461 = vpop.permute.xlu0 %1460
  %1462 = vrot.lane.b32.xlu0 %v1452, 96
  %v1463 = vpop.permute.xlu0 %1462
  %1464 = vrot.lane.b32.xlu0 %v1453, 96
  %v1465 = vpop.permute.xlu0 %1464
  %v1470 = vadd.f32 %v1446, %v1459
  %v1471 = vadd.f32 %v1447, %v1461
  %v1472 = vadd.f32 %v1448, %v1463
  %v1473 = vadd.f32 %v1449, %v1465
  %1474 = vrot.lane.b32.xlu0 %v1342, 32
  %v1475 = vpop.permute.xlu0 %1474
  %1476 = vrot.lane.b32.xlu0 %v1343, 32
  %v1477 = vpop.permute.xlu0 %1476
  %1478 = vrot.lane.b32.xlu0 %v1344, 32
  %v1479 = vpop.permute.xlu0 %1478
  %1480 = vrot.lane.b32.xlu0 %v1345, 32
  %v1481 = vpop.permute.xlu0 %1480
  %v1486 = vmul.f32 %v1295, %v1475
  %v1487 = vmul.f32 %v1298, %v1477
  %v1488 = vmul.f32 %v1301, %v1479
  %v1489 = vmul.f32 %v1304, %v1481
  %1494 = vrot.lane.b32.xlu0 %v1486, 64
  %v1495 = vpop.permute.xlu0 %1494
  %1496 = vrot.lane.b32.xlu0 %v1487, 64
  %v1497 = vpop.permute.xlu0 %1496
  %1498 = vrot.lane.b32.xlu0 %v1488, 64
  %v1499 = vpop.permute.xlu0 %1498
  %1500 = vrot.lane.b32.xlu0 %v1489, 64
  %v1501 = vpop.permute.xlu0 %1500
  %v1506 = vadd.f32 %v1470, %v1495
  %v1507 = vadd.f32 %v1471, %v1497
  %v1508 = vadd.f32 %v1472, %v1499
  %v1509 = vadd.f32 %v1473, %v1501
  %1510 = vrot.lane.b32.xlu0 %v1306, 64
  %v1511 = vpop.permute.xlu0 %1510
  %1512 = vrot.lane.b32.xlu0 %v1307, 64
  %v1513 = vpop.permute.xlu0 %1512
  %1514 = vrot.lane.b32.xlu0 %v1308, 64
  %v1515 = vpop.permute.xlu0 %1514
  %1516 = vrot.lane.b32.xlu0 %v1309, 64
  %v1517 = vpop.permute.xlu0 %1516
  %v1522 = vmul.f32 %v1295, %v1511
  %v1523 = vmul.f32 %v1298, %v1513
  %v1524 = vmul.f32 %v1301, %v1515
  %v1525 = vmul.f32 %v1304, %v1517
  %1526 = vrot.lane.b32.xlu0 %v1326, 96
  %v1527 = vpop.permute.xlu0 %1526
  %1528 = vrot.lane.b32.xlu0 %v1327, 96
  %v1529 = vpop.permute.xlu0 %1528
  %1530 = vrot.lane.b32.xlu0 %v1328, 96
  %v1531 = vpop.permute.xlu0 %1530
  %1532 = vrot.lane.b32.xlu0 %v1329, 96
  %v1533 = vpop.permute.xlu0 %1532
  %v1538 = vmul.f32 %v1295, %v1527
  %v1539 = vmul.f32 %v1298, %v1529
  %v1540 = vmul.f32 %v1301, %v1531
  %v1541 = vmul.f32 %v1304, %v1533
  %1546 = vrot.lane.b32.xlu0 %v1538, 96
  %v1547 = vpop.permute.xlu0 %1546
  %1548 = vrot.lane.b32.xlu0 %v1539, 96
  %v1549 = vpop.permute.xlu0 %1548
  %1550 = vrot.lane.b32.xlu0 %v1540, 96
  %v1551 = vpop.permute.xlu0 %1550
  %1552 = vrot.lane.b32.xlu0 %v1541, 96
  %v1553 = vpop.permute.xlu0 %1552
  %v1558 = vadd.f32 %v1522, %v1547
  %v1559 = vadd.f32 %v1523, %v1549
  %v1560 = vadd.f32 %v1524, %v1551
  %v1561 = vadd.f32 %v1525, %v1553
  %v1562 = vmul.f32 %v1296, %v1342
  %v1563 = vmul.f32 %v1299, %v1343
  %v1564 = vmul.f32 %v1302, %v1344
  %v1565 = vmul.f32 %v1305, %v1345
  %1570 = vrot.lane.b32.xlu0 %v1562, 64
  %v1571 = vpop.permute.xlu0 %1570
  %1572 = vrot.lane.b32.xlu0 %v1563, 64
  %v1573 = vpop.permute.xlu0 %1572
  %1574 = vrot.lane.b32.xlu0 %v1564, 64
  %v1575 = vpop.permute.xlu0 %1574
  %1576 = vrot.lane.b32.xlu0 %v1565, 64
  %v1577 = vpop.permute.xlu0 %1576
  %v1582 = vadd.f32 %v1558, %v1571
  %v1583 = vadd.f32 %v1559, %v1573
  %v1584 = vadd.f32 %v1560, %v1575
  %v1585 = vadd.f32 %v1561, %v1577
  %1590 = vrot.lane.b32.xlu0 %v1426, 32
  %v1591 = vpop.permute.xlu0 %1590
  %1592 = vrot.lane.b32.xlu0 %v1427, 32
  %v1593 = vpop.permute.xlu0 %1592
  %1594 = vrot.lane.b32.xlu0 %v1428, 32
  %v1595 = vpop.permute.xlu0 %1594
  %1596 = vrot.lane.b32.xlu0 %v1429, 32
  %v1597 = vpop.permute.xlu0 %1596
  %1606 = vrot.lane.b32.xlu0 %v1506, 96
  %v1607 = vpop.permute.xlu0 %1606
  %1608 = vrot.lane.b32.xlu0 %v1507, 96
  %v1609 = vpop.permute.xlu0 %1608
  %1610 = vrot.lane.b32.xlu0 %v1508, 96
  %v1611 = vpop.permute.xlu0 %1610
  %1612 = vrot.lane.b32.xlu0 %v1509, 96
  %v1613 = vpop.permute.xlu0 %1612
  %1622 = vrot.lane.b32.xlu0 %v1582, 32
  %v1623 = vpop.permute.xlu0 %1622
  %1624 = vrot.lane.b32.xlu0 %v1583, 32
  %v1625 = vpop.permute.xlu0 %1624
  %1626 = vrot.lane.b32.xlu0 %v1584, 32
  %v1627 = vpop.permute.xlu0 %1626
  %1628 = vrot.lane.b32.xlu0 %v1585, 32
  %v1629 = vpop.permute.xlu0 %1628
  %v1634 = vsel %vm1210, %v1188, %v1591
  %v1635 = vsel %vm1210, %v1189, %v1593
  %v1636 = vsel %vm1210, %v1190, %v1595
  %v1637 = vsel %vm1210, %v1191, %v1597
  %v1638 = vsel %vm1030, %v1634, %v1607
  %v1639 = vsel %vm1030, %v1635, %v1609
  %v1640 = vsel %vm1030, %v1636, %v1611
  %v1641 = vsel %vm1030, %v1637, %v1613
  %vm1642 = vcmask 785408
  %v1643 = vsel %vm1642, %v1638, %v1623
  %v1644 = vsel %vm1642, %v1639, %v1625
  %v1645 = vsel %vm1642, %v1640, %v1627
  %v1646 = vsel %vm1642, %v1641, %v1629
  %v1647 = vpack.c.bf16 %v1644, %v1643
  %v1648 = vpack.c.bf16 %v1646, %v1645
  %v1649 = vld [vmem:[#allocation2] sm:$0xff]
  %v1650 = vld [vmem:[%s4] sm:$0xf]
  %v1652 = vsel %vm1210, %v1650, 0
  %1654 = vmatprep.subr.bf16.mxu0 0
  %1655 = vmatpush1.bf16.msra.mxu0 %v1647
  %1656 = vmatprep.subr.bf16.mxu0 0
  %1657 = vmatpush1.bf16.msra.mxu0 %v1648
  %1658 = vmatprep.subr.bf16.mxu0 0
  %1659 = vmatpush1.bf16.msra.mxu0 0
  %1660 = vmatprep.subr.bf16.mxu0 0
  %1661 = vmatpush1.bf16.msra.mxu0 0
  %1662 = vmatprep.subr.bf16.mxu0 0
  %1663 = vmatpush1.bf16.msra.mxu0 0
  %1664 = vmatprep.subr.bf16.mxu0 0
  %1665 = vmatpush1.bf16.msra.mxu0 0
  %1666 = vmatprep.subr.bf16.mxu0 0
  %1667 = vmatpush1.bf16.msra.mxu0 0
  %1668 = vmatprep.subr.bf16.mxu0 0
  %1669 = vmatpush1.bf16.msra.mxu0 0
  %1670 = vmatprep.subr.bf16.mxu0 0
  %1671 = vmatpush1.bf16.msra.mxu0 0
  %1672 = vmatprep.subr.bf16.mxu0 0
  %1673 = vmatpush1.bf16.msra.mxu0 0
  %1674 = vmatprep.subr.bf16.mxu0 0
  %1675 = vmatpush1.bf16.msra.mxu0 0
  %1676 = vmatprep.subr.bf16.mxu0 0
  %1677 = vmatpush1.bf16.msra.mxu0 0
  %1678 = vmatprep.subr.bf16.mxu0 0
  %1679 = vmatpush1.bf16.msra.mxu0 0
  %1680 = vmatprep.subr.bf16.mxu0 0
  %1681 = vmatpush1.bf16.msra.mxu0 0
  %1682 = vmatprep.subr.bf16.mxu0 0
  %1683 = vmatpush1.bf16.msra.mxu0 0
  %1684 = vmatprep.subr.bf16.mxu0 0
  %1685 = vmatpush1.bf16.msra.mxu0 0
  %1686 = vmatprep.mubr.bf16.mxu0 0
  %1687 = vmatmul.mubr.bf16.gmra.mrb[0].mxu0 %v1652
  %v1688 = vpop.f32.mrb[0].mxu0
  %v1689 = vadd.f32 0.0, %v1688
  %v1690 = vpop.f32.mrb[0].mxu0
  %v1691 = vpop.f32.mrb[0].mxu0
  %v1692 = vpop.f32.mrb[0].mxu0
  %1693 = vdwg.mxu0
  %v1694 = vadd.f32 %v1649, %v1689
  %1695 = vst [vmem:[#allocation2] sm:$0xff] %v1694
  // Predicated region
  $region62: #{transition_down_forward.3} parent=0 // pred_check
    %p1696 = pneg %p48
  $region63: #{transition_down_forward.3} parent=0 // pred_check_branch
    %1698 = sbr.rel (%p1696) target = $region65
  $region64: #{transition_down_forward.3} parent=0 // pred_region
    %v1699 = vld [vmem:[#allocation2] sm:$0xff]
    %v1700 = vpack.c.bf16 %v1699, %v1699
    %v1701 = vld [vmem:[%s13] sm:$0xf]
    %v1702 = vld [vmem:[%s13 + $0x4] sm:$0xf]
    %v1703 = vld [vmem:[%s13 + $0x8] sm:$0xf]
    %v1704 = vld [vmem:[%s13 + $0xc] sm:$0xf]
    %v1709 = vunpack.c.l.b16 %v1701
    %v1710 = vunpack.c.l.b16 %v1702
    %v1711 = vunpack.c.l.b16 %v1703
    %v1712 = vunpack.c.l.b16 %v1704
    %v1713 = vpack.c.b16 %v1710, %v1709
    %v1714 = vpack.c.b16 %v1712, %v1711
    %v1718 = vsel %vm1210, %v1700, 0
    %1720 = vmatprep.subr.bf16.mxu0 0
    %1721 = vmatpush1.bf16.msra.mxu0 %v1713
    %1722 = vmatprep.subr.bf16.mxu0 0
    %1723 = vmatpush1.bf16.msra.mxu0 %v1714
    %1724 = vmatprep.subr.bf16.mxu0 0
    %1725 = vmatpush1.bf16.msra.mxu0 0
    %1726 = vmatprep.subr.bf16.mxu0 0
    %1727 = vmatpush1.bf16.msra.mxu0 0
    %1728 = vmatprep.subr.bf16.mxu0 0
    %1729 = vmatpush1.bf16.msra.mxu0 0
    %1730 = vmatprep.subr.bf16.mxu0 0
    %1731 = vmatpush1.bf16.msra.mxu0 0
    %1732 = vmatprep.subr.bf16.mxu0 0
    %1733 = vmatpush1.bf16.msra.mxu0 0
    %1734 = vmatprep.subr.bf16.mxu0 0
    %1735 = vmatpush1.bf16.msra.mxu0 0
    %1736 = vmatprep.subr.bf16.mxu0 0
    %1737 = vmatpush1.bf16.msra.mxu0 0
    %1738 = vmatprep.subr.bf16.mxu0 0
    %1739 = vmatpush1.bf16.msra.mxu0 0
    %1740 = vmatprep.subr.bf16.mxu0 0
    %1741 = vmatpush1.bf16.msra.mxu0 0
    %1742 = vmatprep.subr.bf16.mxu0 0
    %1743 = vmatpush1.bf16.msra.mxu0 0
    %1744 = vmatprep.subr.bf16.mxu0 0
    %1745 = vmatpush1.bf16.msra.mxu0 0
    %1746 = vmatprep.subr.bf16.mxu0 0
    %1747 = vmatpush1.bf16.msra.mxu0 0
    %1748 = vmatprep.subr.bf16.mxu0 0
    %1749 = vmatpush1.bf16.msra.mxu0 0
    %1750 = vmatprep.subr.bf16.mxu0 0
    %1751 = vmatpush1.bf16.msra.mxu0 0
    %1752 = vmatprep.mubr.bf16.mxu0 0
    %1753 = vmatmul.mubr.bf16.gmra.mrb[0].mxu0 %v1718
    %v1754 = vpop.f32.mrb[0].mxu0
    %v1755 = vadd.f32 0.0, %v1754
    %v1756 = vpop.f32.mrb[0].mxu0
    %v1757 = vpop.f32.mrb[0].mxu0
    %v1758 = vpop.f32.mrb[0].mxu0
    %1759 = vdwg.mxu0
    %v1760 = vxor.u32 %v1755, 2147483648
    %v1761 = vmul.f32 %v1760, 1.442695
    %v1762 = vpow.pop %v1761
    %v1763 = vadd.f32 %v1762, 1.0
    %v1764 = vrcp.pop %v1763
    %v1765 = vmul.f32 1.0, %v1764
    %v1766 = vmul.f32 %v1755, %v1765
    %v1767 = vld [vmem:[%s5] sm:$0xff]
    %v1768 = vadd.f32 %v1766, %v1767
    %v1769 = vld [vmem:[%s6] sm:$0xff]
    %1771 = vrot.lane.b32.xlu0 %v1769, 32
    %v1772 = vpop.permute.xlu0 %1771
    %v1774 = vadd.f32 %v1699, %v1772
    %v1775 = vsel %vm1210, %v1768, %v1774
    %1776 = vst [vmem:[%s14] sm:$0xff] %v1775
  $region65: #{transition_down_forward.3} parent=0 // pred_fallthru
    _
  // Predicated region
  $region66: #{transition_down_forward.3} parent=0 // pred_check
    _
  $region67: #{transition_down_forward.3} parent=0 // pred_check_branch
    %1778 = sbr.rel (0) target = $region69
  $region68: #{transition_down_forward.3} parent=0 // pred_region
    _
  $region69: #{transition_down_forward.3} parent=0 // pred_fallthru
    _
  // Predicated region
  $region70: #{transition_down_forward.3} parent=0 // pred_check
    _
  $region71: #{transition_down_forward.3} parent=0 // pred_check_branch
    %1780 = sbr.rel (0) target = $region73
  $region72: #{transition_down_forward.3} parent=0 // pred_region
    _
  $region73: #{transition_down_forward.3} parent=0 // pred_fallthru
    _

// kernel: transition_down_forward.2
$region0: #{transition_down_forward.2}
  #allocation0 [shape = 'u32[]', space=smem, size = 0x4, offset = 0x4, fixed_abs, tag = 'smem constant byte address 0x4 - core index']
  #allocation1 [shape = 'u32[144,128]{1,0:T(1,128)}', space=vmem, size = 0x12000, scoped, tag = 'internal scratch']
  #allocation2 [shape = 'f32[8,128]{1,0:T(8,128)}', space=vmem, size = 0x1000, scoped, tag = 'scratch operand']
  %s0 = inlined_call_operand.vmem [shape: bf16[64,64], index: 0, kind: input, shape index: {}]
  %s1 = inlined_call_operand.vmem [shape: f32[64,1], index: 1, kind: input, shape index: {}]
  %s2 = inlined_call_operand.vmem [shape: f32[64,288], index: 2, kind: input, shape index: {}]
  %s3 = inlined_call_operand.vmem [shape: f32[64,96], index: 3, kind: input, shape index: {}]
  %s4 = inlined_call_operand.vmem [shape: bf16[8,64], index: 4, kind: input, shape index: {}]
  %s5 = inlined_call_operand.vmem [shape: f32[8,32], index: 5, kind: input, shape index: {}]
  %s6 = inlined_call_operand.vmem [shape: f32[8,96], index: 6, kind: input, shape index: {}]
  %s7 = inlined_call_operand.vmem [shape: f32[1,16], index: 7, kind: input, shape index: {}]
  %s8 = inlined_call_operand.vmem [shape: f32[1,32], index: 8, kind: input, shape index: {}]
  %s9 = inlined_call_operand.vmem [shape: bf16[64,32], index: 9, kind: input, shape index: {}]
  %s10 = inlined_call_operand.vmem [shape: bf16[16,32], index: 10, kind: input, shape index: {}]
  %s11 = inlined_call_operand.vmem [shape: bf16[16,32], index: 11, kind: input, shape index: {}]
  %s12 = inlined_call_operand.vmem [shape: bf16[32,32], index: 12, kind: input, shape index: {}]
  %s13 = inlined_call_operand.vmem [shape: bf16[32,32], index: 13, kind: input, shape index: {}]
  %s14 = inlined_call_operand.vmem [shape: f32[8,128], index: 14, kind: output, shape index: {}]
  %s15 = sld [smem:[#allocation0]]
  $region74: #{transition_down_forward.2} parent=0
    _
  %s17 = ssub.s32 1, %s15
  %s18 = scalar_select 0, %s17, %s15
  // Predicated region
  $region2: #{transition_down_forward.2} parent=0 // pred_check
    _
  $region3: #{transition_down_forward.2} parent=0 // pred_check_branch
    %20 = sbr.rel (0) target = $region5
  $region4: #{transition_down_forward.2} parent=0 // pred_region
    _
  $region5: #{transition_down_forward.2} parent=0 // pred_fallthru
    _
  // Predicated region
  $region6: #{transition_down_forward.2} parent=0 // pred_check
    _
  $region7: #{transition_down_forward.2} parent=0 // pred_check_branch
    %22 = sbr.rel (0) target = $region9
  $region8: #{transition_down_forward.2} parent=0 // pred_region
    _
  $region9: #{transition_down_forward.2} parent=0 // pred_fallthru
    _
  // Predicated region
  $region10: #{transition_down_forward.2} parent=0 // pred_check
    _
  $region11: #{transition_down_forward.2} parent=0 // pred_check_branch
    %24 = sbr.rel (0) target = $region13
  $region12: #{transition_down_forward.2} parent=0 // pred_region
    _
  $region13: #{transition_down_forward.2} parent=0 // pred_fallthru
    _
  // Predicated region
  $region14: #{transition_down_forward.2} parent=0 // pred_check
    _
  $region15: #{transition_down_forward.2} parent=0 // pred_check_branch
    %26 = sbr.rel (0) target = $region17
  $region16: #{transition_down_forward.2} parent=0 // pred_region
    _
  $region17: #{transition_down_forward.2} parent=0 // pred_fallthru
    _
  // Predicated region
  $region18: #{transition_down_forward.2} parent=0 // pred_check
    _
  $region19: #{transition_down_forward.2} parent=0 // pred_check_branch
    %28 = sbr.rel (0) target = $region21
  $region20: #{transition_down_forward.2} parent=0 // pred_region
    _
  $region21: #{transition_down_forward.2} parent=0 // pred_fallthru
    _
  // Predicated region
  $region22: #{transition_down_forward.2} parent=0 // pred_check
    _
  $region23: #{transition_down_forward.2} parent=0 // pred_check_branch
    %30 = sbr.rel (0) target = $region25
  $region24: #{transition_down_forward.2} parent=0 // pred_region
    _
  $region25: #{transition_down_forward.2} parent=0 // pred_fallthru
    _
  // Predicated region
  $region26: #{transition_down_forward.2} parent=0 // pred_check
    _
  $region27: #{transition_down_forward.2} parent=0 // pred_check_branch
    %32 = sbr.rel (0) target = $region29
  $region28: #{transition_down_forward.2} parent=0 // pred_region
    _
  $region29: #{transition_down_forward.2} parent=0 // pred_fallthru
    _
  // Predicated region
  $region30: #{transition_down_forward.2} parent=0 // pred_check
    _
  $region31: #{transition_down_forward.2} parent=0 // pred_check_branch
    %34 = sbr.rel (0) target = $region33
  $region32: #{transition_down_forward.2} parent=0 // pred_region
    _
  $region33: #{transition_down_forward.2} parent=0 // pred_fallthru
    _
  // Predicated region
  $region34: #{transition_down_forward.2} parent=0 // pred_check
    _
  $region35: #{transition_down_forward.2} parent=0 // pred_check_branch
    %36 = sbr.rel (0) target = $region37
  $region36: #{transition_down_forward.2} parent=0 // pred_region
    _
  $region37: #{transition_down_forward.2} parent=0 // pred_fallthru
    _
  // Predicated region
  $region38: #{transition_down_forward.2} parent=0 // pred_check
    _
  $region39: #{transition_down_forward.2} parent=0 // pred_check_branch
    %38 = sbr.rel (0) target = $region41
  $region40: #{transition_down_forward.2} parent=0 // pred_region
    _
  $region41: #{transition_down_forward.2} parent=0 // pred_fallthru
    _
  // Predicated region
  $region42: #{transition_down_forward.2} parent=0 // pred_check
    _
  $region43: #{transition_down_forward.2} parent=0 // pred_check_branch
    %40 = sbr.rel (0) target = $region45
  $region44: #{transition_down_forward.2} parent=0 // pred_region
    _
  $region45: #{transition_down_forward.2} parent=0 // pred_fallthru
    _
  // Predicated region
  $region46: #{transition_down_forward.2} parent=0 // pred_check
    _
  $region47: #{transition_down_forward.2} parent=0 // pred_check_branch
    %42 = sbr.rel (0) target = $region49
  $region48: #{transition_down_forward.2} parent=0 // pred_region
    _
  $region49: #{transition_down_forward.2} parent=0 // pred_fallthru
    _
  // Predicated region
  $region50: #{transition_down_forward.2} parent=0 // pred_check
    _
  $region51: #{transition_down_forward.2} parent=0 // pred_check_branch
    %44 = sbr.rel (0) target = $region53
  $region52: #{transition_down_forward.2} parent=0 // pred_region
    _
  $region53: #{transition_down_forward.2} parent=0 // pred_fallthru
    _
  // Predicated region
  $region54: #{transition_down_forward.2} parent=0 // pred_check
    _
  $region55: #{transition_down_forward.2} parent=0 // pred_check_branch
    %46 = sbr.rel (0) target = $region57
  $region56: #{transition_down_forward.2} parent=0 // pred_region
    _
  $region57: #{transition_down_forward.2} parent=0 // pred_fallthru
    _
  %p48 = scmp.eq.s32.totalorder 0, 0
  // Predicated region
  $region58: #{transition_down_forward.2} parent=0 // pred_check
    %p49 = pneg %p48
  $region59: #{transition_down_forward.2} parent=0 // pred_check_branch
    %51 = sbr.rel (%p49) target = $region61
  $region60: #{transition_down_forward.2} parent=0 // pred_region
    %52 = vst [vmem:[#allocation2] sm:$0xff] 0.0
  $region61: #{transition_down_forward.2} parent=0 // pred_fallthru
    _
  %v53 = vld [vmem:[%s1] sm:$0xff]
  %v54 = vld [vmem:[%s1 + $0x8] sm:$0xff]
  %v55 = vld [vmem:[%s1 + $0x10] sm:$0xff]
  %v56 = vld [vmem:[%s1 + $0x18] sm:$0xff]
  %v57 = vld [vmem:[%s1 + $0x20] sm:$0xff]
  %v58 = vld [vmem:[%s1 + $0x28] sm:$0xff]
  %v59 = vld [vmem:[%s1 + $0x30] sm:$0xff]
  %v60 = vld [vmem:[%s1 + $0x38] sm:$0xff]
  %v61 = vld [vmem:[%s7] sm:$0x1]
  %63 = vset.pattern.permute.xlu0 0
  %64 = vperm.xlu0 %63, %v53
  %v65 = vpop.permute.xlu0 %64
  %68 = vset.pattern.permute.xlu0 0
  %69 = vperm.xlu0 %68, %v54
  %v70 = vpop.permute.xlu0 %69
  %73 = vset.pattern.permute.xlu0 0
  %74 = vperm.xlu0 %73, %v55
  %v75 = vpop.permute.xlu0 %74
  %78 = vset.pattern.permute.xlu0 0
  %79 = vperm.xlu0 %78, %v56
  %v80 = vpop.permute.xlu0 %79
  %83 = vset.pattern.permute.xlu0 0
  %84 = vperm.xlu0 %83, %v57
  %v85 = vpop.permute.xlu0 %84
  %88 = vset.pattern.permute.xlu0 0
  %89 = vperm.xlu0 %88, %v58
  %v90 = vpop.permute.xlu0 %89
  %93 = vset.pattern.permute.xlu0 0
  %94 = vperm.xlu0 %93, %v59
  %v95 = vpop.permute.xlu0 %94
  %98 = vset.pattern.permute.xlu0 0
  %99 = vperm.xlu0 %98, %v60
  %v100 = vpop.permute.xlu0 %99
  %v103 = vlaneseq
  %v104 = vshrl.u32 %v103, 7
  %v105 = vsub.s32 0, %v104
  %v106 = vrot.slane %v61, %v105
  %v108 = vmul.f32 %v65, %v106
  %v109 = vmul.f32 %v70, %v106
  %v110 = vmul.f32 %v75, %v106
  %v111 = vmul.f32 %v80, %v106
  %v112 = vmul.f32 %v85, %v106
  %v113 = vmul.f32 %v90, %v106
  %v114 = vmul.f32 %v95, %v106
  %v115 = vmul.f32 %v100, %v106
  %v116 = vand.u32 2147483647, %v108
  %vm117 = vcmp.le.f32.partialorder %v116, 0.7853982
  %vm118 = vcmp.lt.s32.totalorder %v108, 0
  %v119 = vand.u32 %v108, 2139095040
  %v120 = vshrl.u32 %v119, 23
  %v121 = vsub.s32 %v120, 127
  %v122 = vand.u32 2147483647, %v108
  %v123 = vand.u32 %v122, 8388607
  %v124 = vor.u32 %v123, 8388608
  %v125 = vsub.s32 0, %v124
  %v126 = vadd.s32 %v121, 1
  %vm127 = vcmp.gt.s32.totalorder %v126, 0
  %v128 = vsel %vm127, %v126, 0
  %v129 = vshrl.u32 %v128, 5
  %v130 = vand.u32 %v128, 31
  %v131 = vsub.s32 32, %v130
  %v132 = vshrl.u32 683565275, %v131
  %v133 = vshll.u32 683565275, %v130
  %v134 = vshrl.u32 2475754826, %v131
  %v135 = vor.u32 %v133, %v134
  %v136 = vshll.u32 2475754826, %v130
  %v137 = vshrl.u32 2131351028, %v131
  %v138 = vor.u32 %v136, %v137
  %v139 = vshll.u32 2131351028, %v130
  %v140 = vshrl.u32 2102212464, %v131
  %v141 = vor.u32 %v139, %v140
  %v142 = vshll.u32 2102212464, %v130
  %v143 = vshrl.u32 920167782, %v131
  %v144 = vor.u32 %v142, %v143
  %v145 = vshll.u32 920167782, %v130
  %v146 = vshrl.u32 1326507024, %v131
  %v147 = vor.u32 %v145, %v146
  %vm148 = vcmp.lt.s32.totalorder %v129, 1
  %vm149 = vcmp.lt.s32.totalorder %v129, 2
  %vm150 = vcmp.lt.s32.totalorder %v129, 3
  %vm151 = vcmp.lt.s32.totalorder %v129, 4
  %v152 = vsel %vm148, %v132, %v135
  %v153 = vsel %vm151, %v141, 2102212464
  %v154 = vsel %vm150, %v138, %v153
  %v155 = vsel %vm149, %v152, %v154
  %v156 = vsel %vm148, %v135, %v138
  %v157 = vsel %vm151, %v144, 920167782
  %v158 = vsel %vm150, %v141, %v157
  %v159 = vsel %vm149, %v156, %v158
  %v160 = vsel %vm148, %v138, %v141
  %v161 = vsel %vm151, %v147, 1326507024
  %v162 = vsel %vm150, %v144, %v161
  %v163 = vsel %vm149, %v160, %v162
  %v164 = vshll.u32 %v124, 8
  %v165 = vmul.u32.u64.compose %v164, %v163
  %v166 = vextract.low.u32 %v165
  %v167 = vextract.high.u32 %v165
  %v168 = vmul.u32.u64.compose %v164, %v159
  %v169 = vextract.low.u32 %v168
  %v170 = vextract.high.u32 %v168
  %v171 = vmul.u32 %v164, %v155
  %v172 = vadd.s32 %v167, %v169
  %vm173 = vc.u32 %v167, %v169
  %v174 = vadd.s32 %v170, 1
  %v175 = vsel %vm173, %v174, %v170
  %v176 = vadd.s32 %v171, %v175
  %v177 = vadd.s32 %v176, 536870912
  %v178 = vshrl.u32 %v177, 30
  %v179 = vshll.u32 %v178, 30
  %v180 = vsub.s32 %v176, %v179
  %vm181 = vcmp.lt.s32.totalorder %v180, 0
  %v182 = vsub.s32 0, %v180
  %v183 = vsel %vm181, %v182, %v180
  %v184 = vclz %v183
  %v185 = vsub.s32 %v184, 2
  %vm186 = vcmp.gt.s32.totalorder 0, %v185
  %v187 = vsel %vm186, 0, %v185
  %v188 = vsub.s32 32, %v187
  %v189 = vshll.u32 %v180, %v187
  %v190 = vshrl.u32 %v172, %v188
  %v191 = vor.u32 %v189, %v190
  %v192 = vsub.s32 4294967266, %v187
  %v193 = vadd.s32 %v192, 127
  %v194 = vshll.u32 %v193, 23
  %v195 = vor.u32 4788187, %v194
  %v196 = vand.u32 2147483647, %v195
  %v198 = vcvt.s32.f32 %v191
  %v199 = vmul.f32 %v198, %v196
  %v200 = vxor.u32 %v199, 2147483648
  %v201 = vsel %vm118, %v200, %v199
  %v202 = vsub.s32 4, %v178
  %v203 = vsel %vm118, %v202, %v178
  %v204 = vsel %vm117, %v108, %v201
  %v205 = vsel %vm117, 0, %v203
  %v206 = vcosq.f32.pop %v204
  %v207 = vsinq.f32.pop %v204
  %vm208 = vweird.f32 %v108
  %v209 = vadd.s32 %v205, 3
  %v210 = vand.u32 %v209, 3
  %vm211 = vcmp.lt.s32.totalorder %v210, 2
  %vm212 = vcmp.eq.s32.totalorder %v210, 0
  %v213 = vxor.u32 %v207, 2147483648
  %v214 = vsel %vm212, %v206, %v213
  %vm215 = vcmp.eq.s32.totalorder %v210, 2
  %v216 = vxor.u32 %v206, 2147483648
  %v217 = vsel %vm215, %v216, %v207
  %v218 = vsel %vm211, %v214, %v217
  %v219 = vsel %vm208, nan, %v218
  %v220 = vand.u32 2147483647, %v109
  %vm221 = vcmp.le.f32.partialorder %v220, 0.7853982
  %vm222 = vcmp.lt.s32.totalorder %v109, 0
  %v223 = vand.u32 %v109, 2139095040
  %v224 = vshrl.u32 %v223, 23
  %v225 = vsub.s32 %v224, 127
  %v226 = vand.u32 2147483647, %v109
  %v227 = vand.u32 %v226, 8388607
  %v228 = vor.u32 %v227, 8388608
  %v229 = vsub.s32 0, %v228
  %v230 = vadd.s32 %v225, 1
  %vm231 = vcmp.gt.s32.totalorder %v230, 0
  %v232 = vsel %vm231, %v230, 0
  %v233 = vshrl.u32 %v232, 5
  %v234 = vand.u32 %v232, 31
  %v235 = vsub.s32 32, %v234
  %v236 = vshrl.u32 683565275, %v235
  %v237 = vshll.u32 683565275, %v234
  %v238 = vshrl.u32 2475754826, %v235
  %v239 = vor.u32 %v237, %v238
  %v240 = vshll.u32 2475754826, %v234
  %v241 = vshrl.u32 2131351028, %v235
  %v242 = vor.u32 %v240, %v241
  %v243 = vshll.u32 2131351028, %v234
  %v244 = vshrl.u32 2102212464, %v235
  %v245 = vor.u32 %v243, %v244
  %v246 = vshll.u32 2102212464, %v234
  %v247 = vshrl.u32 920167782, %v235
  %v248 = vor.u32 %v246, %v247
  %v249 = vshll.u32 920167782, %v234
  %v250 = vshrl.u32 1326507024, %v235
  %v251 = vor.u32 %v249, %v250
  %vm252 = vcmp.lt.s32.totalorder %v233, 1
  %vm253 = vcmp.lt.s32.totalorder %v233, 2
  %vm254 = vcmp.lt.s32.totalorder %v233, 3
  %vm255 = vcmp.lt.s32.totalorder %v233, 4
  %v256 = vsel %vm252, %v236, %v239
  %v257 = vsel %vm255, %v245, 2102212464
  %v258 = vsel %vm254, %v242, %v257
  %v259 = vsel %vm253, %v256, %v258
  %v260 = vsel %vm252, %v239, %v242
  %v261 = vsel %vm255, %v248, 920167782
  %v262 = vsel %vm254, %v245, %v261
  %v263 = vsel %vm253, %v260, %v262
  %v264 = vsel %vm252, %v242, %v245
  %v265 = vsel %vm255, %v251, 1326507024
  %v266 = vsel %vm254, %v248, %v265
  %v267 = vsel %vm253, %v264, %v266
  %v268 = vshll.u32 %v228, 8
  %v269 = vmul.u32.u64.compose %v268, %v267
  %v270 = vextract.low.u32 %v269
  %v271 = vextract.high.u32 %v269
  %v272 = vmul.u32.u64.compose %v268, %v263
  %v273 = vextract.low.u32 %v272
  %v274 = vextract.high.u32 %v272
  %v275 = vmul.u32 %v268, %v259
  %v276 = vadd.s32 %v271, %v273
  %vm277 = vc.u32 %v271, %v273
  %v278 = vadd.s32 %v274, 1
  %v279 = vsel %vm277, %v278, %v274
  %v280 = vadd.s32 %v275, %v279
  %v281 = vadd.s32 %v280, 536870912
  %v282 = vshrl.u32 %v281, 30
  %v283 = vshll.u32 %v282, 30
  %v284 = vsub.s32 %v280, %v283
  %vm285 = vcmp.lt.s32.totalorder %v284, 0
  %v286 = vsub.s32 0, %v284
  %v287 = vsel %vm285, %v286, %v284
  %v288 = vclz %v287
  %v289 = vsub.s32 %v288, 2
  %vm290 = vcmp.gt.s32.totalorder 0, %v289
  %v291 = vsel %vm290, 0, %v289
  %v292 = vsub.s32 32, %v291
  %v293 = vshll.u32 %v284, %v291
  %v294 = vshrl.u32 %v276, %v292
  %v295 = vor.u32 %v293, %v294
  %v296 = vsub.s32 4294967266, %v291
  %v297 = vadd.s32 %v296, 127
  %v298 = vshll.u32 %v297, 23
  %v299 = vor.u32 4788187, %v298
  %v300 = vand.u32 2147483647, %v299
  %v302 = vcvt.s32.f32 %v295
  %v303 = vmul.f32 %v302, %v300
  %v304 = vxor.u32 %v303, 2147483648
  %v305 = vsel %vm222, %v304, %v303
  %v306 = vsub.s32 4, %v282
  %v307 = vsel %vm222, %v306, %v282
  %v308 = vsel %vm221, %v109, %v305
  %v309 = vsel %vm221, 0, %v307
  %v310 = vcosq.f32.pop %v308
  %v311 = vsinq.f32.pop %v308
  %vm312 = vweird.f32 %v109
  %v313 = vadd.s32 %v309, 3
  %v314 = vand.u32 %v313, 3
  %vm315 = vcmp.lt.s32.totalorder %v314, 2
  %vm316 = vcmp.eq.s32.totalorder %v314, 0
  %v317 = vxor.u32 %v311, 2147483648
  %v318 = vsel %vm316, %v310, %v317
  %vm319 = vcmp.eq.s32.totalorder %v314, 2
  %v320 = vxor.u32 %v310, 2147483648
  %v321 = vsel %vm319, %v320, %v311
  %v322 = vsel %vm315, %v318, %v321
  %v323 = vsel %vm312, nan, %v322
  %v324 = vand.u32 2147483647, %v110
  %vm325 = vcmp.le.f32.partialorder %v324, 0.7853982
  %vm326 = vcmp.lt.s32.totalorder %v110, 0
  %v327 = vand.u32 %v110, 2139095040
  %v328 = vshrl.u32 %v327, 23
  %v329 = vsub.s32 %v328, 127
  %v330 = vand.u32 2147483647, %v110
  %v331 = vand.u32 %v330, 8388607
  %v332 = vor.u32 %v331, 8388608
  %v333 = vsub.s32 0, %v332
  %v334 = vadd.s32 %v329, 1
  %vm335 = vcmp.gt.s32.totalorder %v334, 0
  %v336 = vsel %vm335, %v334, 0
  %v337 = vshrl.u32 %v336, 5
  %v338 = vand.u32 %v336, 31
  %v339 = vsub.s32 32, %v338
  %v340 = vshrl.u32 683565275, %v339
  %v341 = vshll.u32 683565275, %v338
  %v342 = vshrl.u32 2475754826, %v339
  %v343 = vor.u32 %v341, %v342
  %v344 = vshll.u32 2475754826, %v338
  %v345 = vshrl.u32 2131351028, %v339
  %v346 = vor.u32 %v344, %v345
  %v347 = vshll.u32 2131351028, %v338
  %v348 = vshrl.u32 2102212464, %v339
  %v349 = vor.u32 %v347, %v348
  %v350 = vshll.u32 2102212464, %v338
  %v351 = vshrl.u32 920167782, %v339
  %v352 = vor.u32 %v350, %v351
  %v353 = vshll.u32 920167782, %v338
  %v354 = vshrl.u32 1326507024, %v339
  %v355 = vor.u32 %v353, %v354
  %vm356 = vcmp.lt.s32.totalorder %v337, 1
  %vm357 = vcmp.lt.s32.totalorder %v337, 2
  %vm358 = vcmp.lt.s32.totalorder %v337, 3
  %vm359 = vcmp.lt.s32.totalorder %v337, 4
  %v360 = vsel %vm356, %v340, %v343
  %v361 = vsel %vm359, %v349, 2102212464
  %v362 = vsel %vm358, %v346, %v361
  %v363 = vsel %vm357, %v360, %v362
  %v364 = vsel %vm356, %v343, %v346
  %v365 = vsel %vm359, %v352, 920167782
  %v366 = vsel %vm358, %v349, %v365
  %v367 = vsel %vm357, %v364, %v366
  %v368 = vsel %vm356, %v346, %v349
  %v369 = vsel %vm359, %v355, 1326507024
  %v370 = vsel %vm358, %v352, %v369
  %v371 = vsel %vm357, %v368, %v370
  %v372 = vshll.u32 %v332, 8
  %v373 = vmul.u32.u64.compose %v372, %v371
  %v374 = vextract.low.u32 %v373
  %v375 = vextract.high.u32 %v373
  %v376 = vmul.u32.u64.compose %v372, %v367
  %v377 = vextract.low.u32 %v376
  %v378 = vextract.high.u32 %v376
  %v379 = vmul.u32 %v372, %v363
  %v380 = vadd.s32 %v375, %v377
  %vm381 = vc.u32 %v375, %v377
  %v382 = vadd.s32 %v378, 1
  %v383 = vsel %vm381, %v382, %v378
  %v384 = vadd.s32 %v379, %v383
  %v385 = vadd.s32 %v384, 536870912
  %v386 = vshrl.u32 %v385, 30
  %v387 = vshll.u32 %v386, 30
  %v388 = vsub.s32 %v384, %v387
  %vm389 = vcmp.lt.s32.totalorder %v388, 0
  %v390 = vsub.s32 0, %v388
  %v391 = vsel %vm389, %v390, %v388
  %v392 = vclz %v391
  %v393 = vsub.s32 %v392, 2
  %vm394 = vcmp.gt.s32.totalorder 0, %v393
  %v395 = vsel %vm394, 0, %v393
  %v396 = vsub.s32 32, %v395
  %v397 = vshll.u32 %v388, %v395
  %v398 = vshrl.u32 %v380, %v396
  %v399 = vor.u32 %v397, %v398
  %v400 = vsub.s32 4294967266, %v395
  %v401 = vadd.s32 %v400, 127
  %v402 = vshll.u32 %v401, 23
  %v403 = vor.u32 4788187, %v402
  %v404 = vand.u32 2147483647, %v403
  %v406 = vcvt.s32.f32 %v399
  %v407 = vmul.f32 %v406, %v404
  %v408 = vxor.u32 %v407, 2147483648
  %v409 = vsel %vm326, %v408, %v407
  %v410 = vsub.s32 4, %v386
  %v411 = vsel %vm326, %v410, %v386
  %v412 = vsel %vm325, %v110, %v409
  %v413 = vsel %vm325, 0, %v411
  %v414 = vcosq.f32.pop %v412
  %v415 = vsinq.f32.pop %v412
  %vm416 = vweird.f32 %v110
  %v417 = vadd.s32 %v413, 3
  %v418 = vand.u32 %v417, 3
  %vm419 = vcmp.lt.s32.totalorder %v418, 2
  %vm420 = vcmp.eq.s32.totalorder %v418, 0
  %v421 = vxor.u32 %v415, 2147483648
  %v422 = vsel %vm420, %v414, %v421
  %vm423 = vcmp.eq.s32.totalorder %v418, 2
  %v424 = vxor.u32 %v414, 2147483648
  %v425 = vsel %vm423, %v424, %v415
  %v426 = vsel %vm419, %v422, %v425
  %v427 = vsel %vm416, nan, %v426
  %v428 = vand.u32 2147483647, %v111
  %vm429 = vcmp.le.f32.partialorder %v428, 0.7853982
  %vm430 = vcmp.lt.s32.totalorder %v111, 0
  %v431 = vand.u32 %v111, 2139095040
  %v432 = vshrl.u32 %v431, 23
  %v433 = vsub.s32 %v432, 127
  %v434 = vand.u32 2147483647, %v111
  %v435 = vand.u32 %v434, 8388607
  %v436 = vor.u32 %v435, 8388608
  %v437 = vsub.s32 0, %v436
  %v438 = vadd.s32 %v433, 1
  %vm439 = vcmp.gt.s32.totalorder %v438, 0
  %v440 = vsel %vm439, %v438, 0
  %v441 = vshrl.u32 %v440, 5
  %v442 = vand.u32 %v440, 31
  %v443 = vsub.s32 32, %v442
  %v444 = vshrl.u32 683565275, %v443
  %v445 = vshll.u32 683565275, %v442
  %v446 = vshrl.u32 2475754826, %v443
  %v447 = vor.u32 %v445, %v446
  %v448 = vshll.u32 2475754826, %v442
  %v449 = vshrl.u32 2131351028, %v443
  %v450 = vor.u32 %v448, %v449
  %v451 = vshll.u32 2131351028, %v442
  %v452 = vshrl.u32 2102212464, %v443
  %v453 = vor.u32 %v451, %v452
  %v454 = vshll.u32 2102212464, %v442
  %v455 = vshrl.u32 920167782, %v443
  %v456 = vor.u32 %v454, %v455
  %v457 = vshll.u32 920167782, %v442
  %v458 = vshrl.u32 1326507024, %v443
  %v459 = vor.u32 %v457, %v458
  %vm460 = vcmp.lt.s32.totalorder %v441, 1
  %vm461 = vcmp.lt.s32.totalorder %v441, 2
  %vm462 = vcmp.lt.s32.totalorder %v441, 3
  %vm463 = vcmp.lt.s32.totalorder %v441, 4
  %v464 = vsel %vm460, %v444, %v447
  %v465 = vsel %vm463, %v453, 2102212464
  %v466 = vsel %vm462, %v450, %v465
  %v467 = vsel %vm461, %v464, %v466
  %v468 = vsel %vm460, %v447, %v450
  %v469 = vsel %vm463, %v456, 920167782
  %v470 = vsel %vm462, %v453, %v469
  %v471 = vsel %vm461, %v468, %v470
  %v472 = vsel %vm460, %v450, %v453
  %v473 = vsel %vm463, %v459, 1326507024
  %v474 = vsel %vm462, %v456, %v473
  %v475 = vsel %vm461, %v472, %v474
  %v476 = vshll.u32 %v436, 8
  %v477 = vmul.u32.u64.compose %v476, %v475
  %v478 = vextract.low.u32 %v477
  %v479 = vextract.high.u32 %v477
  %v480 = vmul.u32.u64.compose %v476, %v471
  %v481 = vextract.low.u32 %v480
  %v482 = vextract.high.u32 %v480
  %v483 = vmul.u32 %v476, %v467
  %v484 = vadd.s32 %v479, %v481
  %vm485 = vc.u32 %v479, %v481
  %v486 = vadd.s32 %v482, 1
  %v487 = vsel %vm485, %v486, %v482
  %v488 = vadd.s32 %v483, %v487
  %v489 = vadd.s32 %v488, 536870912
  %v490 = vshrl.u32 %v489, 30
  %v491 = vshll.u32 %v490, 30
  %v492 = vsub.s32 %v488, %v491
  %vm493 = vcmp.lt.s32.totalorder %v492, 0
  %v494 = vsub.s32 0, %v492
  %v495 = vsel %vm493, %v494, %v492
  %v496 = vclz %v495
  %v497 = vsub.s32 %v496, 2
  %vm498 = vcmp.gt.s32.totalorder 0, %v497
  %v499 = vsel %vm498, 0, %v497
  %v500 = vsub.s32 32, %v499
  %v501 = vshll.u32 %v492, %v499
  %v502 = vshrl.u32 %v484, %v500
  %v503 = vor.u32 %v501, %v502
  %v504 = vsub.s32 4294967266, %v499
  %v505 = vadd.s32 %v504, 127
  %v506 = vshll.u32 %v505, 23
  %v507 = vor.u32 4788187, %v506
  %v508 = vand.u32 2147483647, %v507
  %v510 = vcvt.s32.f32 %v503
  %v511 = vmul.f32 %v510, %v508
  %v512 = vxor.u32 %v511, 2147483648
  %v513 = vsel %vm430, %v512, %v511
  %v514 = vsub.s32 4, %v490
  %v515 = vsel %vm430, %v514, %v490
  %v516 = vsel %vm429, %v111, %v513
  %v517 = vsel %vm429, 0, %v515
  %v518 = vcosq.f32.pop %v516
  %v519 = vsinq.f32.pop %v516
  %vm520 = vweird.f32 %v111
  %v521 = vadd.s32 %v517, 3
  %v522 = vand.u32 %v521, 3
  %vm523 = vcmp.lt.s32.totalorder %v522, 2
  %vm524 = vcmp.eq.s32.totalorder %v522, 0
  %v525 = vxor.u32 %v519, 2147483648
  %v526 = vsel %vm524, %v518, %v525
  %vm527 = vcmp.eq.s32.totalorder %v522, 2
  %v528 = vxor.u32 %v518, 2147483648
  %v529 = vsel %vm527, %v528, %v519
  %v530 = vsel %vm523, %v526, %v529
  %v531 = vsel %vm520, nan, %v530
  %v532 = vand.u32 2147483647, %v112
  %vm533 = vcmp.le.f32.partialorder %v532, 0.7853982
  %vm534 = vcmp.lt.s32.totalorder %v112, 0
  %v535 = vand.u32 %v112, 2139095040
  %v536 = vshrl.u32 %v535, 23
  %v537 = vsub.s32 %v536, 127
  %v538 = vand.u32 2147483647, %v112
  %v539 = vand.u32 %v538, 8388607
  %v540 = vor.u32 %v539, 8388608
  %v541 = vsub.s32 0, %v540
  %v542 = vadd.s32 %v537, 1
  %vm543 = vcmp.gt.s32.totalorder %v542, 0
  %v544 = vsel %vm543, %v542, 0
  %v545 = vshrl.u32 %v544, 5
  %v546 = vand.u32 %v544, 31
  %v547 = vsub.s32 32, %v546
  %v548 = vshrl.u32 683565275, %v547
  %v549 = vshll.u32 683565275, %v546
  %v550 = vshrl.u32 2475754826, %v547
  %v551 = vor.u32 %v549, %v550
  %v552 = vshll.u32 2475754826, %v546
  %v553 = vshrl.u32 2131351028, %v547
  %v554 = vor.u32 %v552, %v553
  %v555 = vshll.u32 2131351028, %v546
  %v556 = vshrl.u32 2102212464, %v547
  %v557 = vor.u32 %v555, %v556
  %v558 = vshll.u32 2102212464, %v546
  %v559 = vshrl.u32 920167782, %v547
  %v560 = vor.u32 %v558, %v559
  %v561 = vshll.u32 920167782, %v546
  %v562 = vshrl.u32 1326507024, %v547
  %v563 = vor.u32 %v561, %v562
  %vm564 = vcmp.lt.s32.totalorder %v545, 1
  %vm565 = vcmp.lt.s32.totalorder %v545, 2
  %vm566 = vcmp.lt.s32.totalorder %v545, 3
  %vm567 = vcmp.lt.s32.totalorder %v545, 4
  %v568 = vsel %vm564, %v548, %v551
  %v569 = vsel %vm567, %v557, 2102212464
  %v570 = vsel %vm566, %v554, %v569
  %v571 = vsel %vm565, %v568, %v570
  %v572 = vsel %vm564, %v551, %v554
  %v573 = vsel %vm567, %v560, 920167782
  %v574 = vsel %vm566, %v557, %v573
  %v575 = vsel %vm565, %v572, %v574
  %v576 = vsel %vm564, %v554, %v557
  %v577 = vsel %vm567, %v563, 1326507024
  %v578 = vsel %vm566, %v560, %v577
  %v579 = vsel %vm565, %v576, %v578
  %v580 = vshll.u32 %v540, 8
  %v581 = vmul.u32.u64.compose %v580, %v579
  %v582 = vextract.low.u32 %v581
  %v583 = vextract.high.u32 %v581
  %v584 = vmul.u32.u64.compose %v580, %v575
  %v585 = vextract.low.u32 %v584
  %v586 = vextract.high.u32 %v584
  %v587 = vmul.u32 %v580, %v571
  %v588 = vadd.s32 %v583, %v585
  %vm589 = vc.u32 %v583, %v585
  %v590 = vadd.s32 %v586, 1
  %v591 = vsel %vm589, %v590, %v586
  %v592 = vadd.s32 %v587, %v591
  %v593 = vadd.s32 %v592, 536870912
  %v594 = vshrl.u32 %v593, 30
  %v595 = vshll.u32 %v594, 30
  %v596 = vsub.s32 %v592, %v595
  %vm597 = vcmp.lt.s32.totalorder %v596, 0
  %v598 = vsub.s32 0, %v596
  %v599 = vsel %vm597, %v598, %v596
  %v600 = vclz %v599
  %v601 = vsub.s32 %v600, 2
  %vm602 = vcmp.gt.s32.totalorder 0, %v601
  %v603 = vsel %vm602, 0, %v601
  %v604 = vsub.s32 32, %v603
  %v605 = vshll.u32 %v596, %v603
  %v606 = vshrl.u32 %v588, %v604
  %v607 = vor.u32 %v605, %v606
  %v608 = vsub.s32 4294967266, %v603
  %v609 = vadd.s32 %v608, 127
  %v610 = vshll.u32 %v609, 23
  %v611 = vor.u32 4788187, %v610
  %v612 = vand.u32 2147483647, %v611
  %v614 = vcvt.s32.f32 %v607
  %v615 = vmul.f32 %v614, %v612
  %v616 = vxor.u32 %v615, 2147483648
  %v617 = vsel %vm534, %v616, %v615
  %v618 = vsub.s32 4, %v594
  %v619 = vsel %vm534, %v618, %v594
  %v620 = vsel %vm533, %v112, %v617
  %v621 = vsel %vm533, 0, %v619
  %v622 = vcosq.f32.pop %v620
  %v623 = vsinq.f32.pop %v620
  %vm624 = vweird.f32 %v112
  %v625 = vadd.s32 %v621, 3
  %v626 = vand.u32 %v625, 3
  %vm627 = vcmp.lt.s32.totalorder %v626, 2
  %vm628 = vcmp.eq.s32.totalorder %v626, 0
  %v629 = vxor.u32 %v623, 2147483648
  %v630 = vsel %vm628, %v622, %v629
  %vm631 = vcmp.eq.s32.totalorder %v626, 2
  %v632 = vxor.u32 %v622, 2147483648
  %v633 = vsel %vm631, %v632, %v623
  %v634 = vsel %vm627, %v630, %v633
  %v635 = vsel %vm624, nan, %v634
  %v636 = vand.u32 2147483647, %v113
  %vm637 = vcmp.le.f32.partialorder %v636, 0.7853982
  %vm638 = vcmp.lt.s32.totalorder %v113, 0
  %v639 = vand.u32 %v113, 2139095040
  %v640 = vshrl.u32 %v639, 23
  %v641 = vsub.s32 %v640, 127
  %v642 = vand.u32 2147483647, %v113
  %v643 = vand.u32 %v642, 8388607
  %v644 = vor.u32 %v643, 8388608
  %v645 = vsub.s32 0, %v644
  %v646 = vadd.s32 %v641, 1
  %vm647 = vcmp.gt.s32.totalorder %v646, 0
  %v648 = vsel %vm647, %v646, 0
  %v649 = vshrl.u32 %v648, 5
  %v650 = vand.u32 %v648, 31
  %v651 = vsub.s32 32, %v650
  %v652 = vshrl.u32 683565275, %v651
  %v653 = vshll.u32 683565275, %v650
  %v654 = vshrl.u32 2475754826, %v651
  %v655 = vor.u32 %v653, %v654
  %v656 = vshll.u32 2475754826, %v650
  %v657 = vshrl.u32 2131351028, %v651
  %v658 = vor.u32 %v656, %v657
  %v659 = vshll.u32 2131351028, %v650
  %v660 = vshrl.u32 2102212464, %v651
  %v661 = vor.u32 %v659, %v660
  %v662 = vshll.u32 2102212464, %v650
  %v663 = vshrl.u32 920167782, %v651
  %v664 = vor.u32 %v662, %v663
  %v665 = vshll.u32 920167782, %v650
  %v666 = vshrl.u32 1326507024, %v651
  %v667 = vor.u32 %v665, %v666
  %vm668 = vcmp.lt.s32.totalorder %v649, 1
  %vm669 = vcmp.lt.s32.totalorder %v649, 2
  %vm670 = vcmp.lt.s32.totalorder %v649, 3
  %vm671 = vcmp.lt.s32.totalorder %v649, 4
  %v672 = vsel %vm668, %v652, %v655
  %v673 = vsel %vm671, %v661, 2102212464
  %v674 = vsel %vm670, %v658, %v673
  %v675 = vsel %vm669, %v672, %v674
  %v676 = vsel %vm668, %v655, %v658
  %v677 = vsel %vm671, %v664, 920167782
  %v678 = vsel %vm670, %v661, %v677
  %v679 = vsel %vm669, %v676, %v678
  %v680 = vsel %vm668, %v658, %v661
  %v681 = vsel %vm671, %v667, 1326507024
  %v682 = vsel %vm670, %v664, %v681
  %v683 = vsel %vm669, %v680, %v682
  %v684 = vshll.u32 %v644, 8
  %v685 = vmul.u32.u64.compose %v684, %v683
  %v686 = vextract.low.u32 %v685
  %v687 = vextract.high.u32 %v685
  %v688 = vmul.u32.u64.compose %v684, %v679
  %v689 = vextract.low.u32 %v688
  %v690 = vextract.high.u32 %v688
  %v691 = vmul.u32 %v684, %v675
  %v692 = vadd.s32 %v687, %v689
  %vm693 = vc.u32 %v687, %v689
  %v694 = vadd.s32 %v690, 1
  %v695 = vsel %vm693, %v694, %v690
  %v696 = vadd.s32 %v691, %v695
  %v697 = vadd.s32 %v696, 536870912
  %v698 = vshrl.u32 %v697, 30
  %v699 = vshll.u32 %v698, 30
  %v700 = vsub.s32 %v696, %v699
  %vm701 = vcmp.lt.s32.totalorder %v700, 0
  %v702 = vsub.s32 0, %v700
  %v703 = vsel %vm701, %v702, %v700
  %v704 = vclz %v703
  %v705 = vsub.s32 %v704, 2
  %vm706 = vcmp.gt.s32.totalorder 0, %v705
  %v707 = vsel %vm706, 0, %v705
  %v708 = vsub.s32 32, %v707
  %v709 = vshll.u32 %v700, %v707
  %v710 = vshrl.u32 %v692, %v708
  %v711 = vor.u32 %v709, %v710
  %v712 = vsub.s32 4294967266, %v707
  %v713 = vadd.s32 %v712, 127
  %v714 = vshll.u32 %v713, 23
  %v715 = vor.u32 4788187, %v714
  %v716 = vand.u32 2147483647, %v715
  %v718 = vcvt.s32.f32 %v711
  %v719 = vmul.f32 %v718, %v716
  %v720 = vxor.u32 %v719, 2147483648
  %v721 = vsel %vm638, %v720, %v719
  %v722 = vsub.s32 4, %v698
  %v723 = vsel %vm638, %v722, %v698
  %v724 = vsel %vm637, %v113, %v721
  %v725 = vsel %vm637, 0, %v723
  %v726 = vcosq.f32.pop %v724
  %v727 = vsinq.f32.pop %v724
  %vm728 = vweird.f32 %v113
  %v729 = vadd.s32 %v725, 3
  %v730 = vand.u32 %v729, 3
  %vm731 = vcmp.lt.s32.totalorder %v730, 2
  %vm732 = vcmp.eq.s32.totalorder %v730, 0
  %v733 = vxor.u32 %v727, 2147483648
  %v734 = vsel %vm732, %v726, %v733
  %vm735 = vcmp.eq.s32.totalorder %v730, 2
  %v736 = vxor.u32 %v726, 2147483648
  %v737 = vsel %vm735, %v736, %v727
  %v738 = vsel %vm731, %v734, %v737
  %v739 = vsel %vm728, nan, %v738
  %v740 = vand.u32 2147483647, %v114
  %vm741 = vcmp.le.f32.partialorder %v740, 0.7853982
  %vm742 = vcmp.lt.s32.totalorder %v114, 0
  %v743 = vand.u32 %v114, 2139095040
  %v744 = vshrl.u32 %v743, 23
  %v745 = vsub.s32 %v744, 127
  %v746 = vand.u32 2147483647, %v114
  %v747 = vand.u32 %v746, 8388607
  %v748 = vor.u32 %v747, 8388608
  %v749 = vsub.s32 0, %v748
  %v750 = vadd.s32 %v745, 1
  %vm751 = vcmp.gt.s32.totalorder %v750, 0
  %v752 = vsel %vm751, %v750, 0
  %v753 = vshrl.u32 %v752, 5
  %v754 = vand.u32 %v752, 31
  %v755 = vsub.s32 32, %v754
  %v756 = vshrl.u32 683565275, %v755
  %v757 = vshll.u32 683565275, %v754
  %v758 = vshrl.u32 2475754826, %v755
  %v759 = vor.u32 %v757, %v758
  %v760 = vshll.u32 2475754826, %v754
  %v761 = vshrl.u32 2131351028, %v755
  %v762 = vor.u32 %v760, %v761
  %v763 = vshll.u32 2131351028, %v754
  %v764 = vshrl.u32 2102212464, %v755
  %v765 = vor.u32 %v763, %v764
  %v766 = vshll.u32 2102212464, %v754
  %v767 = vshrl.u32 920167782, %v755
  %v768 = vor.u32 %v766, %v767
  %v769 = vshll.u32 920167782, %v754
  %v770 = vshrl.u32 1326507024, %v755
  %v771 = vor.u32 %v769, %v770
  %vm772 = vcmp.lt.s32.totalorder %v753, 1
  %vm773 = vcmp.lt.s32.totalorder %v753, 2
  %vm774 = vcmp.lt.s32.totalorder %v753, 3
  %vm775 = vcmp.lt.s32.totalorder %v753, 4
  %v776 = vsel %vm772, %v756, %v759
  %v777 = vsel %vm775, %v765, 2102212464
  %v778 = vsel %vm774, %v762, %v777
  %v779 = vsel %vm773, %v776, %v778
  %v780 = vsel %vm772, %v759, %v762
  %v781 = vsel %vm775, %v768, 920167782
  %v782 = vsel %vm774, %v765, %v781
  %v783 = vsel %vm773, %v780, %v782
  %v784 = vsel %vm772, %v762, %v765
  %v785 = vsel %vm775, %v771, 1326507024
  %v786 = vsel %vm774, %v768, %v785
  %v787 = vsel %vm773, %v784, %v786
  %v788 = vshll.u32 %v748, 8
  %v789 = vmul.u32.u64.compose %v788, %v787
  %v790 = vextract.low.u32 %v789
  %v791 = vextract.high.u32 %v789
  %v792 = vmul.u32.u64.compose %v788, %v783
  %v793 = vextract.low.u32 %v792
  %v794 = vextract.high.u32 %v792
  %v795 = vmul.u32 %v788, %v779
  %v796 = vadd.s32 %v791, %v793
  %vm797 = vc.u32 %v791, %v793
  %v798 = vadd.s32 %v794, 1
  %v799 = vsel %vm797, %v798, %v794
  %v800 = vadd.s32 %v795, %v799
  %v801 = vadd.s32 %v800, 536870912
  %v802 = vshrl.u32 %v801, 30
  %v803 = vshll.u32 %v802, 30
  %v804 = vsub.s32 %v800, %v803
  %vm805 = vcmp.lt.s32.totalorder %v804, 0
  %v806 = vsub.s32 0, %v804
  %v807 = vsel %vm805, %v806, %v804
  %v808 = vclz %v807
  %v809 = vsub.s32 %v808, 2
  %vm810 = vcmp.gt.s32.totalorder 0, %v809
  %v811 = vsel %vm810, 0, %v809
  %v812 = vsub.s32 32, %v811
  %v813 = vshll.u32 %v804, %v811
  %v814 = vshrl.u32 %v796, %v812
  %v815 = vor.u32 %v813, %v814
  %v816 = vsub.s32 4294967266, %v811
  %v817 = vadd.s32 %v816, 127
  %v818 = vshll.u32 %v817, 23
  %v819 = vor.u32 4788187, %v818
  %v820 = vand.u32 2147483647, %v819
  %v822 = vcvt.s32.f32 %v815
  %v823 = vmul.f32 %v822, %v820
  %v824 = vxor.u32 %v823, 2147483648
  %v825 = vsel %vm742, %v824, %v823
  %v826 = vsub.s32 4, %v802
  %v827 = vsel %vm742, %v826, %v802
  %v828 = vsel %vm741, %v114, %v825
  %v829 = vsel %vm741, 0, %v827
  %v830 = vcosq.f32.pop %v828
  %v831 = vsinq.f32.pop %v828
  %vm832 = vweird.f32 %v114
  %v833 = vadd.s32 %v829, 3
  %v834 = vand.u32 %v833, 3
  %vm835 = vcmp.lt.s32.totalorder %v834, 2
  %vm836 = vcmp.eq.s32.totalorder %v834, 0
  %v837 = vxor.u32 %v831, 2147483648
  %v838 = vsel %vm836, %v830, %v837
  %vm839 = vcmp.eq.s32.totalorder %v834, 2
  %v840 = vxor.u32 %v830, 2147483648
  %v841 = vsel %vm839, %v840, %v831
  %v842 = vsel %vm835, %v838, %v841
  %v843 = vsel %vm832, nan, %v842
  %v844 = vand.u32 2147483647, %v115
  %vm845 = vcmp.le.f32.partialorder %v844, 0.7853982
  %vm846 = vcmp.lt.s32.totalorder %v115, 0
  %v847 = vand.u32 %v115, 2139095040
  %v848 = vshrl.u32 %v847, 23
  %v849 = vsub.s32 %v848, 127
  %v850 = vand.u32 2147483647, %v115
  %v851 = vand.u32 %v850, 8388607
  %v852 = vor.u32 %v851, 8388608
  %v853 = vsub.s32 0, %v852
  %v854 = vadd.s32 %v849, 1
  %vm855 = vcmp.gt.s32.totalorder %v854, 0
  %v856 = vsel %vm855, %v854, 0
  %v857 = vshrl.u32 %v856, 5
  %v858 = vand.u32 %v856, 31
  %v859 = vsub.s32 32, %v858
  %v860 = vshrl.u32 683565275, %v859
  %v861 = vshll.u32 683565275, %v858
  %v862 = vshrl.u32 2475754826, %v859
  %v863 = vor.u32 %v861, %v862
  %v864 = vshll.u32 2475754826, %v858
  %v865 = vshrl.u32 2131351028, %v859
  %v866 = vor.u32 %v864, %v865
  %v867 = vshll.u32 2131351028, %v858
  %v868 = vshrl.u32 2102212464, %v859
  %v869 = vor.u32 %v867, %v868
  %v870 = vshll.u32 2102212464, %v858
  %v871 = vshrl.u32 920167782, %v859
  %v872 = vor.u32 %v870, %v871
  %v873 = vshll.u32 920167782, %v858
  %v874 = vshrl.u32 1326507024, %v859
  %v875 = vor.u32 %v873, %v874
  %vm876 = vcmp.lt.s32.totalorder %v857, 1
  %vm877 = vcmp.lt.s32.totalorder %v857, 2
  %vm878 = vcmp.lt.s32.totalorder %v857, 3
  %vm879 = vcmp.lt.s32.totalorder %v857, 4
  %v880 = vsel %vm876, %v860, %v863
  %v881 = vsel %vm879, %v869, 2102212464
  %v882 = vsel %vm878, %v866, %v881
  %v883 = vsel %vm877, %v880, %v882
  %v884 = vsel %vm876, %v863, %v866
  %v885 = vsel %vm879, %v872, 920167782
  %v886 = vsel %vm878, %v869, %v885
  %v887 = vsel %vm877, %v884, %v886
  %v888 = vsel %vm876, %v866, %v869
  %v889 = vsel %vm879, %v875, 1326507024
  %v890 = vsel %vm878, %v872, %v889
  %v891 = vsel %vm877, %v888, %v890
  %v892 = vshll.u32 %v852, 8
  %v893 = vmul.u32.u64.compose %v892, %v891
  %v894 = vextract.low.u32 %v893
  %v895 = vextract.high.u32 %v893
  %v896 = vmul.u32.u64.compose %v892, %v887
  %v897 = vextract.low.u32 %v896
  %v898 = vextract.high.u32 %v896
  %v899 = vmul.u32 %v892, %v883
  %v900 = vadd.s32 %v895, %v897
  %vm901 = vc.u32 %v895, %v897
  %v902 = vadd.s32 %v898, 1
  %v903 = vsel %vm901, %v902, %v898
  %v904 = vadd.s32 %v899, %v903
  %v905 = vadd.s32 %v904, 536870912
  %v906 = vshrl.u32 %v905, 30
  %v907 = vshll.u32 %v906, 30
  %v908 = vsub.s32 %v904, %v907
  %vm909 = vcmp.lt.s32.totalorder %v908, 0
  %v910 = vsub.s32 0, %v908
  %v911 = vsel %vm909, %v910, %v908
  %v912 = vclz %v911
  %v913 = vsub.s32 %v912, 2
  %vm914 = vcmp.gt.s32.totalorder 0, %v913
  %v915 = vsel %vm914, 0, %v913
  %v916 = vsub.s32 32, %v915
  %v917 = vshll.u32 %v908, %v915
  %v918 = vshrl.u32 %v900, %v916
  %v919 = vor.u32 %v917, %v918
  %v920 = vsub.s32 4294967266, %v915
  %v921 = vadd.s32 %v920, 127
  %v922 = vshll.u32 %v921, 23
  %v923 = vor.u32 4788187, %v922
  %v924 = vand.u32 2147483647, %v923
  %v926 = vcvt.s32.f32 %v919
  %v927 = vmul.f32 %v926, %v924
  %v928 = vxor.u32 %v927, 2147483648
  %v929 = vsel %vm846, %v928, %v927
  %v930 = vsub.s32 4, %v906
  %v931 = vsel %vm846, %v930, %v906
  %v932 = vsel %vm845, %v115, %v929
  %v933 = vsel %vm845, 0, %v931
  %v934 = vcosq.f32.pop %v932
  %v935 = vsinq.f32.pop %v932
  %vm936 = vweird.f32 %v115
  %v937 = vadd.s32 %v933, 3
  %v938 = vand.u32 %v937, 3
  %vm939 = vcmp.lt.s32.totalorder %v938, 2
  %vm940 = vcmp.eq.s32.totalorder %v938, 0
  %v941 = vxor.u32 %v935, 2147483648
  %v942 = vsel %vm940, %v934, %v941
  %vm943 = vcmp.eq.s32.totalorder %v938, 2
  %v944 = vxor.u32 %v934, 2147483648
  %v945 = vsel %vm943, %v944, %v935
  %v946 = vsel %vm939, %v942, %v945
  %v947 = vsel %vm936, nan, %v946
  %v948 = vpack.c.bf16 %v323, %v219
  %v949 = vpack.c.bf16 %v531, %v427
  %v950 = vpack.c.bf16 %v739, %v635
  %v951 = vpack.c.bf16 %v947, %v843
  %v952 = vand.u32 2147483647, %v108
  %vm953 = vcmp.le.f32.partialorder %v952, 0.7853982
  %vm954 = vcmp.lt.s32.totalorder %v108, 0
  %v955 = vand.u32 %v108, 2139095040
  %v956 = vshrl.u32 %v955, 23
  %v957 = vsub.s32 %v956, 127
  %v958 = vand.u32 2147483647, %v108
  %v959 = vand.u32 %v958, 8388607
  %v960 = vor.u32 %v959, 8388608
  %v961 = vsub.s32 0, %v960
  %v962 = vadd.s32 %v957, 1
  %vm963 = vcmp.gt.s32.totalorder %v962, 0
  %v964 = vsel %vm963, %v962, 0
  %v965 = vshrl.u32 %v964, 5
  %v966 = vand.u32 %v964, 31
  %v967 = vsub.s32 32, %v966
  %v968 = vshrl.u32 683565275, %v967
  %v969 = vshll.u32 683565275, %v966
  %v970 = vshrl.u32 2475754826, %v967
  %v971 = vor.u32 %v969, %v970
  %v972 = vshll.u32 2475754826, %v966
  %v973 = vshrl.u32 2131351028, %v967
  %v974 = vor.u32 %v972, %v973
  %v975 = vshll.u32 2131351028, %v966
  %v976 = vshrl.u32 2102212464, %v967
  %v977 = vor.u32 %v975, %v976
  %v978 = vshll.u32 2102212464, %v966
  %v979 = vshrl.u32 920167782, %v967
  %v980 = vor.u32 %v978, %v979
  %v981 = vshll.u32 920167782, %v966
  %v982 = vshrl.u32 1326507024, %v967
  %v983 = vor.u32 %v981, %v982
  %vm984 = vcmp.lt.s32.totalorder %v965, 1
  %vm985 = vcmp.lt.s32.totalorder %v965, 2
  %vm986 = vcmp.lt.s32.totalorder %v965, 3
  %vm987 = vcmp.lt.s32.totalorder %v965, 4
  %v988 = vsel %vm984, %v968, %v971
  %v989 = vsel %vm987, %v977, 2102212464
  %v990 = vsel %vm986, %v974, %v989
  %v991 = vsel %vm985, %v988, %v990
  %v992 = vsel %vm984, %v971, %v974
  %v993 = vsel %vm987, %v980, 920167782
  %v994 = vsel %vm986, %v977, %v993
  %v995 = vsel %vm985, %v992, %v994
  %v996 = vsel %vm984, %v974, %v977
  %v997 = vsel %vm987, %v983, 1326507024
  %v998 = vsel %vm986, %v980, %v997
  %v999 = vsel %vm985, %v996, %v998
  %v1000 = vshll.u32 %v960, 8
  %v1001 = vmul.u32.u64.compose %v1000, %v999
  %v1002 = vextract.low.u32 %v1001
  %v1003 = vextract.high.u32 %v1001
  %v1004 = vmul.u32.u64.compose %v1000, %v995
  %v1005 = vextract.low.u32 %v1004
  %v1006 = vextract.high.u32 %v1004
  %v1007 = vmul.u32 %v1000, %v991
  %v1008 = vadd.s32 %v1003, %v1005
  %vm1009 = vc.u32 %v1003, %v1005
  %v1010 = vadd.s32 %v1006, 1
  %v1011 = vsel %vm1009, %v1010, %v1006
  %v1012 = vadd.s32 %v1007, %v1011
  %v1013 = vadd.s32 %v1012, 536870912
  %v1014 = vshrl.u32 %v1013, 30
  %v1015 = vshll.u32 %v1014, 30
  %v1016 = vsub.s32 %v1012, %v1015
  %vm1017 = vcmp.lt.s32.totalorder %v1016, 0
  %v1018 = vsub.s32 0, %v1016
  %v1019 = vsel %vm1017, %v1018, %v1016
  %v1020 = vclz %v1019
  %v1021 = vsub.s32 %v1020, 2
  %vm1022 = vcmp.gt.s32.totalorder 0, %v1021
  %v1023 = vsel %vm1022, 0, %v1021
  %v1024 = vsub.s32 32, %v1023
  %v1025 = vshll.u32 %v1016, %v1023
  %v1026 = vshrl.u32 %v1008, %v1024
  %v1027 = vor.u32 %v1025, %v1026
  %v1028 = vsub.s32 4294967266, %v1023
  %v1029 = vadd.s32 %v1028, 127
  %v1030 = vshll.u32 %v1029, 23
  %v1031 = vor.u32 4788187, %v1030
  %v1032 = vand.u32 2147483647, %v1031
  %v1034 = vcvt.s32.f32 %v1027
  %v1035 = vmul.f32 %v1034, %v1032
  %v1036 = vxor.u32 %v1035, 2147483648
  %v1037 = vsel %vm954, %v1036, %v1035
  %v1038 = vsub.s32 4, %v1014
  %v1039 = vsel %vm954, %v1038, %v1014
  %v1040 = vsel %vm953, %v108, %v1037
  %v1041 = vsel %vm953, 0, %v1039
  %v1042 = vcosq.f32.pop %v1040
  %v1043 = vsinq.f32.pop %v1040
  %vm1044 = vweird.f32 %v108
  %v1045 = vand.u32 %v1041, 3
  %vm1046 = vcmp.lt.s32.totalorder %v1045, 2
  %vm1047 = vcmp.eq.s32.totalorder %v1045, 0
  %v1048 = vxor.u32 %v1043, 2147483648
  %v1049 = vsel %vm1047, %v1042, %v1048
  %vm1050 = vcmp.eq.s32.totalorder %v1045, 2
  %v1051 = vxor.u32 %v1042, 2147483648
  %v1052 = vsel %vm1050, %v1051, %v1043
  %v1053 = vsel %vm1046, %v1049, %v1052
  %v1054 = vsel %vm1044, nan, %v1053
  %v1055 = vand.u32 2147483647, %v109
  %vm1056 = vcmp.le.f32.partialorder %v1055, 0.7853982
  %vm1057 = vcmp.lt.s32.totalorder %v109, 0
  %v1058 = vand.u32 %v109, 2139095040
  %v1059 = vshrl.u32 %v1058, 23
  %v1060 = vsub.s32 %v1059, 127
  %v1061 = vand.u32 2147483647, %v109
  %v1062 = vand.u32 %v1061, 8388607
  %v1063 = vor.u32 %v1062, 8388608
  %v1064 = vsub.s32 0, %v1063
  %v1065 = vadd.s32 %v1060, 1
  %vm1066 = vcmp.gt.s32.totalorder %v1065, 0
  %v1067 = vsel %vm1066, %v1065, 0
  %v1068 = vshrl.u32 %v1067, 5
  %v1069 = vand.u32 %v1067, 31
  %v1070 = vsub.s32 32, %v1069
  %v1071 = vshrl.u32 683565275, %v1070
  %v1072 = vshll.u32 683565275, %v1069
  %v1073 = vshrl.u32 2475754826, %v1070
  %v1074 = vor.u32 %v1072, %v1073
  %v1075 = vshll.u32 2475754826, %v1069
  %v1076 = vshrl.u32 2131351028, %v1070
  %v1077 = vor.u32 %v1075, %v1076
  %v1078 = vshll.u32 2131351028, %v1069
  %v1079 = vshrl.u32 2102212464, %v1070
  %v1080 = vor.u32 %v1078, %v1079
  %v1081 = vshll.u32 2102212464, %v1069
  %v1082 = vshrl.u32 920167782, %v1070
  %v1083 = vor.u32 %v1081, %v1082
  %v1084 = vshll.u32 920167782, %v1069
  %v1085 = vshrl.u32 1326507024, %v1070
  %v1086 = vor.u32 %v1084, %v1085
  %vm1087 = vcmp.lt.s32.totalorder %v1068, 1
  %vm1088 = vcmp.lt.s32.totalorder %v1068, 2
  %vm1089 = vcmp.lt.s32.totalorder %v1068, 3
  %vm1090 = vcmp.lt.s32.totalorder %v1068, 4
  %v1091 = vsel %vm1087, %v1071, %v1074
  %v1092 = vsel %vm1090, %v1080, 2102212464
  %v1093 = vsel %vm1089, %v1077, %v1092
  %v1094 = vsel %vm1088, %v1091, %v1093
  %v1095 = vsel %vm1087, %v1074, %v1077
  %v1096 = vsel %vm1090, %v1083, 920167782
  %v1097 = vsel %vm1089, %v1080, %v1096
  %v1098 = vsel %vm1088, %v1095, %v1097
  %v1099 = vsel %vm1087, %v1077, %v1080
  %v1100 = vsel %vm1090, %v1086, 1326507024
  %v1101 = vsel %vm1089, %v1083, %v1100
  %v1102 = vsel %vm1088, %v1099, %v1101
  %v1103 = vshll.u32 %v1063, 8
  %v1104 = vmul.u32.u64.compose %v1103, %v1102
  %v1105 = vextract.low.u32 %v1104
  %v1106 = vextract.high.u32 %v1104
  %v1107 = vmul.u32.u64.compose %v1103, %v1098
  %v1108 = vextract.low.u32 %v1107
  %v1109 = vextract.high.u32 %v1107
  %v1110 = vmul.u32 %v1103, %v1094
  %v1111 = vadd.s32 %v1106, %v1108
  %vm1112 = vc.u32 %v1106, %v1108
  %v1113 = vadd.s32 %v1109, 1
  %v1114 = vsel %vm1112, %v1113, %v1109
  %v1115 = vadd.s32 %v1110, %v1114
  %v1116 = vadd.s32 %v1115, 536870912
  %v1117 = vshrl.u32 %v1116, 30
  %v1118 = vshll.u32 %v1117, 30
  %v1119 = vsub.s32 %v1115, %v1118
  %vm1120 = vcmp.lt.s32.totalorder %v1119, 0
  %v1121 = vsub.s32 0, %v1119
  %v1122 = vsel %vm1120, %v1121, %v1119
  %v1123 = vclz %v1122
  %v1124 = vsub.s32 %v1123, 2
  %vm1125 = vcmp.gt.s32.totalorder 0, %v1124
  %v1126 = vsel %vm1125, 0, %v1124
  %v1127 = vsub.s32 32, %v1126
  %v1128 = vshll.u32 %v1119, %v1126
  %v1129 = vshrl.u32 %v1111, %v1127
  %v1130 = vor.u32 %v1128, %v1129
  %v1131 = vsub.s32 4294967266, %v1126
  %v1132 = vadd.s32 %v1131, 127
  %v1133 = vshll.u32 %v1132, 23
  %v1134 = vor.u32 4788187, %v1133
  %v1135 = vand.u32 2147483647, %v1134
  %v1137 = vcvt.s32.f32 %v1130
  %v1138 = vmul.f32 %v1137, %v1135
  %v1139 = vxor.u32 %v1138, 2147483648
  %v1140 = vsel %vm1057, %v1139, %v1138
  %v1141 = vsub.s32 4, %v1117
  %v1142 = vsel %vm1057, %v1141, %v1117
  %v1143 = vsel %vm1056, %v109, %v1140
  %v1144 = vsel %vm1056, 0, %v1142
  %v1145 = vcosq.f32.pop %v1143
  %v1146 = vsinq.f32.pop %v1143
  %vm1147 = vweird.f32 %v109
  %v1148 = vand.u32 %v1144, 3
  %vm1149 = vcmp.lt.s32.totalorder %v1148, 2
  %vm1150 = vcmp.eq.s32.totalorder %v1148, 0
  %v1151 = vxor.u32 %v1146, 2147483648
  %v1152 = vsel %vm1150, %v1145, %v1151
  %vm1153 = vcmp.eq.s32.totalorder %v1148, 2
  %v1154 = vxor.u32 %v1145, 2147483648
  %v1155 = vsel %vm1153, %v1154, %v1146
  %v1156 = vsel %vm1149, %v1152, %v1155
  %v1157 = vsel %vm1147, nan, %v1156
  %v1158 = vand.u32 2147483647, %v110
  %vm1159 = vcmp.le.f32.partialorder %v1158, 0.7853982
  %vm1160 = vcmp.lt.s32.totalorder %v110, 0
  %v1161 = vand.u32 %v110, 2139095040
  %v1162 = vshrl.u32 %v1161, 23
  %v1163 = vsub.s32 %v1162, 127
  %v1164 = vand.u32 2147483647, %v110
  %v1165 = vand.u32 %v1164, 8388607
  %v1166 = vor.u32 %v1165, 8388608
  %v1167 = vsub.s32 0, %v1166
  %v1168 = vadd.s32 %v1163, 1
  %vm1169 = vcmp.gt.s32.totalorder %v1168, 0
  %v1170 = vsel %vm1169, %v1168, 0
  %v1171 = vshrl.u32 %v1170, 5
  %v1172 = vand.u32 %v1170, 31
  %v1173 = vsub.s32 32, %v1172
  %v1174 = vshrl.u32 683565275, %v1173
  %v1175 = vshll.u32 683565275, %v1172
  %v1176 = vshrl.u32 2475754826, %v1173
  %v1177 = vor.u32 %v1175, %v1176
  %v1178 = vshll.u32 2475754826, %v1172
  %v1179 = vshrl.u32 2131351028, %v1173
  %v1180 = vor.u32 %v1178, %v1179
  %v1181 = vshll.u32 2131351028, %v1172
  %v1182 = vshrl.u32 2102212464, %v1173
  %v1183 = vor.u32 %v1181, %v1182
  %v1184 = vshll.u32 2102212464, %v1172
  %v1185 = vshrl.u32 920167782, %v1173
  %v1186 = vor.u32 %v1184, %v1185
  %v1187 = vshll.u32 920167782, %v1172
  %v1188 = vshrl.u32 1326507024, %v1173
  %v1189 = vor.u32 %v1187, %v1188
  %vm1190 = vcmp.lt.s32.totalorder %v1171, 1
  %vm1191 = vcmp.lt.s32.totalorder %v1171, 2
  %vm1192 = vcmp.lt.s32.totalorder %v1171, 3
  %vm1193 = vcmp.lt.s32.totalorder %v1171, 4
  %v1194 = vsel %vm1190, %v1174, %v1177
  %v1195 = vsel %vm1193, %v1183, 2102212464
  %v1196 = vsel %vm1192, %v1180, %v1195
  %v1197 = vsel %vm1191, %v1194, %v1196
  %v1198 = vsel %vm1190, %v1177, %v1180
  %v1199 = vsel %vm1193, %v1186, 920167782
  %v1200 = vsel %vm1192, %v1183, %v1199
  %v1201 = vsel %vm1191, %v1198, %v1200
  %v1202 = vsel %vm1190, %v1180, %v1183
  %v1203 = vsel %vm1193, %v1189, 1326507024
  %v1204 = vsel %vm1192, %v1186, %v1203
  %v1205 = vsel %vm1191, %v1202, %v1204
  %v1206 = vshll.u32 %v1166, 8
  %v1207 = vmul.u32.u64.compose %v1206, %v1205
  %v1208 = vextract.low.u32 %v1207
  %v1209 = vextract.high.u32 %v1207
  %v1210 = vmul.u32.u64.compose %v1206, %v1201
  %v1211 = vextract.low.u32 %v1210
  %v1212 = vextract.high.u32 %v1210
  %v1213 = vmul.u32 %v1206, %v1197
  %v1214 = vadd.s32 %v1209, %v1211
  %vm1215 = vc.u32 %v1209, %v1211
  %v1216 = vadd.s32 %v1212, 1
  %v1217 = vsel %vm1215, %v1216, %v1212
  %v1218 = vadd.s32 %v1213, %v1217
  %v1219 = vadd.s32 %v1218, 536870912
  %v1220 = vshrl.u32 %v1219, 30
  %v1221 = vshll.u32 %v1220, 30
  %v1222 = vsub.s32 %v1218, %v1221
  %vm1223 = vcmp.lt.s32.totalorder %v1222, 0
  %v1224 = vsub.s32 0, %v1222
  %v1225 = vsel %vm1223, %v1224, %v1222
  %v1226 = vclz %v1225
  %v1227 = vsub.s32 %v1226, 2
  %vm1228 = vcmp.gt.s32.totalorder 0, %v1227
  %v1229 = vsel %vm1228, 0, %v1227
  %v1230 = vsub.s32 32, %v1229
  %v1231 = vshll.u32 %v1222, %v1229
  %v1232 = vshrl.u32 %v1214, %v1230
  %v1233 = vor.u32 %v1231, %v1232
  %v1234 = vsub.s32 4294967266, %v1229
  %v1235 = vadd.s32 %v1234, 127
  %v1236 = vshll.u32 %v1235, 23
  %v1237 = vor.u32 4788187, %v1236
  %v1238 = vand.u32 2147483647, %v1237
  %v1240 = vcvt.s32.f32 %v1233
  %v1241 = vmul.f32 %v1240, %v1238
  %v1242 = vxor.u32 %v1241, 2147483648
  %v1243 = vsel %vm1160, %v1242, %v1241
  %v1244 = vsub.s32 4, %v1220
  %v1245 = vsel %vm1160, %v1244, %v1220
  %v1246 = vsel %vm1159, %v110, %v1243
  %v1247 = vsel %vm1159, 0, %v1245
  %v1248 = vcosq.f32.pop %v1246
  %v1249 = vsinq.f32.pop %v1246
  %vm1250 = vweird.f32 %v110
  %v1251 = vand.u32 %v1247, 3
  %vm1252 = vcmp.lt.s32.totalorder %v1251, 2
  %vm1253 = vcmp.eq.s32.totalorder %v1251, 0
  %v1254 = vxor.u32 %v1249, 2147483648
  %v1255 = vsel %vm1253, %v1248, %v1254
  %vm1256 = vcmp.eq.s32.totalorder %v1251, 2
  %v1257 = vxor.u32 %v1248, 2147483648
  %v1258 = vsel %vm1256, %v1257, %v1249
  %v1259 = vsel %vm1252, %v1255, %v1258
  %v1260 = vsel %vm1250, nan, %v1259
  %v1261 = vand.u32 2147483647, %v111
  %vm1262 = vcmp.le.f32.partialorder %v1261, 0.7853982
  %vm1263 = vcmp.lt.s32.totalorder %v111, 0
  %v1264 = vand.u32 %v111, 2139095040
  %v1265 = vshrl.u32 %v1264, 23
  %v1266 = vsub.s32 %v1265, 127
  %v1267 = vand.u32 2147483647, %v111
  %v1268 = vand.u32 %v1267, 8388607
  %v1269 = vor.u32 %v1268, 8388608
  %v1270 = vsub.s32 0, %v1269
  %v1271 = vadd.s32 %v1266, 1
  %vm1272 = vcmp.gt.s32.totalorder %v1271, 0
  %v1273 = vsel %vm1272, %v1271, 0
  %v1274 = vshrl.u32 %v1273, 5
  %v1275 = vand.u32 %v1273, 31
  %v1276 = vsub.s32 32, %v1275
  %v1277 = vshrl.u32 683565275, %v1276
  %v1278 = vshll.u32 683565275, %v1275
  %v1279 = vshrl.u32 2475754826, %v1276
  %v1280 = vor.u32 %v1278, %v1279
  %v1281 = vshll.u32 2475754826, %v1275
  %v1282 = vshrl.u32 2131351028, %v1276
  %v1283 = vor.u32 %v1281, %v1282
  %v1284 = vshll.u32 2131351028, %v1275
  %v1285 = vshrl.u32 2102212464, %v1276
  %v1286 = vor.u32 %v1284, %v1285
  %v1287 = vshll.u32 2102212464, %v1275
  %v1288 = vshrl.u32 920167782, %v1276
  %v1289 = vor.u32 %v1287, %v1288
  %v1290 = vshll.u32 920167782, %v1275
  %v1291 = vshrl.u32 1326507024, %v1276
  %v1292 = vor.u32 %v1290, %v1291
  %vm1293 = vcmp.lt.s32.totalorder %v1274, 1
  %vm1294 = vcmp.lt.s32.totalorder %v1274, 2
  %vm1295 = vcmp.lt.s32.totalorder %v1274, 3
  %vm1296 = vcmp.lt.s32.totalorder %v1274, 4
  %v1297 = vsel %vm1293, %v1277, %v1280
  %v1298 = vsel %vm1296, %v1286, 2102212464
  %v1299 = vsel %vm1295, %v1283, %v1298
  %v1300 = vsel %vm1294, %v1297, %v1299
  %v1301 = vsel %vm1293, %v1280, %v1283
  %v1302 = vsel %vm1296, %v1289, 920167782
  %v1303 = vsel %vm1295, %v1286, %v1302
  %v1304 = vsel %vm1294, %v1301, %v1303
  %v1305 = vsel %vm1293, %v1283, %v1286
  %v1306 = vsel %vm1296, %v1292, 1326507024
  %v1307 = vsel %vm1295, %v1289, %v1306
  %v1308 = vsel %vm1294, %v1305, %v1307
  %v1309 = vshll.u32 %v1269, 8
  %v1310 = vmul.u32.u64.compose %v1309, %v1308
  %v1311 = vextract.low.u32 %v1310
  %v1312 = vextract.high.u32 %v1310
  %v1313 = vmul.u32.u64.compose %v1309, %v1304
  %v1314 = vextract.low.u32 %v1313
  %v1315 = vextract.high.u32 %v1313
  %v1316 = vmul.u32 %v1309, %v1300
  %v1317 = vadd.s32 %v1312, %v1314
  %vm1318 = vc.u32 %v1312, %v1314
  %v1319 = vadd.s32 %v1315, 1
  %v1320 = vsel %vm1318, %v1319, %v1315
  %v1321 = vadd.s32 %v1316, %v1320
  %v1322 = vadd.s32 %v1321, 536870912
  %v1323 = vshrl.u32 %v1322, 30
  %v1324 = vshll.u32 %v1323, 30
  %v1325 = vsub.s32 %v1321, %v1324
  %vm1326 = vcmp.lt.s32.totalorder %v1325, 0
  %v1327 = vsub.s32 0, %v1325
  %v1328 = vsel %vm1326, %v1327, %v1325
  %v1329 = vclz %v1328
  %v1330 = vsub.s32 %v1329, 2
  %vm1331 = vcmp.gt.s32.totalorder 0, %v1330
  %v1332 = vsel %vm1331, 0, %v1330
  %v1333 = vsub.s32 32, %v1332
  %v1334 = vshll.u32 %v1325, %v1332
  %v1335 = vshrl.u32 %v1317, %v1333
  %v1336 = vor.u32 %v1334, %v1335
  %v1337 = vsub.s32 4294967266, %v1332
  %v1338 = vadd.s32 %v1337, 127
  %v1339 = vshll.u32 %v1338, 23
  %v1340 = vor.u32 4788187, %v1339
  %v1341 = vand.u32 2147483647, %v1340
  %v1343 = vcvt.s32.f32 %v1336
  %v1344 = vmul.f32 %v1343, %v1341
  %v1345 = vxor.u32 %v1344, 2147483648
  %v1346 = vsel %vm1263, %v1345, %v1344
  %v1347 = vsub.s32 4, %v1323
  %v1348 = vsel %vm1263, %v1347, %v1323
  %v1349 = vsel %vm1262, %v111, %v1346
  %v1350 = vsel %vm1262, 0, %v1348
  %v1351 = vcosq.f32.pop %v1349
  %v1352 = vsinq.f32.pop %v1349
  %vm1353 = vweird.f32 %v111
  %v1354 = vand.u32 %v1350, 3
  %vm1355 = vcmp.lt.s32.totalorder %v1354, 2
  %vm1356 = vcmp.eq.s32.totalorder %v1354, 0
  %v1357 = vxor.u32 %v1352, 2147483648
  %v1358 = vsel %vm1356, %v1351, %v1357
  %vm1359 = vcmp.eq.s32.totalorder %v1354, 2
  %v1360 = vxor.u32 %v1351, 2147483648
  %v1361 = vsel %vm1359, %v1360, %v1352
  %v1362 = vsel %vm1355, %v1358, %v1361
  %v1363 = vsel %vm1353, nan, %v1362
  %v1364 = vand.u32 2147483647, %v112
  %vm1365 = vcmp.le.f32.partialorder %v1364, 0.7853982
  %vm1366 = vcmp.lt.s32.totalorder %v112, 0
  %v1367 = vand.u32 %v112, 2139095040
  %v1368 = vshrl.u32 %v1367, 23
  %v1369 = vsub.s32 %v1368, 127
  %v1370 = vand.u32 2147483647, %v112
  %v1371 = vand.u32 %v1370, 8388607
  %v1372 = vor.u32 %v1371, 8388608
  %v1373 = vsub.s32 0, %v1372
  %v1374 = vadd.s32 %v1369, 1
  %vm1375 = vcmp.gt.s32.totalorder %v1374, 0
  %v1376 = vsel %vm1375, %v1374, 0
  %v1377 = vshrl.u32 %v1376, 5
  %v1378 = vand.u32 %v1376, 31
  %v1379 = vsub.s32 32, %v1378
  %v1380 = vshrl.u32 683565275, %v1379
  %v1381 = vshll.u32 683565275, %v1378
  %v1382 = vshrl.u32 2475754826, %v1379
  %v1383 = vor.u32 %v1381, %v1382
  %v1384 = vshll.u32 2475754826, %v1378
  %v1385 = vshrl.u32 2131351028, %v1379
  %v1386 = vor.u32 %v1384, %v1385
  %v1387 = vshll.u32 2131351028, %v1378
  %v1388 = vshrl.u32 2102212464, %v1379
  %v1389 = vor.u32 %v1387, %v1388
  %v1390 = vshll.u32 2102212464, %v1378
  %v1391 = vshrl.u32 920167782, %v1379
  %v1392 = vor.u32 %v1390, %v1391
  %v1393 = vshll.u32 920167782, %v1378
  %v1394 = vshrl.u32 1326507024, %v1379
  %v1395 = vor.u32 %v1393, %v1394
  %vm1396 = vcmp.lt.s32.totalorder %v1377, 1
  %vm1397 = vcmp.lt.s32.totalorder %v1377, 2
  %vm1398 = vcmp.lt.s32.totalorder %v1377, 3
  %vm1399 = vcmp.lt.s32.totalorder %v1377, 4
  %v1400 = vsel %vm1396, %v1380, %v1383
  %v1401 = vsel %vm1399, %v1389, 2102212464
  %v1402 = vsel %vm1398, %v1386, %v1401
  %v1403 = vsel %vm1397, %v1400, %v1402
  %v1404 = vsel %vm1396, %v1383, %v1386
  %v1405 = vsel %vm1399, %v1392, 920167782
  %v1406 = vsel %vm1398, %v1389, %v1405
  %v1407 = vsel %vm1397, %v1404, %v1406
  %v1408 = vsel %vm1396, %v1386, %v1389
  %v1409 = vsel %vm1399, %v1395, 1326507024
  %v1410 = vsel %vm1398, %v1392, %v1409
  %v1411 = vsel %vm1397, %v1408, %v1410
  %v1412 = vshll.u32 %v1372, 8
  %v1413 = vmul.u32.u64.compose %v1412, %v1411
  %v1414 = vextract.low.u32 %v1413
  %v1415 = vextract.high.u32 %v1413
  %v1416 = vmul.u32.u64.compose %v1412, %v1407
  %v1417 = vextract.low.u32 %v1416
  %v1418 = vextract.high.u32 %v1416
  %v1419 = vmul.u32 %v1412, %v1403
  %v1420 = vadd.s32 %v1415, %v1417
  %vm1421 = vc.u32 %v1415, %v1417
  %v1422 = vadd.s32 %v1418, 1
  %v1423 = vsel %vm1421, %v1422, %v1418
  %v1424 = vadd.s32 %v1419, %v1423
  %v1425 = vadd.s32 %v1424, 536870912
  %v1426 = vshrl.u32 %v1425, 30
  %v1427 = vshll.u32 %v1426, 30
  %v1428 = vsub.s32 %v1424, %v1427
  %vm1429 = vcmp.lt.s32.totalorder %v1428, 0
  %v1430 = vsub.s32 0, %v1428
  %v1431 = vsel %vm1429, %v1430, %v1428
  %v1432 = vclz %v1431
  %v1433 = vsub.s32 %v1432, 2
  %vm1434 = vcmp.gt.s32.totalorder 0, %v1433
  %v1435 = vsel %vm1434, 0, %v1433
  %v1436 = vsub.s32 32, %v1435
  %v1437 = vshll.u32 %v1428, %v1435
  %v1438 = vshrl.u32 %v1420, %v1436
  %v1439 = vor.u32 %v1437, %v1438
  %v1440 = vsub.s32 4294967266, %v1435
  %v1441 = vadd.s32 %v1440, 127
  %v1442 = vshll.u32 %v1441, 23
  %v1443 = vor.u32 4788187, %v1442
  %v1444 = vand.u32 2147483647, %v1443
  %v1446 = vcvt.s32.f32 %v1439
  %v1447 = vmul.f32 %v1446, %v1444
  %v1448 = vxor.u32 %v1447, 2147483648
  %v1449 = vsel %vm1366, %v1448, %v1447
  %v1450 = vsub.s32 4, %v1426
  %v1451 = vsel %vm1366, %v1450, %v1426
  %v1452 = vsel %vm1365, %v112, %v1449
  %v1453 = vsel %vm1365, 0, %v1451
  %v1454 = vcosq.f32.pop %v1452
  %v1455 = vsinq.f32.pop %v1452
  %vm1456 = vweird.f32 %v112
  %v1457 = vand.u32 %v1453, 3
  %vm1458 = vcmp.lt.s32.totalorder %v1457, 2
  %vm1459 = vcmp.eq.s32.totalorder %v1457, 0
  %v1460 = vxor.u32 %v1455, 2147483648
  %v1461 = vsel %vm1459, %v1454, %v1460
  %vm1462 = vcmp.eq.s32.totalorder %v1457, 2
  %v1463 = vxor.u32 %v1454, 2147483648
  %v1464 = vsel %vm1462, %v1463, %v1455
  %v1465 = vsel %vm1458, %v1461, %v1464
  %v1466 = vsel %vm1456, nan, %v1465
  %v1467 = vand.u32 2147483647, %v113
  %vm1468 = vcmp.le.f32.partialorder %v1467, 0.7853982
  %vm1469 = vcmp.lt.s32.totalorder %v113, 0
  %v1470 = vand.u32 %v113, 2139095040
  %v1471 = vshrl.u32 %v1470, 23
  %v1472 = vsub.s32 %v1471, 127
  %v1473 = vand.u32 2147483647, %v113
  %v1474 = vand.u32 %v1473, 8388607
  %v1475 = vor.u32 %v1474, 8388608
  %v1476 = vsub.s32 0, %v1475
  %v1477 = vadd.s32 %v1472, 1
  %vm1478 = vcmp.gt.s32.totalorder %v1477, 0
  %v1479 = vsel %vm1478, %v1477, 0
  %v1480 = vshrl.u32 %v1479, 5
  %v1481 = vand.u32 %v1479, 31
  %v1482 = vsub.s32 32, %v1481
  %v1483 = vshrl.u32 683565275, %v1482
  %v1484 = vshll.u32 683565275, %v1481
  %v1485 = vshrl.u32 2475754826, %v1482
  %v1486 = vor.u32 %v1484, %v1485
  %v1487 = vshll.u32 2475754826, %v1481
  %v1488 = vshrl.u32 2131351028, %v1482
  %v1489 = vor.u32 %v1487, %v1488
  %v1490 = vshll.u32 2131351028, %v1481
  %v1491 = vshrl.u32 2102212464, %v1482
  %v1492 = vor.u32 %v1490, %v1491
  %v1493 = vshll.u32 2102212464, %v1481
  %v1494 = vshrl.u32 920167782, %v1482
  %v1495 = vor.u32 %v1493, %v1494
  %v1496 = vshll.u32 920167782, %v1481
  %v1497 = vshrl.u32 1326507024, %v1482
  %v1498 = vor.u32 %v1496, %v1497
  %vm1499 = vcmp.lt.s32.totalorder %v1480, 1
  %vm1500 = vcmp.lt.s32.totalorder %v1480, 2
  %vm1501 = vcmp.lt.s32.totalorder %v1480, 3
  %vm1502 = vcmp.lt.s32.totalorder %v1480, 4
  %v1503 = vsel %vm1499, %v1483, %v1486
  %v1504 = vsel %vm1502, %v1492, 2102212464
  %v1505 = vsel %vm1501, %v1489, %v1504
  %v1506 = vsel %vm1500, %v1503, %v1505
  %v1507 = vsel %vm1499, %v1486, %v1489
  %v1508 = vsel %vm1502, %v1495, 920167782
  %v1509 = vsel %vm1501, %v1492, %v1508
  %v1510 = vsel %vm1500, %v1507, %v1509
  %v1511 = vsel %vm1499, %v1489, %v1492
  %v1512 = vsel %vm1502, %v1498, 1326507024
  %v1513 = vsel %vm1501, %v1495, %v1512
  %v1514 = vsel %vm1500, %v1511, %v1513
  %v1515 = vshll.u32 %v1475, 8
  %v1516 = vmul.u32.u64.compose %v1515, %v1514
  %v1517 = vextract.low.u32 %v1516
  %v1518 = vextract.high.u32 %v1516
  %v1519 = vmul.u32.u64.compose %v1515, %v1510
  %v1520 = vextract.low.u32 %v1519
  %v1521 = vextract.high.u32 %v1519
  %v1522 = vmul.u32 %v1515, %v1506
  %v1523 = vadd.s32 %v1518, %v1520
  %vm1524 = vc.u32 %v1518, %v1520
  %v1525 = vadd.s32 %v1521, 1
  %v1526 = vsel %vm1524, %v1525, %v1521
  %v1527 = vadd.s32 %v1522, %v1526
  %v1528 = vadd.s32 %v1527, 536870912
  %v1529 = vshrl.u32 %v1528, 30
  %v1530 = vshll.u32 %v1529, 30
  %v1531 = vsub.s32 %v1527, %v1530
  %vm1532 = vcmp.lt.s32.totalorder %v1531, 0
  %v1533 = vsub.s32 0, %v1531
  %v1534 = vsel %vm1532, %v1533, %v1531
  %v1535 = vclz %v1534
  %v1536 = vsub.s32 %v1535, 2
  %vm1537 = vcmp.gt.s32.totalorder 0, %v1536
  %v1538 = vsel %vm1537, 0, %v1536
  %v1539 = vsub.s32 32, %v1538
  %v1540 = vshll.u32 %v1531, %v1538
  %v1541 = vshrl.u32 %v1523, %v1539
  %v1542 = vor.u32 %v1540, %v1541
  %v1543 = vsub.s32 4294967266, %v1538
  %v1544 = vadd.s32 %v1543, 127
  %v1545 = vshll.u32 %v1544, 23
  %v1546 = vor.u32 4788187, %v1545
  %v1547 = vand.u32 2147483647, %v1546
  %v1549 = vcvt.s32.f32 %v1542
  %v1550 = vmul.f32 %v1549, %v1547
  %v1551 = vxor.u32 %v1550, 2147483648
  %v1552 = vsel %vm1469, %v1551, %v1550
  %v1553 = vsub.s32 4, %v1529
  %v1554 = vsel %vm1469, %v1553, %v1529
  %v1555 = vsel %vm1468, %v113, %v1552
  %v1556 = vsel %vm1468, 0, %v1554
  %v1557 = vcosq.f32.pop %v1555
  %v1558 = vsinq.f32.pop %v1555
  %vm1559 = vweird.f32 %v113
  %v1560 = vand.u32 %v1556, 3
  %vm1561 = vcmp.lt.s32.totalorder %v1560, 2
  %vm1562 = vcmp.eq.s32.totalorder %v1560, 0
  %v1563 = vxor.u32 %v1558, 2147483648
  %v1564 = vsel %vm1562, %v1557, %v1563
  %vm1565 = vcmp.eq.s32.totalorder %v1560, 2
  %v1566 = vxor.u32 %v1557, 2147483648
  %v1567 = vsel %vm1565, %v1566, %v1558
  %v1568 = vsel %vm1561, %v1564, %v1567
  %v1569 = vsel %vm1559, nan, %v1568
  %v1570 = vand.u32 2147483647, %v114
  %vm1571 = vcmp.le.f32.partialorder %v1570, 0.7853982
  %vm1572 = vcmp.lt.s32.totalorder %v114, 0
  %v1573 = vand.u32 %v114, 2139095040
  %v1574 = vshrl.u32 %v1573, 23
  %v1575 = vsub.s32 %v1574, 127
  %v1576 = vand.u32 2147483647, %v114
  %v1577 = vand.u32 %v1576, 8388607
  %v1578 = vor.u32 %v1577, 8388608
  %v1579 = vsub.s32 0, %v1578
  %v1580 = vadd.s32 %v1575, 1
  %vm1581 = vcmp.gt.s32.totalorder %v1580, 0
  %v1582 = vsel %vm1581, %v1580, 0
  %v1583 = vshrl.u32 %v1582, 5
  %v1584 = vand.u32 %v1582, 31
  %v1585 = vsub.s32 32, %v1584
  %v1586 = vshrl.u32 683565275, %v1585
  %v1587 = vshll.u32 683565275, %v1584
  %v1588 = vshrl.u32 2475754826, %v1585
  %v1589 = vor.u32 %v1587, %v1588
  %v1590 = vshll.u32 2475754826, %v1584
  %v1591 = vshrl.u32 2131351028, %v1585
  %v1592 = vor.u32 %v1590, %v1591
  %v1593 = vshll.u32 2131351028, %v1584
  %v1594 = vshrl.u32 2102212464, %v1585
  %v1595 = vor.u32 %v1593, %v1594
  %v1596 = vshll.u32 2102212464, %v1584
  %v1597 = vshrl.u32 920167782, %v1585
  %v1598 = vor.u32 %v1596, %v1597
  %v1599 = vshll.u32 920167782, %v1584
  %v1600 = vshrl.u32 1326507024, %v1585
  %v1601 = vor.u32 %v1599, %v1600
  %vm1602 = vcmp.lt.s32.totalorder %v1583, 1
  %vm1603 = vcmp.lt.s32.totalorder %v1583, 2
  %vm1604 = vcmp.lt.s32.totalorder %v1583, 3
  %vm1605 = vcmp.lt.s32.totalorder %v1583, 4
  %v1606 = vsel %vm1602, %v1586, %v1589
  %v1607 = vsel %vm1605, %v1595, 2102212464
  %v1608 = vsel %vm1604, %v1592, %v1607
  %v1609 = vsel %vm1603, %v1606, %v1608
  %v1610 = vsel %vm1602, %v1589, %v1592
  %v1611 = vsel %vm1605, %v1598, 920167782
  %v1612 = vsel %vm1604, %v1595, %v1611
  %v1613 = vsel %vm1603, %v1610, %v1612
  %v1614 = vsel %vm1602, %v1592, %v1595
  %v1615 = vsel %vm1605, %v1601, 1326507024
  %v1616 = vsel %vm1604, %v1598, %v1615
  %v1617 = vsel %vm1603, %v1614, %v1616
  %v1618 = vshll.u32 %v1578, 8
  %v1619 = vmul.u32.u64.compose %v1618, %v1617
  %v1620 = vextract.low.u32 %v1619
  %v1621 = vextract.high.u32 %v1619
  %v1622 = vmul.u32.u64.compose %v1618, %v1613
  %v1623 = vextract.low.u32 %v1622
  %v1624 = vextract.high.u32 %v1622
  %v1625 = vmul.u32 %v1618, %v1609
  %v1626 = vadd.s32 %v1621, %v1623
  %vm1627 = vc.u32 %v1621, %v1623
  %v1628 = vadd.s32 %v1624, 1
  %v1629 = vsel %vm1627, %v1628, %v1624
  %v1630 = vadd.s32 %v1625, %v1629
  %v1631 = vadd.s32 %v1630, 536870912
  %v1632 = vshrl.u32 %v1631, 30
  %v1633 = vshll.u32 %v1632, 30
  %v1634 = vsub.s32 %v1630, %v1633
  %vm1635 = vcmp.lt.s32.totalorder %v1634, 0
  %v1636 = vsub.s32 0, %v1634
  %v1637 = vsel %vm1635, %v1636, %v1634
  %v1638 = vclz %v1637
  %v1639 = vsub.s32 %v1638, 2
  %vm1640 = vcmp.gt.s32.totalorder 0, %v1639
  %v1641 = vsel %vm1640, 0, %v1639
  %v1642 = vsub.s32 32, %v1641
  %v1643 = vshll.u32 %v1634, %v1641
  %v1644 = vshrl.u32 %v1626, %v1642
  %v1645 = vor.u32 %v1643, %v1644
  %v1646 = vsub.s32 4294967266, %v1641
  %v1647 = vadd.s32 %v1646, 127
  %v1648 = vshll.u32 %v1647, 23
  %v1649 = vor.u32 4788187, %v1648
  %v1650 = vand.u32 2147483647, %v1649
  %v1652 = vcvt.s32.f32 %v1645
  %v1653 = vmul.f32 %v1652, %v1650
  %v1654 = vxor.u32 %v1653, 2147483648
  %v1655 = vsel %vm1572, %v1654, %v1653
  %v1656 = vsub.s32 4, %v1632
  %v1657 = vsel %vm1572, %v1656, %v1632
  %v1658 = vsel %vm1571, %v114, %v1655
  %v1659 = vsel %vm1571, 0, %v1657
  %v1660 = vcosq.f32.pop %v1658
  %v1661 = vsinq.f32.pop %v1658
  %vm1662 = vweird.f32 %v114
  %v1663 = vand.u32 %v1659, 3
  %vm1664 = vcmp.lt.s32.totalorder %v1663, 2
  %vm1665 = vcmp.eq.s32.totalorder %v1663, 0
  %v1666 = vxor.u32 %v1661, 2147483648
  %v1667 = vsel %vm1665, %v1660, %v1666
  %vm1668 = vcmp.eq.s32.totalorder %v1663, 2
  %v1669 = vxor.u32 %v1660, 2147483648
  %v1670 = vsel %vm1668, %v1669, %v1661
  %v1671 = vsel %vm1664, %v1667, %v1670
  %v1672 = vsel %vm1662, nan, %v1671
  %v1673 = vand.u32 2147483647, %v115
  %vm1674 = vcmp.le.f32.partialorder %v1673, 0.7853982
  %vm1675 = vcmp.lt.s32.totalorder %v115, 0
  %v1676 = vand.u32 %v115, 2139095040
  %v1677 = vshrl.u32 %v1676, 23
  %v1678 = vsub.s32 %v1677, 127
  %v1679 = vand.u32 2147483647, %v115
  %v1680 = vand.u32 %v1679, 8388607
  %v1681 = vor.u32 %v1680, 8388608
  %v1682 = vsub.s32 0, %v1681
  %v1683 = vadd.s32 %v1678, 1
  %vm1684 = vcmp.gt.s32.totalorder %v1683, 0
  %v1685 = vsel %vm1684, %v1683, 0
  %v1686 = vshrl.u32 %v1685, 5
  %v1687 = vand.u32 %v1685, 31
  %v1688 = vsub.s32 32, %v1687
  %v1689 = vshrl.u32 683565275, %v1688
  %v1690 = vshll.u32 683565275, %v1687
  %v1691 = vshrl.u32 2475754826, %v1688
  %v1692 = vor.u32 %v1690, %v1691
  %v1693 = vshll.u32 2475754826, %v1687
  %v1694 = vshrl.u32 2131351028, %v1688
  %v1695 = vor.u32 %v1693, %v1694
  %v1696 = vshll.u32 2131351028, %v1687
  %v1697 = vshrl.u32 2102212464, %v1688
  %v1698 = vor.u32 %v1696, %v1697
  %v1699 = vshll.u32 2102212464, %v1687
  %v1700 = vshrl.u32 920167782, %v1688
  %v1701 = vor.u32 %v1699, %v1700
  %v1702 = vshll.u32 920167782, %v1687
  %v1703 = vshrl.u32 1326507024, %v1688
  %v1704 = vor.u32 %v1702, %v1703
  %vm1705 = vcmp.lt.s32.totalorder %v1686, 1
  %vm1706 = vcmp.lt.s32.totalorder %v1686, 2
  %vm1707 = vcmp.lt.s32.totalorder %v1686, 3
  %vm1708 = vcmp.lt.s32.totalorder %v1686, 4
  %v1709 = vsel %vm1705, %v1689, %v1692
  %v1710 = vsel %vm1708, %v1698, 2102212464
  %v1711 = vsel %vm1707, %v1695, %v1710
  %v1712 = vsel %vm1706, %v1709, %v1711
  %v1713 = vsel %vm1705, %v1692, %v1695
  %v1714 = vsel %vm1708, %v1701, 920167782
  %v1715 = vsel %vm1707, %v1698, %v1714
  %v1716 = vsel %vm1706, %v1713, %v1715
  %v1717 = vsel %vm1705, %v1695, %v1698
  %v1718 = vsel %vm1708, %v1704, 1326507024
  %v1719 = vsel %vm1707, %v1701, %v1718
  %v1720 = vsel %vm1706, %v1717, %v1719
  %v1721 = vshll.u32 %v1681, 8
  %v1722 = vmul.u32.u64.compose %v1721, %v1720
  %v1723 = vextract.low.u32 %v1722
  %v1724 = vextract.high.u32 %v1722
  %v1725 = vmul.u32.u64.compose %v1721, %v1716
  %v1726 = vextract.low.u32 %v1725
  %v1727 = vextract.high.u32 %v1725
  %v1728 = vmul.u32 %v1721, %v1712
  %v1729 = vadd.s32 %v1724, %v1726
  %vm1730 = vc.u32 %v1724, %v1726
  %v1731 = vadd.s32 %v1727, 1
  %v1732 = vsel %vm1730, %v1731, %v1727
  %v1733 = vadd.s32 %v1728, %v1732
  %v1734 = vadd.s32 %v1733, 536870912
  %v1735 = vshrl.u32 %v1734, 30
  %v1736 = vshll.u32 %v1735, 30
  %v1737 = vsub.s32 %v1733, %v1736
  %vm1738 = vcmp.lt.s32.totalorder %v1737, 0
  %v1739 = vsub.s32 0, %v1737
  %v1740 = vsel %vm1738, %v1739, %v1737
  %v1741 = vclz %v1740
  %v1742 = vsub.s32 %v1741, 2
  %vm1743 = vcmp.gt.s32.totalorder 0, %v1742
  %v1744 = vsel %vm1743, 0, %v1742
  %v1745 = vsub.s32 32, %v1744
  %v1746 = vshll.u32 %v1737, %v1744
  %v1747 = vshrl.u32 %v1729, %v1745
  %v1748 = vor.u32 %v1746, %v1747
  %v1749 = vsub.s32 4294967266, %v1744
  %v1750 = vadd.s32 %v1749, 127
  %v1751 = vshll.u32 %v1750, 23
  %v1752 = vor.u32 4788187, %v1751
  %v1753 = vand.u32 2147483647, %v1752
  %v1755 = vcvt.s32.f32 %v1748
  %v1756 = vmul.f32 %v1755, %v1753
  %v1757 = vxor.u32 %v1756, 2147483648
  %v1758 = vsel %vm1675, %v1757, %v1756
  %v1759 = vsub.s32 4, %v1735
  %v1760 = vsel %vm1675, %v1759, %v1735
  %v1761 = vsel %vm1674, %v115, %v1758
  %v1762 = vsel %vm1674, 0, %v1760
  %v1763 = vcosq.f32.pop %v1761
  %v1764 = vsinq.f32.pop %v1761
  %vm1765 = vweird.f32 %v115
  %v1766 = vand.u32 %v1762, 3
  %vm1767 = vcmp.lt.s32.totalorder %v1766, 2
  %vm1768 = vcmp.eq.s32.totalorder %v1766, 0
  %v1769 = vxor.u32 %v1764, 2147483648
  %v1770 = vsel %vm1768, %v1763, %v1769
  %vm1771 = vcmp.eq.s32.totalorder %v1766, 2
  %v1772 = vxor.u32 %v1763, 2147483648
  %v1773 = vsel %vm1771, %v1772, %v1764
  %v1774 = vsel %vm1767, %v1770, %v1773
  %v1775 = vsel %vm1765, nan, %v1774
  %v1776 = vpack.c.bf16 %v1157, %v1054
  %v1777 = vpack.c.bf16 %v1363, %v1260
  %v1778 = vpack.c.bf16 %v1569, %v1466
  %v1779 = vpack.c.bf16 %v1775, %v1672
  %v1780 = vld [vmem:[%s0] sm:$0xf]
  %v1781 = vld [vmem:[%s0 + $0x4] sm:$0xf]
  %v1782 = vld [vmem:[%s0 + $0x8] sm:$0xf]
  %v1783 = vld [vmem:[%s0 + $0xc] sm:$0xf]
  %v1784 = vld [vmem:[%s0 + $0x10] sm:$0xf]
  %v1785 = vld [vmem:[%s0 + $0x14] sm:$0xf]
  %v1786 = vld [vmem:[%s0 + $0x18] sm:$0xf]
  %v1787 = vld [vmem:[%s0 + $0x1c] sm:$0xf]
  %v1788 = vld [vmem:[%s9] sm:$0xf]
  %v1789 = vld [vmem:[%s9 + $0x4] sm:$0xf]
  %v1790 = vld [vmem:[%s9 + $0x8] sm:$0xf]
  %v1791 = vld [vmem:[%s9 + $0xc] sm:$0xf]
  %v1792 = vld [vmem:[%s9 + $0x10] sm:$0xf]
  %v1793 = vld [vmem:[%s9 + $0x14] sm:$0xf]
  %v1794 = vld [vmem:[%s9 + $0x18] sm:$0xf]
  %v1795 = vld [vmem:[%s9 + $0x1c] sm:$0xf]
  %v1796 = vld [vmem:[%s10] sm:$0xf]
  %v1797 = vld [vmem:[%s10 + $0x4] sm:$0xf]
  %v1800 = vunpack.c.l.b16 %v1796
  %v1801 = vunpack.c.l.b16 %v1797
  %v1802 = vpack.c.b16 %v1801, %v1800
  %vm1804 = vcmask 130048
  %v1806 = vsel %vm1804, %v948, 0
  %v1809 = vsel %vm1804, %v949, 0
  %v1812 = vsel %vm1804, %v950, 0
  %v1815 = vsel %vm1804, %v951, 0
  %1817 = vmatprep.subr.bf16.mxu0 0
  %1818 = vmatpush1.bf16.msra.mxu0 %v1802
  %1819 = vmatprep.subr.bf16.mxu0 0
  %1820 = vmatpush1.bf16.msra.mxu0 0
  %1821 = vmatprep.subr.bf16.mxu0 0
  %1822 = vmatpush1.bf16.msra.mxu0 0
  %1823 = vmatprep.subr.bf16.mxu0 0
  %1824 = vmatpush1.bf16.msra.mxu0 0
  %1825 = vmatprep.subr.bf16.mxu0 0
  %1826 = vmatpush1.bf16.msra.mxu0 0
  %1827 = vmatprep.subr.bf16.mxu0 0
  %1828 = vmatpush1.bf16.msra.mxu0 0
  %1829 = vmatprep.subr.bf16.mxu0 0
  %1830 = vmatpush1.bf16.msra.mxu0 0
  %1831 = vmatprep.subr.bf16.mxu0 0
  %1832 = vmatpush1.bf16.msra.mxu0 0
  %1833 = vmatprep.subr.bf16.mxu0 0
  %1834 = vmatpush1.bf16.msra.mxu0 0
  %1835 = vmatprep.subr.bf16.mxu0 0
  %1836 = vmatpush1.bf16.msra.mxu0 0
  %1837 = vmatprep.subr.bf16.mxu0 0
  %1838 = vmatpush1.bf16.msra.mxu0 0
  %1839 = vmatprep.subr.bf16.mxu0 0
  %1840 = vmatpush1.bf16.msra.mxu0 0
  %1841 = vmatprep.subr.bf16.mxu0 0
  %1842 = vmatpush1.bf16.msra.mxu0 0
  %1843 = vmatprep.subr.bf16.mxu0 0
  %1844 = vmatpush1.bf16.msra.mxu0 0
  %1845 = vmatprep.subr.bf16.mxu0 0
  %1846 = vmatpush1.bf16.msra.mxu0 0
  %1847 = vmatprep.subr.bf16.mxu0 0
  %1848 = vmatpush1.bf16.msra.mxu0 0
  %1849 = vmatprep.mubr.bf16.mxu0 0
  %1850 = vmatmul.mubr.bf16.gmra.mrb[0].mxu0 %v1806
  %v1851 = vpop.f32.mrb[0].mxu0
  %v1852 = vadd.f32 0.0, %v1851
  %v1853 = vpop.f32.mrb[0].mxu0
  %v1854 = vpop.f32.mrb[0].mxu0
  %v1855 = vadd.f32 0.0, %v1854
  %v1856 = vpop.f32.mrb[0].mxu0
  %1857 = vmatprep.mubr.bf16.mxu0 0
  %1858 = vmatmul.mubr.bf16.gmra.mrb[0].mxu0 %v1809
  %v1859 = vpop.f32.mrb[0].mxu0
  %v1860 = vadd.f32 0.0, %v1859
  %v1861 = vpop.f32.mrb[0].mxu0
  %v1862 = vpop.f32.mrb[0].mxu0
  %v1863 = vadd.f32 0.0, %v1862
  %v1864 = vpop.f32.mrb[0].mxu0
  %1865 = vmatprep.mubr.bf16.mxu0 0
  %1866 = vmatmul.mubr.bf16.gmra.mrb[0].mxu0 %v1812
  %v1867 = vpop.f32.mrb[0].mxu0
  %v1868 = vadd.f32 0.0, %v1867
  %v1869 = vpop.f32.mrb[0].mxu0
  %v1870 = vpop.f32.mrb[0].mxu0
  %v1871 = vadd.f32 0.0, %v1870
  %v1872 = vpop.f32.mrb[0].mxu0
  %1873 = vmatprep.mubr.bf16.mxu0 0
  %1874 = vmatmul.mubr.bf16.gmra.mrb[0].mxu0 %v1815
  %v1875 = vpop.f32.mrb[0].mxu0
  %v1876 = vadd.f32 0.0, %v1875
  %v1877 = vpop.f32.mrb[0].mxu0
  %v1878 = vpop.f32.mrb[0].mxu0
  %v1879 = vadd.f32 0.0, %v1878
  %v1880 = vpop.f32.mrb[0].mxu0
  %1881 = vdwg.mxu0
  %v1890 = vunpack.c.l.b16 %v1780
  %v1891 = vunpack.c.l.b16 %v1781
  %v1892 = vunpack.c.l.b16 %v1782
  %v1893 = vunpack.c.l.b16 %v1783
  %v1894 = vunpack.c.l.b16 %v1784
  %v1895 = vunpack.c.l.b16 %v1785
  %v1896 = vunpack.c.l.b16 %v1786
  %v1897 = vunpack.c.l.b16 %v1787
  %v1898 = vpack.c.b16 %v1891, %v1890
  %v1899 = vpack.c.b16 %v1893, %v1892
  %v1900 = vpack.c.b16 %v1895, %v1894
  %v1901 = vpack.c.b16 %v1897, %v1896
  %v1910 = vunpack.c.l.b16 %v1788
  %v1911 = vunpack.c.l.b16 %v1789
  %v1912 = vunpack.c.l.b16 %v1790
  %v1913 = vunpack.c.l.b16 %v1791
  %v1914 = vunpack.c.l.b16 %v1792
  %v1915 = vunpack.c.l.b16 %v1793
  %v1916 = vunpack.c.l.b16 %v1794
  %v1917 = vunpack.c.l.b16 %v1795
  %v1918 = vpack.c.b16 %v1911, %v1910
  %v1919 = vpack.c.b16 %v1913, %v1912
  %v1920 = vpack.c.b16 %v1915, %v1914
  %v1921 = vpack.c.b16 %v1917, %v1916
  %vm1926 = vcmask 523264
  %v1928 = vsel %vm1926, %v1898, 0
  %v1931 = vsel %vm1926, %v1899, 0
  %v1934 = vsel %vm1926, %v1900, 0
  %v1937 = vsel %vm1926, %v1901, 0
  %1939 = vmatprep.subr.bf16.mxu0 0
  %1940 = vmatpush1.bf16.msra.mxu0 %v1918
  %1941 = vmatprep.subr.bf16.mxu0 0
  %1942 = vmatpush1.bf16.msra.mxu0 %v1919
  %1943 = vmatprep.subr.bf16.mxu0 0
  %1944 = vmatpush1.bf16.msra.mxu0 %v1920
  %1945 = vmatprep.subr.bf16.mxu0 0
  %1946 = vmatpush1.bf16.msra.mxu0 %v1921
  %1947 = vmatprep.subr.bf16.mxu0 0
  %1948 = vmatpush1.bf16.msra.mxu0 0
  %1949 = vmatprep.subr.bf16.mxu0 0
  %1950 = vmatpush1.bf16.msra.mxu0 0
  %1951 = vmatprep.subr.bf16.mxu0 0
  %1952 = vmatpush1.bf16.msra.mxu0 0
  %1953 = vmatprep.subr.bf16.mxu0 0
  %1954 = vmatpush1.bf16.msra.mxu0 0
  %1955 = vmatprep.subr.bf16.mxu0 0
  %1956 = vmatpush1.bf16.msra.mxu0 0
  %1957 = vmatprep.subr.bf16.mxu0 0
  %1958 = vmatpush1.bf16.msra.mxu0 0
  %1959 = vmatprep.subr.bf16.mxu0 0
  %1960 = vmatpush1.bf16.msra.mxu0 0
  %1961 = vmatprep.subr.bf16.mxu0 0
  %1962 = vmatpush1.bf16.msra.mxu0 0
  %1963 = vmatprep.subr.bf16.mxu0 0
  %1964 = vmatpush1.bf16.msra.mxu0 0
  %1965 = vmatprep.subr.bf16.mxu0 0
  %1966 = vmatpush1.bf16.msra.mxu0 0
  %1967 = vmatprep.subr.bf16.mxu0 0
  %1968 = vmatpush1.bf16.msra.mxu0 0
  %1969 = vmatprep.subr.bf16.mxu0 0
  %1970 = vmatpush1.bf16.msra.mxu0 0
  %1971 = vmatprep.mubr.bf16.mxu0 0
  %1972 = vmatmul.mubr.bf16.gmra.mrb[0].mxu0 %v1928
  %v1973 = vpop.f32.mrb[0].mxu0
  %v1974 = vadd.f32 %v1852, %v1973
  %v1975 = vpop.f32.mrb[0].mxu0
  %v1976 = vpop.f32.mrb[0].mxu0
  %v1977 = vadd.f32 %v1855, %v1976
  %v1978 = vpop.f32.mrb[0].mxu0
  %1979 = vmatprep.mubr.bf16.mxu0 0
  %1980 = vmatmul.mubr.bf16.gmra.mrb[0].mxu0 %v1931
  %v1981 = vpop.f32.mrb[0].mxu0
  %v1982 = vadd.f32 %v1860, %v1981
  %v1983 = vpop.f32.mrb[0].mxu0
  %v1984 = vpop.f32.mrb[0].mxu0
  %v1985 = vadd.f32 %v1863, %v1984
  %v1986 = vpop.f32.mrb[0].mxu0
  %1987 = vmatprep.mubr.bf16.mxu0 0
  %1988 = vmatmul.mubr.bf16.gmra.mrb[0].mxu0 %v1934
  %v1989 = vpop.f32.mrb[0].mxu0
  %v1990 = vadd.f32 %v1868, %v1989
  %v1991 = vpop.f32.mrb[0].mxu0
  %v1992 = vpop.f32.mrb[0].mxu0
  %v1993 = vadd.f32 %v1871, %v1992
  %v1994 = vpop.f32.mrb[0].mxu0
  %1995 = vmatprep.mubr.bf16.mxu0 0
  %1996 = vmatmul.mubr.bf16.gmra.mrb[0].mxu0 %v1937
  %v1997 = vpop.f32.mrb[0].mxu0
  %v1998 = vadd.f32 %v1876, %v1997
  %v1999 = vpop.f32.mrb[0].mxu0
  %v2000 = vpop.f32.mrb[0].mxu0
  %v2001 = vadd.f32 %v1879, %v2000
  %v2002 = vpop.f32.mrb[0].mxu0
  %2003 = vdwg.mxu0
  %v2004 = vld [vmem:[%s11] sm:$0xf]
  %v2005 = vld [vmem:[%s11 + $0x4] sm:$0xf]
  %v2008 = vunpack.c.l.b16 %v2004
  %v2009 = vunpack.c.l.b16 %v2005
  %v2010 = vpack.c.b16 %v2009, %v2008
  %v2013 = vsel %vm1804, %v1776, 0
  %v2016 = vsel %vm1804, %v1777, 0
  %v2019 = vsel %vm1804, %v1778, 0
  %v2022 = vsel %vm1804, %v1779, 0
  %2024 = vmatprep.subr.bf16.mxu0 0
  %2025 = vmatpush1.bf16.msra.mxu0 %v2010
  %2026 = vmatprep.subr.bf16.mxu0 0
  %2027 = vmatpush1.bf16.msra.mxu0 0
  %2028 = vmatprep.subr.bf16.mxu0 0
  %2029 = vmatpush1.bf16.msra.mxu0 0
  %2030 = vmatprep.subr.bf16.mxu0 0
  %2031 = vmatpush1.bf16.msra.mxu0 0
  %2032 = vmatprep.subr.bf16.mxu0 0
  %2033 = vmatpush1.bf16.msra.mxu0 0
  %2034 = vmatprep.subr.bf16.mxu0 0
  %2035 = vmatpush1.bf16.msra.mxu0 0
  %2036 = vmatprep.subr.bf16.mxu0 0
  %2037 = vmatpush1.bf16.msra.mxu0 0
  %2038 = vmatprep.subr.bf16.mxu0 0
  %2039 = vmatpush1.bf16.msra.mxu0 0
  %2040 = vmatprep.subr.bf16.mxu0 0
  %2041 = vmatpush1.bf16.msra.mxu0 0
  %2042 = vmatprep.subr.bf16.mxu0 0
  %2043 = vmatpush1.bf16.msra.mxu0 0
  %2044 = vmatprep.subr.bf16.mxu0 0
  %2045 = vmatpush1.bf16.msra.mxu0 0
  %2046 = vmatprep.subr.bf16.mxu0 0
  %2047 = vmatpush1.bf16.msra.mxu0 0
  %2048 = vmatprep.subr.bf16.mxu0 0
  %2049 = vmatpush1.bf16.msra.mxu0 0
  %2050 = vmatprep.subr.bf16.mxu0 0
  %2051 = vmatpush1.bf16.msra.mxu0 0
  %2052 = vmatprep.subr.bf16.mxu0 0
  %2053 = vmatpush1.bf16.msra.mxu0 0
  %2054 = vmatprep.subr.bf16.mxu0 0
  %2055 = vmatpush1.bf16.msra.mxu0 0
  %2056 = vmatprep.mubr.bf16.mxu0 0
  %2057 = vmatmul.mubr.bf16.gmra.mrb[0].mxu0 %v2013
  %v2058 = vpop.f32.mrb[0].mxu0
  %v2059 = vadd.f32 0.0, %v2058
  %v2060 = vpop.f32.mrb[0].mxu0
  %v2061 = vpop.f32.mrb[0].mxu0
  %v2062 = vadd.f32 0.0, %v2061
  %v2063 = vpop.f32.mrb[0].mxu0
  %2064 = vmatprep.mubr.bf16.mxu0 0
  %2065 = vmatmul.mubr.bf16.gmra.mrb[0].mxu0 %v2016
  %v2066 = vpop.f32.mrb[0].mxu0
  %v2067 = vadd.f32 0.0, %v2066
  %v2068 = vpop.f32.mrb[0].mxu0
  %v2069 = vpop.f32.mrb[0].mxu0
  %v2070 = vadd.f32 0.0, %v2069
  %v2071 = vpop.f32.mrb[0].mxu0
  %2072 = vmatprep.mubr.bf16.mxu0 0
  %2073 = vmatmul.mubr.bf16.gmra.mrb[0].mxu0 %v2019
  %v2074 = vpop.f32.mrb[0].mxu0
  %v2075 = vadd.f32 0.0, %v2074
  %v2076 = vpop.f32.mrb[0].mxu0
  %v2077 = vpop.f32.mrb[0].mxu0
  %v2078 = vadd.f32 0.0, %v2077
  %v2079 = vpop.f32.mrb[0].mxu0
  %2080 = vmatprep.mubr.bf16.mxu0 0
  %2081 = vmatmul.mubr.bf16.gmra.mrb[0].mxu0 %v2022
  %v2082 = vpop.f32.mrb[0].mxu0
  %v2083 = vadd.f32 0.0, %v2082
  %v2084 = vpop.f32.mrb[0].mxu0
  %v2085 = vpop.f32.mrb[0].mxu0
  %v2086 = vadd.f32 0.0, %v2085
  %v2087 = vpop.f32.mrb[0].mxu0
  %2088 = vdwg.mxu0
  %v2089 = vadd.f32 %v1974, %v2059
  %v2090 = vadd.f32 %v1977, %v2062
  %v2091 = vadd.f32 %v1982, %v2067
  %v2092 = vadd.f32 %v1985, %v2070
  %v2093 = vadd.f32 %v1990, %v2075
  %v2094 = vadd.f32 %v1993, %v2078
  %v2095 = vadd.f32 %v1998, %v2083
  %v2096 = vadd.f32 %v2001, %v2086
  %v2097 = vld [vmem:[%s8] sm:$0x1]
  %v2099 = vlaneseq
  %v2100 = vshrl.u32 %v2099, 7
  %v2101 = vsub.s32 0, %v2100
  %v2102 = vrot.slane %v2097, %v2101
  %v2104 = vadd.f32 %v2089, %v2102
  %v2105 = vadd.f32 %v2090, %v2102
  %v2106 = vadd.f32 %v2091, %v2102
  %v2107 = vadd.f32 %v2092, %v2102
  %v2108 = vadd.f32 %v2093, %v2102
  %v2109 = vadd.f32 %v2094, %v2102
  %v2110 = vadd.f32 %v2095, %v2102
  %v2111 = vadd.f32 %v2096, %v2102
  %v2112 = vxor.u32 %v2104, 2147483648
  %v2113 = vxor.u32 %v2105, 2147483648
  %v2114 = vxor.u32 %v2106, 2147483648
  %v2115 = vxor.u32 %v2107, 2147483648
  %v2116 = vxor.u32 %v2108, 2147483648
  %v2117 = vxor.u32 %v2109, 2147483648
  %v2118 = vxor.u32 %v2110, 2147483648
  %v2119 = vxor.u32 %v2111, 2147483648
  %v2120 = vmul.f32 %v2112, 1.442695
  %v2121 = vpow.pop %v2120
  %v2122 = vmul.f32 %v2113, 1.442695
  %v2123 = vpow.pop %v2122
  %v2124 = vmul.f32 %v2114, 1.442695
  %v2125 = vpow.pop %v2124
  %v2126 = vmul.f32 %v2115, 1.442695
  %v2127 = vpow.pop %v2126
  %v2128 = vmul.f32 %v2116, 1.442695
  %v2129 = vpow.pop %v2128
  %v2130 = vmul.f32 %v2117, 1.442695
  %v2131 = vpow.pop %v2130
  %v2132 = vmul.f32 %v2118, 1.442695
  %v2133 = vpow.pop %v2132
  %v2134 = vmul.f32 %v2119, 1.442695
  %v2135 = vpow.pop %v2134
  %v2136 = vadd.f32 %v2121, 1.0
  %v2137 = vadd.f32 %v2123, 1.0
  %v2138 = vadd.f32 %v2125, 1.0
  %v2139 = vadd.f32 %v2127, 1.0
  %v2140 = vadd.f32 %v2129, 1.0
  %v2141 = vadd.f32 %v2131, 1.0
  %v2142 = vadd.f32 %v2133, 1.0
  %v2143 = vadd.f32 %v2135, 1.0
  %v2144 = vrcp.pop %v2136
  %v2145 = vmul.f32 1.0, %v2144
  %v2146 = vrcp.pop %v2137
  %v2147 = vmul.f32 1.0, %v2146
  %v2148 = vrcp.pop %v2138
  %v2149 = vmul.f32 1.0, %v2148
  %v2150 = vrcp.pop %v2139
  %v2151 = vmul.f32 1.0, %v2150
  %v2152 = vrcp.pop %v2140
  %v2153 = vmul.f32 1.0, %v2152
  %v2154 = vrcp.pop %v2141
  %v2155 = vmul.f32 1.0, %v2154
  %v2156 = vrcp.pop %v2142
  %v2157 = vmul.f32 1.0, %v2156
  %v2158 = vrcp.pop %v2143
  %v2159 = vmul.f32 1.0, %v2158
  %v2160 = vmul.f32 %v2104, %v2145
  %v2161 = vmul.f32 %v2105, %v2147
  %v2162 = vmul.f32 %v2106, %v2149
  %v2163 = vmul.f32 %v2107, %v2151
  %v2164 = vmul.f32 %v2108, %v2153
  %v2165 = vmul.f32 %v2109, %v2155
  %v2166 = vmul.f32 %v2110, %v2157
  %v2167 = vmul.f32 %v2111, %v2159
  %v2168 = vpack.c.bf16 %v2161, %v2160
  %v2169 = vpack.c.bf16 %v2163, %v2162
  %v2170 = vpack.c.bf16 %v2165, %v2164
  %v2171 = vpack.c.bf16 %v2167, %v2166
  %v2172 = vld [vmem:[%s12] sm:$0xf]
  %v2173 = vld [vmem:[%s12 + $0x4] sm:$0xf]
  %v2174 = vld [vmem:[%s12 + $0x8] sm:$0xf]
  %v2175 = vld [vmem:[%s12 + $0xc] sm:$0xf]
  %v2180 = vunpack.c.l.b16 %v2172
  %v2181 = vunpack.c.l.b16 %v2173
  %v2182 = vunpack.c.l.b16 %v2174
  %v2183 = vunpack.c.l.b16 %v2175
  %v2184 = vpack.c.b16 %v2181, %v2180
  %v2185 = vpack.c.b16 %v2183, %v2182
  %vm2188 = vcmask 261120
  %v2190 = vsel %vm2188, %v2168, 0
  %v2193 = vsel %vm2188, %v2169, 0
  %v2196 = vsel %vm2188, %v2170, 0
  %v2199 = vsel %vm2188, %v2171, 0
  %2201 = vmatprep.subr.bf16.mxu0 0
  %2202 = vmatpush1.bf16.msra.mxu0 %v2184
  %2203 = vmatprep.subr.bf16.mxu0 0
  %2204 = vmatpush1.bf16.msra.mxu0 %v2185
  %2205 = vmatprep.subr.bf16.mxu0 0
  %2206 = vmatpush1.bf16.msra.mxu0 0
  %2207 = vmatprep.subr.bf16.mxu0 0
  %2208 = vmatpush1.bf16.msra.mxu0 0
  %2209 = vmatprep.subr.bf16.mxu0 0
  %2210 = vmatpush1.bf16.msra.mxu0 0
  %2211 = vmatprep.subr.bf16.mxu0 0
  %2212 = vmatpush1.bf16.msra.mxu0 0
  %2213 = vmatprep.subr.bf16.mxu0 0
  %2214 = vmatpush1.bf16.msra.mxu0 0
  %2215 = vmatprep.subr.bf16.mxu0 0
  %2216 = vmatpush1.bf16.msra.mxu0 0
  %2217 = vmatprep.subr.bf16.mxu0 0
  %2218 = vmatpush1.bf16.msra.mxu0 0
  %2219 = vmatprep.subr.bf16.mxu0 0
  %2220 = vmatpush1.bf16.msra.mxu0 0
  %2221 = vmatprep.subr.bf16.mxu0 0
  %2222 = vmatpush1.bf16.msra.mxu0 0
  %2223 = vmatprep.subr.bf16.mxu0 0
  %2224 = vmatpush1.bf16.msra.mxu0 0
  %2225 = vmatprep.subr.bf16.mxu0 0
  %2226 = vmatpush1.bf16.msra.mxu0 0
  %2227 = vmatprep.subr.bf16.mxu0 0
  %2228 = vmatpush1.bf16.msra.mxu0 0
  %2229 = vmatprep.subr.bf16.mxu0 0
  %2230 = vmatpush1.bf16.msra.mxu0 0
  %2231 = vmatprep.subr.bf16.mxu0 0
  %2232 = vmatpush1.bf16.msra.mxu0 0
  %2233 = vmatprep.mubr.bf16.mxu0 0
  %2234 = vmatmul.mubr.bf16.gmra.mrb[0].mxu0 %v2190
  %v2235 = vpop.f32.mrb[0].mxu0
  %v2236 = vadd.f32 0.0, %v2235
  %v2237 = vpop.f32.mrb[0].mxu0
  %v2238 = vpop.f32.mrb[0].mxu0
  %v2239 = vadd.f32 0.0, %v2238
  %v2240 = vpop.f32.mrb[0].mxu0
  %2241 = vmatprep.mubr.bf16.mxu0 0
  %2242 = vmatmul.mubr.bf16.gmra.mrb[0].mxu0 %v2193
  %v2243 = vpop.f32.mrb[0].mxu0
  %v2244 = vadd.f32 0.0, %v2243
  %v2245 = vpop.f32.mrb[0].mxu0
  %v2246 = vpop.f32.mrb[0].mxu0
  %v2247 = vadd.f32 0.0, %v2246
  %v2248 = vpop.f32.mrb[0].mxu0
  %2249 = vmatprep.mubr.bf16.mxu0 0
  %2250 = vmatmul.mubr.bf16.gmra.mrb[0].mxu0 %v2196
  %v2251 = vpop.f32.mrb[0].mxu0
  %v2252 = vadd.f32 0.0, %v2251
  %v2253 = vpop.f32.mrb[0].mxu0
  %v2254 = vpop.f32.mrb[0].mxu0
  %v2255 = vadd.f32 0.0, %v2254
  %v2256 = vpop.f32.mrb[0].mxu0
  %2257 = vmatprep.mubr.bf16.mxu0 0
  %2258 = vmatmul.mubr.bf16.gmra.mrb[0].mxu0 %v2199
  %v2259 = vpop.f32.mrb[0].mxu0
  %v2260 = vadd.f32 0.0, %v2259
  %v2261 = vpop.f32.mrb[0].mxu0
  %v2262 = vpop.f32.mrb[0].mxu0
  %v2263 = vadd.f32 0.0, %v2262
  %v2264 = vpop.f32.mrb[0].mxu0
  %2265 = vdwg.mxu0
  %v2266 = vxor.u32 %v2236, 2147483648
  %v2267 = vxor.u32 %v2239, 2147483648
  %v2268 = vxor.u32 %v2244, 2147483648
  %v2269 = vxor.u32 %v2247, 2147483648
  %v2270 = vxor.u32 %v2252, 2147483648
  %v2271 = vxor.u32 %v2255, 2147483648
  %v2272 = vxor.u32 %v2260, 2147483648
  %v2273 = vxor.u32 %v2263, 2147483648
  %v2274 = vmul.f32 %v2266, 1.442695
  %v2275 = vpow.pop %v2274
  %v2276 = vmul.f32 %v2267, 1.442695
  %v2277 = vpow.pop %v2276
  %v2278 = vmul.f32 %v2268, 1.442695
  %v2279 = vpow.pop %v2278
  %v2280 = vmul.f32 %v2269, 1.442695
  %v2281 = vpow.pop %v2280
  %v2282 = vmul.f32 %v2270, 1.442695
  %v2283 = vpow.pop %v2282
  %v2284 = vmul.f32 %v2271, 1.442695
  %v2285 = vpow.pop %v2284
  %v2286 = vmul.f32 %v2272, 1.442695
  %v2287 = vpow.pop %v2286
  %v2288 = vmul.f32 %v2273, 1.442695
  %v2289 = vpow.pop %v2288
  %v2290 = vadd.f32 %v2275, 1.0
  %v2291 = vadd.f32 %v2277, 1.0
  %v2292 = vadd.f32 %v2279, 1.0
  %v2293 = vadd.f32 %v2281, 1.0
  %v2294 = vadd.f32 %v2283, 1.0
  %v2295 = vadd.f32 %v2285, 1.0
  %v2296 = vadd.f32 %v2287, 1.0
  %v2297 = vadd.f32 %v2289, 1.0
  %v2298 = vrcp.pop %v2290
  %v2299 = vmul.f32 1.0, %v2298
  %v2300 = vrcp.pop %v2291
  %v2301 = vmul.f32 1.0, %v2300
  %v2302 = vrcp.pop %v2292
  %v2303 = vmul.f32 1.0, %v2302
  %v2304 = vrcp.pop %v2293
  %v2305 = vmul.f32 1.0, %v2304
  %v2306 = vrcp.pop %v2294
  %v2307 = vmul.f32 1.0, %v2306
  %v2308 = vrcp.pop %v2295
  %v2309 = vmul.f32 1.0, %v2308
  %v2310 = vrcp.pop %v2296
  %v2311 = vmul.f32 1.0, %v2310
  %v2312 = vrcp.pop %v2297
  %v2313 = vmul.f32 1.0, %v2312
  %v2314 = vld [vmem:[%s3] sm:$0xff]
  %v2315 = vld [vmem:[%s3 + $0x8] sm:$0xff]
  %v2316 = vld [vmem:[%s3 + $0x10] sm:$0xff]
  %v2317 = vld [vmem:[%s3 + $0x18] sm:$0xff]
  %v2318 = vld [vmem:[%s3 + $0x20] sm:$0xff]
  %v2319 = vld [vmem:[%s3 + $0x28] sm:$0xff]
  %v2320 = vld [vmem:[%s3 + $0x30] sm:$0xff]
  %v2321 = vld [vmem:[%s3 + $0x38] sm:$0xff]
  %v2322 = vld [vmem:[%s2] sm:$0xff]
  %v2323 = vld [vmem:[%s2 + $0x8] sm:$0xff]
  %v2324 = vld [vmem:[%s2 + $0x10] sm:$0xff]
  %v2325 = vld [vmem:[%s2 + $0x18] sm:$0xff]
  %v2326 = vld [vmem:[%s2 + $0x20] sm:$0xff]
  %v2327 = vld [vmem:[%s2 + $0x28] sm:$0xff]
  %v2328 = vld [vmem:[%s2 + $0x30] sm:$0xff]
  %v2329 = vld [vmem:[%s2 + $0x38] sm:$0xff]
  %v2330 = vld [vmem:[%s2 + $0x40] sm:$0xff]
  %v2331 = vld [vmem:[%s2 + $0x48] sm:$0xff]
  %v2332 = vld [vmem:[%s2 + $0x50] sm:$0xff]
  %v2333 = vld [vmem:[%s2 + $0x58] sm:$0xff]
  %v2334 = vld [vmem:[%s2 + $0x60] sm:$0xff]
  %v2335 = vld [vmem:[%s2 + $0x68] sm:$0xff]
  %v2336 = vld [vmem:[%s2 + $0x70] sm:$0xff]
  %v2337 = vld [vmem:[%s2 + $0x78] sm:$0xff]
  %v2338 = vld [vmem:[%s2 + $0x80] sm:$0xff]
  %v2339 = vld [vmem:[%s2 + $0x88] sm:$0xff]
  %v2340 = vld [vmem:[%s2 + $0x90] sm:$0xff]
  %v2341 = vld [vmem:[%s2 + $0x98] sm:$0xff]
  %v2342 = vld [vmem:[%s2 + $0xa0] sm:$0xff]
  %v2343 = vld [vmem:[%s2 + $0xa8] sm:$0xff]
  %v2344 = vld [vmem:[%s2 + $0xb0] sm:$0xff]
  %v2345 = vld [vmem:[%s2 + $0xb8] sm:$0xff]
  %v2346 = vmul.f32 %v2299, %v2314
  %v2347 = vmul.f32 %v2301, %v2315
  %v2348 = vmul.f32 %v2303, %v2316
  %v2349 = vmul.f32 %v2305, %v2317
  %v2350 = vmul.f32 %v2307, %v2318
  %v2351 = vmul.f32 %v2309, %v2319
  %v2352 = vmul.f32 %v2311, %v2320
  %v2353 = vmul.f32 %v2313, %v2321
  %2362 = vrot.lane.b32.xlu0 %v2314, 96
  %v2363 = vpop.permute.xlu0 %2362
  %2364 = vrot.lane.b32.xlu0 %v2315, 96
  %v2365 = vpop.permute.xlu0 %2364
  %2366 = vrot.lane.b32.xlu0 %v2316, 96
  %v2367 = vpop.permute.xlu0 %2366
  %2368 = vrot.lane.b32.xlu0 %v2317, 96
  %v2369 = vpop.permute.xlu0 %2368
  %2370 = vrot.lane.b32.xlu0 %v2318, 96
  %v2371 = vpop.permute.xlu0 %2370
  %2372 = vrot.lane.b32.xlu0 %v2319, 96
  %v2373 = vpop.permute.xlu0 %2372
  %2374 = vrot.lane.b32.xlu0 %v2320, 96
  %v2375 = vpop.permute.xlu0 %2374
  %2376 = vrot.lane.b32.xlu0 %v2321, 96
  %v2377 = vpop.permute.xlu0 %2376
  %v2386 = vmul.f32 %v2299, %v2363
  %v2387 = vmul.f32 %v2301, %v2365
  %v2388 = vmul.f32 %v2303, %v2367
  %v2389 = vmul.f32 %v2305, %v2369
  %v2390 = vmul.f32 %v2307, %v2371
  %v2391 = vmul.f32 %v2309, %v2373
  %v2392 = vmul.f32 %v2311, %v2375
  %v2393 = vmul.f32 %v2313, %v2377
  %2394 = vrot.lane.b32.xlu0 %v2314, 64
  %v2395 = vpop.permute.xlu0 %2394
  %2396 = vrot.lane.b32.xlu0 %v2315, 64
  %v2397 = vpop.permute.xlu0 %2396
  %2398 = vrot.lane.b32.xlu0 %v2316, 64
  %v2399 = vpop.permute.xlu0 %2398
  %2400 = vrot.lane.b32.xlu0 %v2317, 64
  %v2401 = vpop.permute.xlu0 %2400
  %2402 = vrot.lane.b32.xlu0 %v2318, 64
  %v2403 = vpop.permute.xlu0 %2402
  %2404 = vrot.lane.b32.xlu0 %v2319, 64
  %v2405 = vpop.permute.xlu0 %2404
  %2406 = vrot.lane.b32.xlu0 %v2320, 64
  %v2407 = vpop.permute.xlu0 %2406
  %2408 = vrot.lane.b32.xlu0 %v2321, 64
  %v2409 = vpop.permute.xlu0 %2408
  %v2418 = vmul.f32 %v2299, %v2395
  %v2419 = vmul.f32 %v2301, %v2397
  %v2420 = vmul.f32 %v2303, %v2399
  %v2421 = vmul.f32 %v2305, %v2401
  %v2422 = vmul.f32 %v2307, %v2403
  %v2423 = vmul.f32 %v2309, %v2405
  %v2424 = vmul.f32 %v2311, %v2407
  %v2425 = vmul.f32 %v2313, %v2409
  %v2426 = vmul.f32 %v2322, %v2346
  %v2427 = vmul.f32 %v2325, %v2347
  %v2428 = vmul.f32 %v2328, %v2348
  %v2429 = vmul.f32 %v2331, %v2349
  %v2430 = vmul.f32 %v2334, %v2350
  %v2431 = vmul.f32 %v2337, %v2351
  %v2432 = vmul.f32 %v2340, %v2352
  %v2433 = vmul.f32 %v2343, %v2353
  %2442 = vrot.lane.b32.xlu0 %v2386, 32
  %v2443 = vpop.permute.xlu0 %2442
  %2444 = vrot.lane.b32.xlu0 %v2387, 32
  %v2445 = vpop.permute.xlu0 %2444
  %2446 = vrot.lane.b32.xlu0 %v2388, 32
  %v2447 = vpop.permute.xlu0 %2446
  %2448 = vrot.lane.b32.xlu0 %v2389, 32
  %v2449 = vpop.permute.xlu0 %2448
  %2450 = vrot.lane.b32.xlu0 %v2390, 32
  %v2451 = vpop.permute.xlu0 %2450
  %2452 = vrot.lane.b32.xlu0 %v2391, 32
  %v2453 = vpop.permute.xlu0 %2452
  %2454 = vrot.lane.b32.xlu0 %v2392, 32
  %v2455 = vpop.permute.xlu0 %2454
  %2456 = vrot.lane.b32.xlu0 %v2393, 32
  %v2457 = vpop.permute.xlu0 %2456
  %v2466 = vmul.f32 %v2322, %v2443
  %v2467 = vmul.f32 %v2325, %v2445
  %v2468 = vmul.f32 %v2328, %v2447
  %v2469 = vmul.f32 %v2331, %v2449
  %v2470 = vmul.f32 %v2334, %v2451
  %v2471 = vmul.f32 %v2337, %v2453
  %v2472 = vmul.f32 %v2340, %v2455
  %v2473 = vmul.f32 %v2343, %v2457
  %2482 = vrot.lane.b32.xlu0 %v2466, 96
  %v2483 = vpop.permute.xlu0 %2482
  %2484 = vrot.lane.b32.xlu0 %v2467, 96
  %v2485 = vpop.permute.xlu0 %2484
  %2486 = vrot.lane.b32.xlu0 %v2468, 96
  %v2487 = vpop.permute.xlu0 %2486
  %2488 = vrot.lane.b32.xlu0 %v2469, 96
  %v2489 = vpop.permute.xlu0 %2488
  %2490 = vrot.lane.b32.xlu0 %v2470, 96
  %v2491 = vpop.permute.xlu0 %2490
  %2492 = vrot.lane.b32.xlu0 %v2471, 96
  %v2493 = vpop.permute.xlu0 %2492
  %2494 = vrot.lane.b32.xlu0 %v2472, 96
  %v2495 = vpop.permute.xlu0 %2494
  %2496 = vrot.lane.b32.xlu0 %v2473, 96
  %v2497 = vpop.permute.xlu0 %2496
  %v2506 = vadd.f32 %v2426, %v2483
  %v2507 = vadd.f32 %v2427, %v2485
  %v2508 = vadd.f32 %v2428, %v2487
  %v2509 = vadd.f32 %v2429, %v2489
  %v2510 = vadd.f32 %v2430, %v2491
  %v2511 = vadd.f32 %v2431, %v2493
  %v2512 = vadd.f32 %v2432, %v2495
  %v2513 = vadd.f32 %v2433, %v2497
  %2522 = vrot.lane.b32.xlu0 %v2418, 64
  %v2523 = vpop.permute.xlu0 %2522
  %2524 = vrot.lane.b32.xlu0 %v2419, 64
  %v2525 = vpop.permute.xlu0 %2524
  %2526 = vrot.lane.b32.xlu0 %v2420, 64
  %v2527 = vpop.permute.xlu0 %2526
  %2528 = vrot.lane.b32.xlu0 %v2421, 64
  %v2529 = vpop.permute.xlu0 %2528
  %2530 = vrot.lane.b32.xlu0 %v2422, 64
  %v2531 = vpop.permute.xlu0 %2530
  %2532 = vrot.lane.b32.xlu0 %v2423, 64
  %v2533 = vpop.permute.xlu0 %2532
  %2534 = vrot.lane.b32.xlu0 %v2424, 64
  %v2535 = vpop.permute.xlu0 %2534
  %2536 = vrot.lane.b32.xlu0 %v2425, 64
  %v2537 = vpop.permute.xlu0 %2536
  %v2546 = vmul.f32 %v2322, %v2523
  %v2547 = vmul.f32 %v2325, %v2525
  %v2548 = vmul.f32 %v2328, %v2527
  %v2549 = vmul.f32 %v2331, %v2529
  %v2550 = vmul.f32 %v2334, %v2531
  %v2551 = vmul.f32 %v2337, %v2533
  %v2552 = vmul.f32 %v2340, %v2535
  %v2553 = vmul.f32 %v2343, %v2537
  %2562 = vrot.lane.b32.xlu0 %v2546, 64
  %v2563 = vpop.permute.xlu0 %2562
  %2564 = vrot.lane.b32.xlu0 %v2547, 64
  %v2565 = vpop.permute.xlu0 %2564
  %2566 = vrot.lane.b32.xlu0 %v2548, 64
  %v2567 = vpop.permute.xlu0 %2566
  %2568 = vrot.lane.b32.xlu0 %v2549, 64
  %v2569 = vpop.permute.xlu0 %2568
  %2570 = vrot.lane.b32.xlu0 %v2550, 64
  %v2571 = vpop.permute.xlu0 %2570
  %2572 = vrot.lane.b32.xlu0 %v2551, 64
  %v2573 = vpop.permute.xlu0 %2572
  %2574 = vrot.lane.b32.xlu0 %v2552, 64
  %v2575 = vpop.permute.xlu0 %2574
  %2576 = vrot.lane.b32.xlu0 %v2553, 64
  %v2577 = vpop.permute.xlu0 %2576
  %v2586 = vadd.f32 %v2506, %v2563
  %v2587 = vadd.f32 %v2507, %v2565
  %v2588 = vadd.f32 %v2508, %v2567
  %v2589 = vadd.f32 %v2509, %v2569
  %v2590 = vadd.f32 %v2510, %v2571
  %v2591 = vadd.f32 %v2511, %v2573
  %v2592 = vadd.f32 %v2512, %v2575
  %v2593 = vadd.f32 %v2513, %v2577
  %2602 = vrot.lane.b32.xlu0 %v2346, 96
  %v2603 = vpop.permute.xlu0 %2602
  %2604 = vrot.lane.b32.xlu0 %v2347, 96
  %v2605 = vpop.permute.xlu0 %2604
  %2606 = vrot.lane.b32.xlu0 %v2348, 96
  %v2607 = vpop.permute.xlu0 %2606
  %2608 = vrot.lane.b32.xlu0 %v2349, 96
  %v2609 = vpop.permute.xlu0 %2608
  %2610 = vrot.lane.b32.xlu0 %v2350, 96
  %v2611 = vpop.permute.xlu0 %2610
  %2612 = vrot.lane.b32.xlu0 %v2351, 96
  %v2613 = vpop.permute.xlu0 %2612
  %2614 = vrot.lane.b32.xlu0 %v2352, 96
  %v2615 = vpop.permute.xlu0 %2614
  %2616 = vrot.lane.b32.xlu0 %v2353, 96
  %v2617 = vpop.permute.xlu0 %2616
  %v2626 = vmul.f32 %v2322, %v2603
  %v2627 = vmul.f32 %v2325, %v2605
  %v2628 = vmul.f32 %v2328, %v2607
  %v2629 = vmul.f32 %v2331, %v2609
  %v2630 = vmul.f32 %v2334, %v2611
  %v2631 = vmul.f32 %v2337, %v2613
  %v2632 = vmul.f32 %v2340, %v2615
  %v2633 = vmul.f32 %v2343, %v2617
  %v2634 = vmul.f32 %v2323, %v2386
  %v2635 = vmul.f32 %v2326, %v2387
  %v2636 = vmul.f32 %v2329, %v2388
  %v2637 = vmul.f32 %v2332, %v2389
  %v2638 = vmul.f32 %v2335, %v2390
  %v2639 = vmul.f32 %v2338, %v2391
  %v2640 = vmul.f32 %v2341, %v2392
  %v2641 = vmul.f32 %v2344, %v2393
  %2650 = vrot.lane.b32.xlu0 %v2634, 96
  %v2651 = vpop.permute.xlu0 %2650
  %2652 = vrot.lane.b32.xlu0 %v2635, 96
  %v2653 = vpop.permute.xlu0 %2652
  %2654 = vrot.lane.b32.xlu0 %v2636, 96
  %v2655 = vpop.permute.xlu0 %2654
  %2656 = vrot.lane.b32.xlu0 %v2637, 96
  %v2657 = vpop.permute.xlu0 %2656
  %2658 = vrot.lane.b32.xlu0 %v2638, 96
  %v2659 = vpop.permute.xlu0 %2658
  %2660 = vrot.lane.b32.xlu0 %v2639, 96
  %v2661 = vpop.permute.xlu0 %2660
  %2662 = vrot.lane.b32.xlu0 %v2640, 96
  %v2663 = vpop.permute.xlu0 %2662
  %2664 = vrot.lane.b32.xlu0 %v2641, 96
  %v2665 = vpop.permute.xlu0 %2664
  %v2674 = vadd.f32 %v2626, %v2651
  %v2675 = vadd.f32 %v2627, %v2653
  %v2676 = vadd.f32 %v2628, %v2655
  %v2677 = vadd.f32 %v2629, %v2657
  %v2678 = vadd.f32 %v2630, %v2659
  %v2679 = vadd.f32 %v2631, %v2661
  %v2680 = vadd.f32 %v2632, %v2663
  %v2681 = vadd.f32 %v2633, %v2665
  %2682 = vrot.lane.b32.xlu0 %v2418, 32
  %v2683 = vpop.permute.xlu0 %2682
  %2684 = vrot.lane.b32.xlu0 %v2419, 32
  %v2685 = vpop.permute.xlu0 %2684
  %2686 = vrot.lane.b32.xlu0 %v2420, 32
  %v2687 = vpop.permute.xlu0 %2686
  %2688 = vrot.lane.b32.xlu0 %v2421, 32
  %v2689 = vpop.permute.xlu0 %2688
  %2690 = vrot.lane.b32.xlu0 %v2422, 32
  %v2691 = vpop.permute.xlu0 %2690
  %2692 = vrot.lane.b32.xlu0 %v2423, 32
  %v2693 = vpop.permute.xlu0 %2692
  %2694 = vrot.lane.b32.xlu0 %v2424, 32
  %v2695 = vpop.permute.xlu0 %2694
  %2696 = vrot.lane.b32.xlu0 %v2425, 32
  %v2697 = vpop.permute.xlu0 %2696
  %v2706 = vmul.f32 %v2323, %v2683
  %v2707 = vmul.f32 %v2326, %v2685
  %v2708 = vmul.f32 %v2329, %v2687
  %v2709 = vmul.f32 %v2332, %v2689
  %v2710 = vmul.f32 %v2335, %v2691
  %v2711 = vmul.f32 %v2338, %v2693
  %v2712 = vmul.f32 %v2341, %v2695
  %v2713 = vmul.f32 %v2344, %v2697
  %2722 = vrot.lane.b32.xlu0 %v2706, 64
  %v2723 = vpop.permute.xlu0 %2722
  %2724 = vrot.lane.b32.xlu0 %v2707, 64
  %v2725 = vpop.permute.xlu0 %2724
  %2726 = vrot.lane.b32.xlu0 %v2708, 64
  %v2727 = vpop.permute.xlu0 %2726
  %2728 = vrot.lane.b32.xlu0 %v2709, 64
  %v2729 = vpop.permute.xlu0 %2728
  %2730 = vrot.lane.b32.xlu0 %v2710, 64
  %v2731 = vpop.permute.xlu0 %2730
  %2732 = vrot.lane.b32.xlu0 %v2711, 64
  %v2733 = vpop.permute.xlu0 %2732
  %2734 = vrot.lane.b32.xlu0 %v2712, 64
  %v2735 = vpop.permute.xlu0 %2734
  %2736 = vrot.lane.b32.xlu0 %v2713, 64
  %v2737 = vpop.permute.xlu0 %2736
  %v2746 = vadd.f32 %v2674, %v2723
  %v2747 = vadd.f32 %v2675, %v2725
  %v2748 = vadd.f32 %v2676, %v2727
  %v2749 = vadd.f32 %v2677, %v2729
  %v2750 = vadd.f32 %v2678, %v2731
  %v2751 = vadd.f32 %v2679, %v2733
  %v2752 = vadd.f32 %v2680, %v2735
  %v2753 = vadd.f32 %v2681, %v2737
  %2754 = vrot.lane.b32.xlu0 %v2346, 64
  %v2755 = vpop.permute.xlu0 %2754
  %2756 = vrot.lane.b32.xlu0 %v2347, 64
  %v2757 = vpop.permute.xlu0 %2756
  %2758 = vrot.lane.b32.xlu0 %v2348, 64
  %v2759 = vpop.permute.xlu0 %2758
  %2760 = vrot.lane.b32.xlu0 %v2349, 64
  %v2761 = vpop.permute.xlu0 %2760
  %2762 = vrot.lane.b32.xlu0 %v2350, 64
  %v2763 = vpop.permute.xlu0 %2762
  %2764 = vrot.lane.b32.xlu0 %v2351, 64
  %v2765 = vpop.permute.xlu0 %2764
  %2766 = vrot.lane.b32.xlu0 %v2352, 64
  %v2767 = vpop.permute.xlu0 %2766
  %2768 = vrot.lane.b32.xlu0 %v2353, 64
  %v2769 = vpop.permute.xlu0 %2768
  %v2778 = vmul.f32 %v2323, %v2755
  %v2779 = vmul.f32 %v2326, %v2757
  %v2780 = vmul.f32 %v2329, %v2759
  %v2781 = vmul.f32 %v2332, %v2761
  %v2782 = vmul.f32 %v2335, %v2763
  %v2783 = vmul.f32 %v2338, %v2765
  %v2784 = vmul.f32 %v2341, %v2767
  %v2785 = vmul.f32 %v2344, %v2769
  %2786 = vrot.lane.b32.xlu0 %v2386, 96
  %v2787 = vpop.permute.xlu0 %2786
  %2788 = vrot.lane.b32.xlu0 %v2387, 96
  %v2789 = vpop.permute.xlu0 %2788
  %2790 = vrot.lane.b32.xlu0 %v2388, 96
  %v2791 = vpop.permute.xlu0 %2790
  %2792 = vrot.lane.b32.xlu0 %v2389, 96
  %v2793 = vpop.permute.xlu0 %2792
  %2794 = vrot.lane.b32.xlu0 %v2390, 96
  %v2795 = vpop.permute.xlu0 %2794
  %2796 = vrot.lane.b32.xlu0 %v2391, 96
  %v2797 = vpop.permute.xlu0 %2796
  %2798 = vrot.lane.b32.xlu0 %v2392, 96
  %v2799 = vpop.permute.xlu0 %2798
  %2800 = vrot.lane.b32.xlu0 %v2393, 96
  %v2801 = vpop.permute.xlu0 %2800
  %v2810 = vmul.f32 %v2323, %v2787
  %v2811 = vmul.f32 %v2326, %v2789
  %v2812 = vmul.f32 %v2329, %v2791
  %v2813 = vmul.f32 %v2332, %v2793
  %v2814 = vmul.f32 %v2335, %v2795
  %v2815 = vmul.f32 %v2338, %v2797
  %v2816 = vmul.f32 %v2341, %v2799
  %v2817 = vmul.f32 %v2344, %v2801
  %2826 = vrot.lane.b32.xlu0 %v2810, 96
  %v2827 = vpop.permute.xlu0 %2826
  %2828 = vrot.lane.b32.xlu0 %v2811, 96
  %v2829 = vpop.permute.xlu0 %2828
  %2830 = vrot.lane.b32.xlu0 %v2812, 96
  %v2831 = vpop.permute.xlu0 %2830
  %2832 = vrot.lane.b32.xlu0 %v2813, 96
  %v2833 = vpop.permute.xlu0 %2832
  %2834 = vrot.lane.b32.xlu0 %v2814, 96
  %v2835 = vpop.permute.xlu0 %2834
  %2836 = vrot.lane.b32.xlu0 %v2815, 96
  %v2837 = vpop.permute.xlu0 %2836
  %2838 = vrot.lane.b32.xlu0 %v2816, 96
  %v2839 = vpop.permute.xlu0 %2838
  %2840 = vrot.lane.b32.xlu0 %v2817, 96
  %v2841 = vpop.permute.xlu0 %2840
  %v2850 = vadd.f32 %v2778, %v2827
  %v2851 = vadd.f32 %v2779, %v2829
  %v2852 = vadd.f32 %v2780, %v2831
  %v2853 = vadd.f32 %v2781, %v2833
  %v2854 = vadd.f32 %v2782, %v2835
  %v2855 = vadd.f32 %v2783, %v2837
  %v2856 = vadd.f32 %v2784, %v2839
  %v2857 = vadd.f32 %v2785, %v2841
  %v2858 = vmul.f32 %v2324, %v2418
  %v2859 = vmul.f32 %v2327, %v2419
  %v2860 = vmul.f32 %v2330, %v2420
  %v2861 = vmul.f32 %v2333, %v2421
  %v2862 = vmul.f32 %v2336, %v2422
  %v2863 = vmul.f32 %v2339, %v2423
  %v2864 = vmul.f32 %v2342, %v2424
  %v2865 = vmul.f32 %v2345, %v2425
  %2874 = vrot.lane.b32.xlu0 %v2858, 64
  %v2875 = vpop.permute.xlu0 %2874
  %2876 = vrot.lane.b32.xlu0 %v2859, 64
  %v2877 = vpop.permute.xlu0 %2876
  %2878 = vrot.lane.b32.xlu0 %v2860, 64
  %v2879 = vpop.permute.xlu0 %2878
  %2880 = vrot.lane.b32.xlu0 %v2861, 64
  %v2881 = vpop.permute.xlu0 %2880
  %2882 = vrot.lane.b32.xlu0 %v2862, 64
  %v2883 = vpop.permute.xlu0 %2882
  %2884 = vrot.lane.b32.xlu0 %v2863, 64
  %v2885 = vpop.permute.xlu0 %2884
  %2886 = vrot.lane.b32.xlu0 %v2864, 64
  %v2887 = vpop.permute.xlu0 %2886
  %2888 = vrot.lane.b32.xlu0 %v2865, 64
  %v2889 = vpop.permute.xlu0 %2888
  %v2898 = vadd.f32 %v2850, %v2875
  %v2899 = vadd.f32 %v2851, %v2877
  %v2900 = vadd.f32 %v2852, %v2879
  %v2901 = vadd.f32 %v2853, %v2881
  %v2902 = vadd.f32 %v2854, %v2883
  %v2903 = vadd.f32 %v2855, %v2885
  %v2904 = vadd.f32 %v2856, %v2887
  %v2905 = vadd.f32 %v2857, %v2889
  %2914 = vrot.lane.b32.xlu0 %v2586, 32
  %v2915 = vpop.permute.xlu0 %2914
  %2916 = vrot.lane.b32.xlu0 %v2587, 32
  %v2917 = vpop.permute.xlu0 %2916
  %2918 = vrot.lane.b32.xlu0 %v2588, 32
  %v2919 = vpop.permute.xlu0 %2918
  %2920 = vrot.lane.b32.xlu0 %v2589, 32
  %v2921 = vpop.permute.xlu0 %2920
  %2922 = vrot.lane.b32.xlu0 %v2590, 32
  %v2923 = vpop.permute.xlu0 %2922
  %2924 = vrot.lane.b32.xlu0 %v2591, 32
  %v2925 = vpop.permute.xlu0 %2924
  %2926 = vrot.lane.b32.xlu0 %v2592, 32
  %v2927 = vpop.permute.xlu0 %2926
  %2928 = vrot.lane.b32.xlu0 %v2593, 32
  %v2929 = vpop.permute.xlu0 %2928
  %2946 = vrot.lane.b32.xlu0 %v2746, 96
  %v2947 = vpop.permute.xlu0 %2946
  %2948 = vrot.lane.b32.xlu0 %v2747, 96
  %v2949 = vpop.permute.xlu0 %2948
  %2950 = vrot.lane.b32.xlu0 %v2748, 96
  %v2951 = vpop.permute.xlu0 %2950
  %2952 = vrot.lane.b32.xlu0 %v2749, 96
  %v2953 = vpop.permute.xlu0 %2952
  %2954 = vrot.lane.b32.xlu0 %v2750, 96
  %v2955 = vpop.permute.xlu0 %2954
  %2956 = vrot.lane.b32.xlu0 %v2751, 96
  %v2957 = vpop.permute.xlu0 %2956
  %2958 = vrot.lane.b32.xlu0 %v2752, 96
  %v2959 = vpop.permute.xlu0 %2958
  %2960 = vrot.lane.b32.xlu0 %v2753, 96
  %v2961 = vpop.permute.xlu0 %2960
  %2978 = vrot.lane.b32.xlu0 %v2898, 32
  %v2979 = vpop.permute.xlu0 %2978
  %2980 = vrot.lane.b32.xlu0 %v2899, 32
  %v2981 = vpop.permute.xlu0 %2980
  %2982 = vrot.lane.b32.xlu0 %v2900, 32
  %v2983 = vpop.permute.xlu0 %2982
  %2984 = vrot.lane.b32.xlu0 %v2901, 32
  %v2985 = vpop.permute.xlu0 %2984
  %2986 = vrot.lane.b32.xlu0 %v2902, 32
  %v2987 = vpop.permute.xlu0 %2986
  %2988 = vrot.lane.b32.xlu0 %v2903, 32
  %v2989 = vpop.permute.xlu0 %2988
  %2990 = vrot.lane.b32.xlu0 %v2904, 32
  %v2991 = vpop.permute.xlu0 %2990
  %2992 = vrot.lane.b32.xlu0 %v2905, 32
  %v2993 = vpop.permute.xlu0 %2992
  %v3002 = vsel %vm2188, %v2160, %v2915
  %v3003 = vsel %vm2188, %v2161, %v2917
  %v3004 = vsel %vm2188, %v2162, %v2919
  %v3005 = vsel %vm2188, %v2163, %v2921
  %v3006 = vsel %vm2188, %v2164, %v2923
  %v3007 = vsel %vm2188, %v2165, %v2925
  %v3008 = vsel %vm2188, %v2166, %v2927
  %v3009 = vsel %vm2188, %v2167, %v2929
  %v3010 = vsel %vm1926, %v3002, %v2947
  %v3011 = vsel %vm1926, %v3003, %v2949
  %v3012 = vsel %vm1926, %v3004, %v2951
  %v3013 = vsel %vm1926, %v3005, %v2953
  %v3014 = vsel %vm1926, %v3006, %v2955
  %v3015 = vsel %vm1926, %v3007, %v2957
  %v3016 = vsel %vm1926, %v3008, %v2959
  %v3017 = vsel %vm1926, %v3009, %v2961
  %vm3018 = vcmask 785408
  %v3019 = vsel %vm3018, %v3010, %v2979
  %v3020 = vsel %vm3018, %v3011, %v2981
  %v3021 = vsel %vm3018, %v3012, %v2983
  %v3022 = vsel %vm3018, %v3013, %v2985
  %v3023 = vsel %vm3018, %v3014, %v2987
  %v3024 = vsel %vm3018, %v3015, %v2989
  %v3025 = vsel %vm3018, %v3016, %v2991
  %v3026 = vsel %vm3018, %v3017, %v2993
  %v3027 = vpack.c.bf16 %v3020, %v3019
  %v3028 = vpack.c.bf16 %v3022, %v3021
  %v3029 = vpack.c.bf16 %v3024, %v3023
  %v3030 = vpack.c.bf16 %v3026, %v3025
  %v3031 = vld [vmem:[#allocation2] sm:$0xff]
  %v3032 = vld [vmem:[%s4] sm:$0xf]
  %v3034 = vsel %vm1926, %v3032, 0
  %3036 = vmatprep.subr.bf16.mxu0 0
  %3037 = vmatpush1.bf16.msra.mxu0 %v3027
  %3038 = vmatprep.subr.bf16.mxu0 0
  %3039 = vmatpush1.bf16.msra.mxu0 %v3028
  %3040 = vmatprep.subr.bf16.mxu0 0
  %3041 = vmatpush1.bf16.msra.mxu0 %v3029
  %3042 = vmatprep.subr.bf16.mxu0 0
  %3043 = vmatpush1.bf16.msra.mxu0 %v3030
  %3044 = vmatprep.subr.bf16.mxu0 0
  %3045 = vmatpush1.bf16.msra.mxu0 0
  %3046 = vmatprep.subr.bf16.mxu0 0
  %3047 = vmatpush1.bf16.msra.mxu0 0
  %3048 = vmatprep.subr.bf16.mxu0 0
  %3049 = vmatpush1.bf16.msra.mxu0 0
  %3050 = vmatprep.subr.bf16.mxu0 0
  %3051 = vmatpush1.bf16.msra.mxu0 0
  %3052 = vmatprep.subr.bf16.mxu0 0
  %3053 = vmatpush1.bf16.msra.mxu0 0
  %3054 = vmatprep.subr.bf16.mxu0 0
  %3055 = vmatpush1.bf16.msra.mxu0 0
  %3056 = vmatprep.subr.bf16.mxu0 0
  %3057 = vmatpush1.bf16.msra.mxu0 0
  %3058 = vmatprep.subr.bf16.mxu0 0
  %3059 = vmatpush1.bf16.msra.mxu0 0
  %3060 = vmatprep.subr.bf16.mxu0 0
  %3061 = vmatpush1.bf16.msra.mxu0 0
  %3062 = vmatprep.subr.bf16.mxu0 0
  %3063 = vmatpush1.bf16.msra.mxu0 0
  %3064 = vmatprep.subr.bf16.mxu0 0
  %3065 = vmatpush1.bf16.msra.mxu0 0
  %3066 = vmatprep.subr.bf16.mxu0 0
  %3067 = vmatpush1.bf16.msra.mxu0 0
  %3068 = vmatprep.mubr.bf16.mxu0 0
  %3069 = vmatmul.mubr.bf16.gmra.mrb[0].mxu0 %v3034
  %v3070 = vpop.f32.mrb[0].mxu0
  %v3071 = vadd.f32 0.0, %v3070
  %v3072 = vpop.f32.mrb[0].mxu0
  %v3073 = vpop.f32.mrb[0].mxu0
  %v3074 = vpop.f32.mrb[0].mxu0
  %3075 = vdwg.mxu0
  %v3076 = vadd.f32 %v3031, %v3071
  %3077 = vst [vmem:[#allocation2] sm:$0xff] %v3076
  // Predicated region
  $region62: #{transition_down_forward.2} parent=0 // pred_check
    %p3078 = pneg %p48
  $region63: #{transition_down_forward.2} parent=0 // pred_check_branch
    %3080 = sbr.rel (%p3078) target = $region65
  $region64: #{transition_down_forward.2} parent=0 // pred_region
    %v3081 = vld [vmem:[#allocation2] sm:$0xff]
    %v3082 = vpack.c.bf16 %v3081, %v3081
    %v3083 = vld [vmem:[%s13] sm:$0xf]
    %v3084 = vld [vmem:[%s13 + $0x4] sm:$0xf]
    %v3085 = vld [vmem:[%s13 + $0x8] sm:$0xf]
    %v3086 = vld [vmem:[%s13 + $0xc] sm:$0xf]
    %v3091 = vunpack.c.l.b16 %v3083
    %v3092 = vunpack.c.l.b16 %v3084
    %v3093 = vunpack.c.l.b16 %v3085
    %v3094 = vunpack.c.l.b16 %v3086
    %v3095 = vpack.c.b16 %v3092, %v3091
    %v3096 = vpack.c.b16 %v3094, %v3093
    %v3100 = vsel %vm2188, %v3082, 0
    %3102 = vmatprep.subr.bf16.mxu0 0
    %3103 = vmatpush1.bf16.msra.mxu0 %v3095
    %3104 = vmatprep.subr.bf16.mxu0 0
    %3105 = vmatpush1.bf16.msra.mxu0 %v3096
    %3106 = vmatprep.subr.bf16.mxu0 0
    %3107 = vmatpush1.bf16.msra.mxu0 0
    %3108 = vmatprep.subr.bf16.mxu0 0
    %3109 = vmatpush1.bf16.msra.mxu0 0
    %3110 = vmatprep.subr.bf16.mxu0 0
    %3111 = vmatpush1.bf16.msra.mxu0 0
    %3112 = vmatprep.subr.bf16.mxu0 0
    %3113 = vmatpush1.bf16.msra.mxu0 0
    %3114 = vmatprep.subr.bf16.mxu0 0
    %3115 = vmatpush1.bf16.msra.mxu0 0
    %3116 = vmatprep.subr.bf16.mxu0 0
    %3117 = vmatpush1.bf16.msra.mxu0 0
    %3118 = vmatprep.subr.bf16.mxu0 0
    %3119 = vmatpush1.bf16.msra.mxu0 0
    %3120 = vmatprep.subr.bf16.mxu0 0
    %3121 = vmatpush1.bf16.msra.mxu0 0
    %3122 = vmatprep.subr.bf16.mxu0 0
    %3123 = vmatpush1.bf16.msra.mxu0 0
    %3124 = vmatprep.subr.bf16.mxu0 0
    %3125 = vmatpush1.bf16.msra.mxu0 0
    %3126 = vmatprep.subr.bf16.mxu0 0
    %3127 = vmatpush1.bf16.msra.mxu0 0
    %3128 = vmatprep.subr.bf16.mxu0 0
    %3129 = vmatpush1.bf16.msra.mxu0 0
    %3130 = vmatprep.subr.bf16.mxu0 0
    %3131 = vmatpush1.bf16.msra.mxu0 0
    %3132 = vmatprep.subr.bf16.mxu0 0
    %3133 = vmatpush1.bf16.msra.mxu0 0
    %3134 = vmatprep.mubr.bf16.mxu0 0
    %3135 = vmatmul.mubr.bf16.gmra.mrb[0].mxu0 %v3100
    %v3136 = vpop.f32.mrb[0].mxu0
    %v3137 = vadd.f32 0.0, %v3136
    %v3138 = vpop.f32.mrb[0].mxu0
    %v3139 = vpop.f32.mrb[0].mxu0
    %v3140 = vpop.f32.mrb[0].mxu0
    %3141 = vdwg.mxu0
    %v3142 = vxor.u32 %v3137, 2147483648
    %v3143 = vmul.f32 %v3142, 1.442695
    %v3144 = vpow.pop %v3143
    %v3145 = vadd.f32 %v3144, 1.0
    %v3146 = vrcp.pop %v3145
    %v3147 = vmul.f32 1.0, %v3146
    %v3148 = vmul.f32 %v3137, %v3147
    %v3149 = vld [vmem:[%s5] sm:$0xff]
    %v3150 = vadd.f32 %v3148, %v3149
    %v3151 = vld [vmem:[%s6] sm:$0xff]
    %3153 = vrot.lane.b32.xlu0 %v3151, 32
    %v3154 = vpop.permute.xlu0 %3153
    %v3156 = vadd.f32 %v3081, %v3154
    %v3157 = vsel %vm2188, %v3150, %v3156
    %3158 = vst [vmem:[%s14] sm:$0xff] %v3157
  $region65: #{transition_down_forward.2} parent=0 // pred_fallthru
    _
  // Predicated region
  $region66: #{transition_down_forward.2} parent=0 // pred_check
    _
  $region67: #{transition_down_forward.2} parent=0 // pred_check_branch
    %3160 = sbr.rel (0) target = $region69
  $region68: #{transition_down_forward.2} parent=0 // pred_region
    _
  $region69: #{transition_down_forward.2} parent=0 // pred_fallthru
    _
  // Predicated region
  $region70: #{transition_down_forward.2} parent=0 // pred_check
    _
  $region71: #{transition_down_forward.2} parent=0 // pred_check_branch
    %3162 = sbr.rel (0) target = $region73
  $region72: #{transition_down_forward.2} parent=0 // pred_region
    _
  $region73: #{transition_down_forward.2} parent=0 // pred_fallthru
    _

</llo_original>
